<compile_context>
chip_gen: v7x
topology: tpu7x:2x2x1
jax: 0.10.0
libtpu: 0.0.40
codegen_flags: <defaults>
</compile_context>

<pallas_src>
import numpy as np
import jax
import jax.numpy as jnp
from jax import lax
from jax.experimental import pallas as pl
from jax.experimental.pallas import tpu as pltpu

POOL_OH, POOL_OW = 4, 4
CMID = 128          # conv1 output channels
FC1_OUT = 128       # fc1 output features
OUT_PAD = 128       # fc2 output padded to a full lane width; sliced outside


# ----------------------------------------------------------------------------
# Fused kernel: one grid step per batch element.
#   x_ref : [1, Cin, S]          f32  (NCHW, spatial flattened; no transpose)
#   wc_ref: [Cin, Cmid]          bf16 (1x1 conv weight, [in, out])
#   bc_ref: [1, Cmid]            f32
#   p_ref : [Pout, S]            f32  (adaptive-avg-pool matrix, rows sum to 1)
#   w1_ref: [Pout, Cmid, 128]    bf16 (fc1 weight block per pool cell o)
#   b1_ref: [1, 128]             f32
#   w2_ref: [128, OUT_PAD]       bf16 (zero-padded beyond out_dim)
#   b2_ref: [1, OUT_PAD]         f32
#   o_ref : [1, 1, OUT_PAD]      f32
# ----------------------------------------------------------------------------
def fused_kernel(x_ref, wc_ref, bc_ref, p_ref, w1_ref, b1_ref, w2_ref, b2_ref,
                 o_ref):
    x = x_ref[0].astype(jnp.bfloat16)                       # [Cin, S]
    # 1x1 conv as transposed-LHS matmul (contract Cin), f32 accumulation.
    y = lax.dot_general(x, wc_ref[...],
                        (((0,), (0,)), ((), ())),
                        preferred_element_type=jnp.float32)  # [S, Cmid]
    y = jnp.maximum(y + bc_ref[...], 0.0)                    # bias + ReLU

    # Adaptive average pool as a small matmul (f32, tiny).
    pooled = jnp.dot(p_ref[...], y,
                     preferred_element_type=jnp.float32)     # [Pout, Cmid]
    pooled = pooled.astype(jnp.bfloat16)

    # fc1: h = sum_o pooled[o, :] @ W1_block[o]  (avoids lane relayout of the
    # flattened feature; no ReLU between fc1 and fc2 in the reference forward).
    n_pool = p_ref.shape[0]
    h = b1_ref[...]                                          # [1, 128] f32
    for o in range(n_pool):
        h = h + jnp.dot(pooled[o:o + 1, :], w1_ref[o],
                        preferred_element_type=jnp.float32)  # [1, 128]

    # fc2 + sigmoid.
    z = jnp.dot(h.astype(jnp.bfloat16), w2_ref[...],
                preferred_element_type=jnp.float32) + b2_ref[...]
    o_ref[0] = jax.nn.sigmoid(z)                             # [1, OUT_PAD]


def adaptive_pool_matrix(H, W, oh, ow):
    """Matrix P s.t. (P @ flat_spatial) == AdaptiveAvgPool2d((oh, ow))."""
    P = np.zeros((oh * ow, H * W), np.float32)
    for i in range(oh):
        h0, h1 = (i * H) // oh, -((-(i + 1) * H) // oh)
        for j in range(ow):
            w0, w1 = (j * W) // ow, -((-(j + 1) * W) // ow)
            cnt = (h1 - h0) * (w1 - w0)
            for hh in range(h0, h1):
                for ww in range(w0, w1):
                    P[i * ow + j, hh * W + ww] = 1.0 / cnt
    return jnp.asarray(P)


def dim_reduce_forward(x_nchw, kernel_params, out_dim):
    """x_nchw: [B, 2048, H, W] layer4 features (float32)."""
    wc, bc, P, w1, b1, w2, b2 = kernel_params
    B, Cin, H, W = x_nchw.shape
    S = H * W
    Pout = P.shape[0]
    x = x_nchw.reshape(B, Cin, S)                    # free reshape, no transpose

    out = pl.pallas_call(
        fused_kernel,
        out_shape=jax.ShapeDtypeStruct((B, 1, OUT_PAD), jnp.float32),
        grid=(B,),
        in_specs=[
            pl.BlockSpec((1, Cin, S), lambda b: (b, 0, 0)),
            pl.BlockSpec((Cin, CMID), lambda b: (0, 0)),
            pl.BlockSpec((1, CMID), lambda b: (0, 0)),
            pl.BlockSpec((Pout, S), lambda b: (0, 0)),
            pl.BlockSpec((Pout, CMID, FC1_OUT), lambda b: (0, 0, 0)),
            pl.BlockSpec((1, FC1_OUT), lambda b: (0, 0)),
            pl.BlockSpec((FC1_OUT, OUT_PAD), lambda b: (0, 0)),
            pl.BlockSpec((1, OUT_PAD), lambda b: (0, 0)),
        ],
        out_specs=pl.BlockSpec((1, 1, OUT_PAD), lambda b: (b, 0, 0)),
        compiler_params=pltpu.CompilerParams(
            dimension_semantics=("parallel",)),
    )(x, wc, bc, P, w1, b1, w2, b2)

    return out.reshape(B, OUT_PAD)[:, :out_dim]


def init_params(key, out_dim=50):
    """Deterministic synthetic parameters in PyTorch layouts (f32)."""
    k = jax.random.split(key, 6)
    wc_t = jax.random.normal(k[0], (CMID, 2048), jnp.float32) * 0.02   # Conv2d [out,in,1,1]
    bc_t = jax.random.normal(k[1], (CMID,), jnp.float32) * 0.02
    w1_t = jax.random.normal(k[2], (FC1_OUT, POOL_OH * POOL_OW * CMID),
                             jnp.float32) * 0.02                        # Linear(2048,128)
    b1_t = jax.random.normal(k[3], (FC1_OUT,), jnp.float32) * 0.02
    w2_t = jax.random.normal(k[4], (out_dim, FC1_OUT), jnp.float32) * 0.05
    b2_t = jax.random.normal(k[5], (out_dim,), jnp.float32) * 0.05
    return wc_t, bc_t, w1_t, b1_t, w2_t, b2_t


def prepare_params(torch_params, H, W, out_dim):
    """One-time layout/dtype prep for the kernel (outside the hot path)."""
    wc_t, bc_t, w1_t, b1_t, w2_t, b2_t = torch_params
    Pout = POOL_OH * POOL_OW
    wc = wc_t.T.astype(jnp.bfloat16)                       # [Cin, Cmid]
    bc = bc_t.reshape(1, CMID)
    P = adaptive_pool_matrix(H, W, POOL_OH, POOL_OW)        # [Pout, S]
    # torch flatten of the pooled map is (c, h*4+w); per-cell fc1 blocks:
    # w1[o, k, j] = w1_t[j, k*Pout + o]
    w1 = jnp.transpose(w1_t.reshape(FC1_OUT, CMID, Pout),
                       (2, 1, 0)).astype(jnp.bfloat16)      # [Pout, Cmid, 128]
    b1 = b1_t.reshape(1, FC1_OUT)
    # Pad fc2 to OUT_PAD lanes for a lane-dense store; sliced off outside.
    w2 = jnp.zeros((FC1_OUT, OUT_PAD), jnp.float32).at[:, :out_dim].set(
        w2_t.T).astype(jnp.bfloat16)
    b2 = jnp.zeros((1, OUT_PAD), jnp.float32).at[0, :out_dim].set(b2_t)
    return wc, bc, P, w1, b1, w2, b2


def reference_forward(x_nchw, torch_params):
    """Pure-JAX f32 reference reproducing the PyTorch forward math."""
    wc_t, bc_t, w1_t, b1_t, w2_t, b2_t = torch_params
    B, Cin, H, W = x_nchw.shape
    x = jnp.transpose(x_nchw, (0, 2, 3, 1)).reshape(B, H * W, Cin)
    y = jnp.maximum(jnp.einsum("bsc,kc->bsk", x, wc_t) + bc_t, 0.0)
    P = adaptive_pool_matrix(H, W, POOL_OH, POOL_OW)
    pooled = jnp.einsum("os,bsk->bok", P, y)                 # [B, 16, 128]
    feat = jnp.transpose(pooled, (0, 2, 1)).reshape(B, -1)   # torch (c, o) order
    h = feat @ w1_t.T + b1_t
    z = h @ w2_t.T + b2_t
    return jax.nn.sigmoid(z)


if __name__ == "__main__":
    key = jax.random.PRNGKey(0)
    kx, kp = jax.random.split(key)
    B, C, H, W = 2, 2048, 8, 8                 # layer4 features of ResNet-50
    out_dim = 50
    x = jax.random.normal(kx, (B, C, H, W), jnp.float32)

    torch_params = init_params(kp, out_dim=out_dim)
    kernel_params = prepare_params(torch_params, H, W, out_dim)

    out = dim_reduce_forward(x, kernel_params, out_dim)
    out = jax.block_until_ready(out)

    ref = reference_forward(x, torch_params)
    assert out.shape == (B, out_dim) and out.dtype == jnp.float32
    # bf16 weights / activations with f32 accumulation vs. pure-f32 reference.
    np.testing.assert_allclose(np.asarray(out), np.asarray(ref),
                               rtol=1e-2, atol=1e-2)
    print("KERNEL_OK")
</pallas_src>

<mosaic_0001>
module attributes {stable_mosaic.version = 11 : i64} {
  func.func @fused_kernel(%arg0: i32, %arg1: memref<1x2048x64xf32, #tpu.memory_space<vmem>>, %arg2: memref<2048x128xbf16, #tpu.memory_space<vmem>>, %arg3: memref<1x128xf32, #tpu.memory_space<vmem>>, %arg4: memref<16x64xf32, #tpu.memory_space<vmem>>, %arg5: memref<16x128x128xbf16, #tpu.memory_space<vmem>>, %arg6: memref<1x128xf32, #tpu.memory_space<vmem>>, %arg7: memref<128x128xbf16, #tpu.memory_space<vmem>>, %arg8: memref<1x128xf32, #tpu.memory_space<vmem>>, %arg9: memref<1x1x128xf32, #tpu.memory_space<vmem>>) attributes {dimension_semantics = [#tpu.dimension_semantics<parallel>], iteration_bounds = array<i64: 2>, scalar_prefetch = 0 : i64, scratch_operands = 0 : i64, tpu.core_type = #tpu.core_type<tc>, window_params = [{transform_indices = @transform_0, window_bounds = array<i64: 1, 2048, 64>}, {pipeline_mode = #tpu.pipeline_mode<synchronous>, transform_indices = @transform_1, window_bounds = array<i64: 2048, 128>}, {pipeline_mode = #tpu.pipeline_mode<synchronous>, transform_indices = @transform_2, window_bounds = array<i64: 1, 128>}, {pipeline_mode = #tpu.pipeline_mode<synchronous>, transform_indices = @transform_3, window_bounds = array<i64: 16, 64>}, {pipeline_mode = #tpu.pipeline_mode<synchronous>, transform_indices = @transform_4, window_bounds = array<i64: 16, 128, 128>}, {pipeline_mode = #tpu.pipeline_mode<synchronous>, transform_indices = @transform_5, window_bounds = array<i64: 1, 128>}, {pipeline_mode = #tpu.pipeline_mode<synchronous>, transform_indices = @transform_6, window_bounds = array<i64: 128, 128>}, {pipeline_mode = #tpu.pipeline_mode<synchronous>, transform_indices = @transform_7, window_bounds = array<i64: 1, 128>}, {transform_indices = @transform_8, window_bounds = array<i64: 1, 1, 128>}]} {
    %c0 = arith.constant 0 : index
    %c0_0 = arith.constant 0 : index
    %c0_1 = arith.constant 0 : index
    %0 = vector.load %arg1[%c0, %c0_0, %c0_1] : memref<1x2048x64xf32, #tpu.memory_space<vmem>>, vector<1x2048x64xf32>
    %1 = vector.shape_cast %0 : vector<1x2048x64xf32> to vector<2048x64xf32>
    %2 = arith.truncf %1 : vector<2048x64xf32> to vector<2048x64xbf16>
    %c0_2 = arith.constant 0 : index
    %c0_3 = arith.constant 0 : index
    %3 = vector.load %arg2[%c0_2, %c0_3] : memref<2048x128xbf16, #tpu.memory_space<vmem>>, vector<2048x128xbf16>
    %cst = arith.constant dense<0.000000e+00> : vector<64x128xf32>
    %4 = tpu.matmul %2, %3, %cst {dimension_numbers = #tpu.dot_dimension_numbers<[0], [0], [1], [1], [0, 1, 1, 1], [], []>} : vector<2048x64xbf16>, vector<2048x128xbf16>, vector<64x128xf32> -> vector<64x128xf32>
    %c0_4 = arith.constant 0 : index
    %c0_5 = arith.constant 0 : index
    %5 = vector.load %arg3[%c0_4, %c0_5] : memref<1x128xf32, #tpu.memory_space<vmem>>, vector<1x128xf32>
    %6 = vector.broadcast %5 : vector<1x128xf32> to vector<64x128xf32>
    %7 = arith.addf %4, %6 : vector<64x128xf32>
    %cst_6 = arith.constant 0.000000e+00 : f32
    %8 = vector.broadcast %cst_6 : f32 to vector<64x128xf32>
    %9 = arith.maximumf %7, %8 : vector<64x128xf32>
    %c0_7 = arith.constant 0 : index
    %c0_8 = arith.constant 0 : index
    %10 = vector.load %arg4[%c0_7, %c0_8] : memref<16x64xf32, #tpu.memory_space<vmem>>, vector<16x64xf32>
    %cst_9 = arith.constant dense<0.000000e+00> : vector<16x128xf32>
    %11 = tpu.matmul %10, %9, %cst_9 {dimension_numbers = #tpu.dot_dimension_numbers<[1], [0], [0], [1], [0, 0, 1, 1], [], []>} : vector<16x64xf32>, vector<64x128xf32>, vector<16x128xf32> -> vector<16x128xf32>
    %12 = arith.truncf %11 : vector<16x128xf32> to vector<16x128xbf16>
    %c0_10 = arith.constant 0 : index
    %c0_11 = arith.constant 0 : index
    %13 = vector.load %arg6[%c0_10, %c0_11] : memref<1x128xf32, #tpu.memory_space<vmem>>, vector<1x128xf32>
    %14 = vector.extract_strided_slice %12 {offsets = [0, 0], sizes = [1, 128], strides = [1, 1]} : vector<16x128xbf16> to vector<1x128xbf16>
    %c0_12 = arith.constant 0 : index
    %c0_13 = arith.constant 0 : index
    %c0_14 = arith.constant 0 : index
    %15 = vector.load %arg5[%c0_12, %c0_13, %c0_14] : memref<16x128x128xbf16, #tpu.memory_space<vmem>>, vector<1x128x128xbf16>
    %16 = vector.shape_cast %15 : vector<1x128x128xbf16> to vector<128x128xbf16>
    %cst_15 = arith.constant dense<0.000000e+00> : vector<1x128xf32>
    %17 = tpu.matmul %14, %16, %cst_15 {dimension_numbers = #tpu.dot_dimension_numbers<[1], [0], [0], [1], [0, 0, 1, 1], [], []>} : vector<1x128xbf16>, vector<128x128xbf16>, vector<1x128xf32> -> vector<1x128xf32>
    %18 = arith.addf %13, %17 : vector<1x128xf32>
    %19 = vector.extract_strided_slice %12 {offsets = [1, 0], sizes = [1, 128], strides = [1, 1]} : vector<16x128xbf16> to vector<1x128xbf16>
    %c1 = arith.constant 1 : index
    %c0_16 = arith.constant 0 : index
    %c0_17 = arith.constant 0 : index
    %20 = vector.load %arg5[%c1, %c0_16, %c0_17] : memref<16x128x128xbf16, #tpu.memory_space<vmem>>, vector<1x128x128xbf16>
    %21 = vector.shape_cast %20 : vector<1x128x128xbf16> to vector<128x128xbf16>
    %cst_18 = arith.constant dense<0.000000e+00> : vector<1x128xf32>
    %22 = tpu.matmul %19, %21, %cst_18 {dimension_numbers = #tpu.dot_dimension_numbers<[1], [0], [0], [1], [0, 0, 1, 1], [], []>} : vector<1x128xbf16>, vector<128x128xbf16>, vector<1x128xf32> -> vector<1x128xf32>
    %23 = arith.addf %18, %22 : vector<1x128xf32>
    %24 = vector.extract_strided_slice %12 {offsets = [2, 0], sizes = [1, 128], strides = [1, 1]} : vector<16x128xbf16> to vector<1x128xbf16>
    %c2 = arith.constant 2 : index
    %c0_19 = arith.constant 0 : index
    %c0_20 = arith.constant 0 : index
    %25 = vector.load %arg5[%c2, %c0_19, %c0_20] : memref<16x128x128xbf16, #tpu.memory_space<vmem>>, vector<1x128x128xbf16>
    %26 = vector.shape_cast %25 : vector<1x128x128xbf16> to vector<128x128xbf16>
    %cst_21 = arith.constant dense<0.000000e+00> : vector<1x128xf32>
    %27 = tpu.matmul %24, %26, %cst_21 {dimension_numbers = #tpu.dot_dimension_numbers<[1], [0], [0], [1], [0, 0, 1, 1], [], []>} : vector<1x128xbf16>, vector<128x128xbf16>, vector<1x128xf32> -> vector<1x128xf32>
    %28 = arith.addf %23, %27 : vector<1x128xf32>
    %29 = vector.extract_strided_slice %12 {offsets = [3, 0], sizes = [1, 128], strides = [1, 1]} : vector<16x128xbf16> to vector<1x128xbf16>
    %c3 = arith.constant 3 : index
    %c0_22 = arith.constant 0 : index
    %c0_23 = arith.constant 0 : index
    %30 = vector.load %arg5[%c3, %c0_22, %c0_23] : memref<16x128x128xbf16, #tpu.memory_space<vmem>>, vector<1x128x128xbf16>
    %31 = vector.shape_cast %30 : vector<1x128x128xbf16> to vector<128x128xbf16>
    %cst_24 = arith.constant dense<0.000000e+00> : vector<1x128xf32>
    %32 = tpu.matmul %29, %31, %cst_24 {dimension_numbers = #tpu.dot_dimension_numbers<[1], [0], [0], [1], [0, 0, 1, 1], [], []>} : vector<1x128xbf16>, vector<128x128xbf16>, vector<1x128xf32> -> vector<1x128xf32>
    %33 = arith.addf %28, %32 : vector<1x128xf32>
    %34 = vector.extract_strided_slice %12 {offsets = [4, 0], sizes = [1, 128], strides = [1, 1]} : vector<16x128xbf16> to vector<1x128xbf16>
    %c4 = arith.constant 4 : index
    %c0_25 = arith.constant 0 : index
    %c0_26 = arith.constant 0 : index
    %35 = vector.load %arg5[%c4, %c0_25, %c0_26] : memref<16x128x128xbf16, #tpu.memory_space<vmem>>, vector<1x128x128xbf16>
    %36 = vector.shape_cast %35 : vector<1x128x128xbf16> to vector<128x128xbf16>
    %cst_27 = arith.constant dense<0.000000e+00> : vector<1x128xf32>
    %37 = tpu.matmul %34, %36, %cst_27 {dimension_numbers = #tpu.dot_dimension_numbers<[1], [0], [0], [1], [0, 0, 1, 1], [], []>} : vector<1x128xbf16>, vector<128x128xbf16>, vector<1x128xf32> -> vector<1x128xf32>
    %38 = arith.addf %33, %37 : vector<1x128xf32>
    %39 = vector.extract_strided_slice %12 {offsets = [5, 0], sizes = [1, 128], strides = [1, 1]} : vector<16x128xbf16> to vector<1x128xbf16>
    %c5 = arith.constant 5 : index
    %c0_28 = arith.constant 0 : index
    %c0_29 = arith.constant 0 : index
    %40 = vector.load %arg5[%c5, %c0_28, %c0_29] : memref<16x128x128xbf16, #tpu.memory_space<vmem>>, vector<1x128x128xbf16>
    %41 = vector.shape_cast %40 : vector<1x128x128xbf16> to vector<128x128xbf16>
    %cst_30 = arith.constant dense<0.000000e+00> : vector<1x128xf32>
    %42 = tpu.matmul %39, %41, %cst_30 {dimension_numbers = #tpu.dot_dimension_numbers<[1], [0], [0], [1], [0, 0, 1, 1], [], []>} : vector<1x128xbf16>, vector<128x128xbf16>, vector<1x128xf32> -> vector<1x128xf32>
    %43 = arith.addf %38, %42 : vector<1x128xf32>
    %44 = vector.extract_strided_slice %12 {offsets = [6, 0], sizes = [1, 128], strides = [1, 1]} : vector<16x128xbf16> to vector<1x128xbf16>
    %c6 = arith.constant 6 : index
    %c0_31 = arith.constant 0 : index
    %c0_32 = arith.constant 0 : index
    %45 = vector.load %arg5[%c6, %c0_31, %c0_32] : memref<16x128x128xbf16, #tpu.memory_space<vmem>>, vector<1x128x128xbf16>
    %46 = vector.shape_cast %45 : vector<1x128x128xbf16> to vector<128x128xbf16>
    %cst_33 = arith.constant dense<0.000000e+00> : vector<1x128xf32>
    %47 = tpu.matmul %44, %46, %cst_33 {dimension_numbers = #tpu.dot_dimension_numbers<[1], [0], [0], [1], [0, 0, 1, 1], [], []>} : vector<1x128xbf16>, vector<128x128xbf16>, vector<1x128xf32> -> vector<1x128xf32>
    %48 = arith.addf %43, %47 : vector<1x128xf32>
    %49 = vector.extract_strided_slice %12 {offsets = [7, 0], sizes = [1, 128], strides = [1, 1]} : vector<16x128xbf16> to vector<1x128xbf16>
    %c7 = arith.constant 7 : index
    %c0_34 = arith.constant 0 : index
    %c0_35 = arith.constant 0 : index
    %50 = vector.load %arg5[%c7, %c0_34, %c0_35] : memref<16x128x128xbf16, #tpu.memory_space<vmem>>, vector<1x128x128xbf16>
    %51 = vector.shape_cast %50 : vector<1x128x128xbf16> to vector<128x128xbf16>
    %cst_36 = arith.constant dense<0.000000e+00> : vector<1x128xf32>
    %52 = tpu.matmul %49, %51, %cst_36 {dimension_numbers = #tpu.dot_dimension_numbers<[1], [0], [0], [1], [0, 0, 1, 1], [], []>} : vector<1x128xbf16>, vector<128x128xbf16>, vector<1x128xf32> -> vector<1x128xf32>
    %53 = arith.addf %48, %52 : vector<1x128xf32>
    %54 = vector.extract_strided_slice %12 {offsets = [8, 0], sizes = [1, 128], strides = [1, 1]} : vector<16x128xbf16> to vector<1x128xbf16>
    %c8 = arith.constant 8 : index
    %c0_37 = arith.constant 0 : index
    %c0_38 = arith.constant 0 : index
    %55 = vector.load %arg5[%c8, %c0_37, %c0_38] : memref<16x128x128xbf16, #tpu.memory_space<vmem>>, vector<1x128x128xbf16>
    %56 = vector.shape_cast %55 : vector<1x128x128xbf16> to vector<128x128xbf16>
    %cst_39 = arith.constant dense<0.000000e+00> : vector<1x128xf32>
    %57 = tpu.matmul %54, %56, %cst_39 {dimension_numbers = #tpu.dot_dimension_numbers<[1], [0], [0], [1], [0, 0, 1, 1], [], []>} : vector<1x128xbf16>, vector<128x128xbf16>, vector<1x128xf32> -> vector<1x128xf32>
    %58 = arith.addf %53, %57 : vector<1x128xf32>
    %59 = vector.extract_strided_slice %12 {offsets = [9, 0], sizes = [1, 128], strides = [1, 1]} : vector<16x128xbf16> to vector<1x128xbf16>
    %c9 = arith.constant 9 : index
    %c0_40 = arith.constant 0 : index
    %c0_41 = arith.constant 0 : index
    %60 = vector.load %arg5[%c9, %c0_40, %c0_41] : memref<16x128x128xbf16, #tpu.memory_space<vmem>>, vector<1x128x128xbf16>
    %61 = vector.shape_cast %60 : vector<1x128x128xbf16> to vector<128x128xbf16>
    %cst_42 = arith.constant dense<0.000000e+00> : vector<1x128xf32>
    %62 = tpu.matmul %59, %61, %cst_42 {dimension_numbers = #tpu.dot_dimension_numbers<[1], [0], [0], [1], [0, 0, 1, 1], [], []>} : vector<1x128xbf16>, vector<128x128xbf16>, vector<1x128xf32> -> vector<1x128xf32>
    %63 = arith.addf %58, %62 : vector<1x128xf32>
    %64 = vector.extract_strided_slice %12 {offsets = [10, 0], sizes = [1, 128], strides = [1, 1]} : vector<16x128xbf16> to vector<1x128xbf16>
    %c10 = arith.constant 10 : index
    %c0_43 = arith.constant 0 : index
    %c0_44 = arith.constant 0 : index
    %65 = vector.load %arg5[%c10, %c0_43, %c0_44] : memref<16x128x128xbf16, #tpu.memory_space<vmem>>, vector<1x128x128xbf16>
    %66 = vector.shape_cast %65 : vector<1x128x128xbf16> to vector<128x128xbf16>
    %cst_45 = arith.constant dense<0.000000e+00> : vector<1x128xf32>
    %67 = tpu.matmul %64, %66, %cst_45 {dimension_numbers = #tpu.dot_dimension_numbers<[1], [0], [0], [1], [0, 0, 1, 1], [], []>} : vector<1x128xbf16>, vector<128x128xbf16>, vector<1x128xf32> -> vector<1x128xf32>
    %68 = arith.addf %63, %67 : vector<1x128xf32>
    %69 = vector.extract_strided_slice %12 {offsets = [11, 0], sizes = [1, 128], strides = [1, 1]} : vector<16x128xbf16> to vector<1x128xbf16>
    %c11 = arith.constant 11 : index
    %c0_46 = arith.constant 0 : index
    %c0_47 = arith.constant 0 : index
    %70 = vector.load %arg5[%c11, %c0_46, %c0_47] : memref<16x128x128xbf16, #tpu.memory_space<vmem>>, vector<1x128x128xbf16>
    %71 = vector.shape_cast %70 : vector<1x128x128xbf16> to vector<128x128xbf16>
    %cst_48 = arith.constant dense<0.000000e+00> : vector<1x128xf32>
    %72 = tpu.matmul %69, %71, %cst_48 {dimension_numbers = #tpu.dot_dimension_numbers<[1], [0], [0], [1], [0, 0, 1, 1], [], []>} : vector<1x128xbf16>, vector<128x128xbf16>, vector<1x128xf32> -> vector<1x128xf32>
    %73 = arith.addf %68, %72 : vector<1x128xf32>
    %74 = vector.extract_strided_slice %12 {offsets = [12, 0], sizes = [1, 128], strides = [1, 1]} : vector<16x128xbf16> to vector<1x128xbf16>
    %c12 = arith.constant 12 : index
    %c0_49 = arith.constant 0 : index
    %c0_50 = arith.constant 0 : index
    %75 = vector.load %arg5[%c12, %c0_49, %c0_50] : memref<16x128x128xbf16, #tpu.memory_space<vmem>>, vector<1x128x128xbf16>
    %76 = vector.shape_cast %75 : vector<1x128x128xbf16> to vector<128x128xbf16>
    %cst_51 = arith.constant dense<0.000000e+00> : vector<1x128xf32>
    %77 = tpu.matmul %74, %76, %cst_51 {dimension_numbers = #tpu.dot_dimension_numbers<[1], [0], [0], [1], [0, 0, 1, 1], [], []>} : vector<1x128xbf16>, vector<128x128xbf16>, vector<1x128xf32> -> vector<1x128xf32>
    %78 = arith.addf %73, %77 : vector<1x128xf32>
    %79 = vector.extract_strided_slice %12 {offsets = [13, 0], sizes = [1, 128], strides = [1, 1]} : vector<16x128xbf16> to vector<1x128xbf16>
    %c13 = arith.constant 13 : index
    %c0_52 = arith.constant 0 : index
    %c0_53 = arith.constant 0 : index
    %80 = vector.load %arg5[%c13, %c0_52, %c0_53] : memref<16x128x128xbf16, #tpu.memory_space<vmem>>, vector<1x128x128xbf16>
    %81 = vector.shape_cast %80 : vector<1x128x128xbf16> to vector<128x128xbf16>
    %cst_54 = arith.constant dense<0.000000e+00> : vector<1x128xf32>
    %82 = tpu.matmul %79, %81, %cst_54 {dimension_numbers = #tpu.dot_dimension_numbers<[1], [0], [0], [1], [0, 0, 1, 1], [], []>} : vector<1x128xbf16>, vector<128x128xbf16>, vector<1x128xf32> -> vector<1x128xf32>
    %83 = arith.addf %78, %82 : vector<1x128xf32>
    %84 = vector.extract_strided_slice %12 {offsets = [14, 0], sizes = [1, 128], strides = [1, 1]} : vector<16x128xbf16> to vector<1x128xbf16>
    %c14 = arith.constant 14 : index
    %c0_55 = arith.constant 0 : index
    %c0_56 = arith.constant 0 : index
    %85 = vector.load %arg5[%c14, %c0_55, %c0_56] : memref<16x128x128xbf16, #tpu.memory_space<vmem>>, vector<1x128x128xbf16>
    %86 = vector.shape_cast %85 : vector<1x128x128xbf16> to vector<128x128xbf16>
    %cst_57 = arith.constant dense<0.000000e+00> : vector<1x128xf32>
    %87 = tpu.matmul %84, %86, %cst_57 {dimension_numbers = #tpu.dot_dimension_numbers<[1], [0], [0], [1], [0, 0, 1, 1], [], []>} : vector<1x128xbf16>, vector<128x128xbf16>, vector<1x128xf32> -> vector<1x128xf32>
    %88 = arith.addf %83, %87 : vector<1x128xf32>
    %89 = vector.extract_strided_slice %12 {offsets = [15, 0], sizes = [1, 128], strides = [1, 1]} : vector<16x128xbf16> to vector<1x128xbf16>
    %c15 = arith.constant 15 : index
    %c0_58 = arith.constant 0 : index
    %c0_59 = arith.constant 0 : index
    %90 = vector.load %arg5[%c15, %c0_58, %c0_59] : memref<16x128x128xbf16, #tpu.memory_space<vmem>>, vector<1x128x128xbf16>
    %91 = vector.shape_cast %90 : vector<1x128x128xbf16> to vector<128x128xbf16>
    %cst_60 = arith.constant dense<0.000000e+00> : vector<1x128xf32>
    %92 = tpu.matmul %89, %91, %cst_60 {dimension_numbers = #tpu.dot_dimension_numbers<[1], [0], [0], [1], [0, 0, 1, 1], [], []>} : vector<1x128xbf16>, vector<128x128xbf16>, vector<1x128xf32> -> vector<1x128xf32>
    %93 = arith.addf %88, %92 : vector<1x128xf32>
    %94 = arith.truncf %93 : vector<1x128xf32> to vector<1x128xbf16>
    %c0_61 = arith.constant 0 : index
    %c0_62 = arith.constant 0 : index
    %95 = vector.load %arg7[%c0_61, %c0_62] : memref<128x128xbf16, #tpu.memory_space<vmem>>, vector<128x128xbf16>
    %cst_63 = arith.constant dense<0.000000e+00> : vector<1x128xf32>
    %96 = tpu.matmul %94, %95, %cst_63 {dimension_numbers = #tpu.dot_dimension_numbers<[1], [0], [0], [1], [0, 0, 1, 1], [], []>} : vector<1x128xbf16>, vector<128x128xbf16>, vector<1x128xf32> -> vector<1x128xf32>
    %c0_64 = arith.constant 0 : index
    %c0_65 = arith.constant 0 : index
    %97 = vector.load %arg8[%c0_64, %c0_65] : memref<1x128xf32, #tpu.memory_space<vmem>>, vector<1x128xf32>
    %98 = arith.addf %96, %97 : vector<1x128xf32>
    %99 = arith.negf %98 : vector<1x128xf32>
    %100 = math.exp %99 : vector<1x128xf32>
    %cst_66 = arith.constant 1.000000e+00 : f32
    %101 = vector.broadcast %cst_66 : f32 to vector<1x128xf32>
    %102 = arith.addf %101, %100 : vector<1x128xf32>
    %103 = arith.divf %101, %102 : vector<1x128xf32>
    %c0_67 = arith.constant 0 : index
    %c0_68 = arith.constant 0 : index
    %c0_69 = arith.constant 0 : index
    %104 = vector.load %arg9[%c0_67, %c0_68, %c0_69] : memref<1x1x128xf32, #tpu.memory_space<vmem>>, vector<1x1x128xf32>
    %105 = vector.shape_cast %104 : vector<1x1x128xf32> to vector<1x128xf32>
    %106 = vector.shape_cast %103 : vector<1x128xf32> to vector<1x1x128xf32>
    tpu.vector_store %arg9[%c0_67, %c0_68, %c0_69], %106 {strides = array<i32>} : memref<1x1x128xf32, #tpu.memory_space<vmem>>, vector<1x1x128xf32>,
    return
  }
  func.func @transform_0(%arg0: i32) -> (i32, i32, i32) {
    %c0_i32 = arith.constant 0 : i32
    %c0_i32_0 = arith.constant 0 : i32
    %c0_i32_1 = arith.constant 0 : i32
    return %arg0, %c0_i32, %c0_i32_0 : i32, i32, i32
  }
  func.func @transform_1(%arg0: i32) -> (i32, i32) {
    %c0_i32 = arith.constant 0 : i32
    %c0_i32_0 = arith.constant 0 : i32
    %c0_i32_1 = arith.constant 0 : i32
    return %c0_i32, %c0_i32_0 : i32, i32
  }
  func.func @transform_2(%arg0: i32) -> (i32, i32) {
    %c0_i32 = arith.constant 0 : i32
    %c0_i32_0 = arith.constant 0 : i32
    %c0_i32_1 = arith.constant 0 : i32
    return %c0_i32, %c0_i32_0 : i32, i32
  }
  func.func @transform_3(%arg0: i32) -> (i32, i32) {
    %c0_i32 = arith.constant 0 : i32
    %c0_i32_0 = arith.constant 0 : i32
    %c0_i32_1 = arith.constant 0 : i32
    return %c0_i32, %c0_i32_0 : i32, i32
  }
  func.func @transform_4(%arg0: i32) -> (i32, i32, i32) {
    %c0_i32 = arith.constant 0 : i32
    %c0_i32_0 = arith.constant 0 : i32
    %c0_i32_1 = arith.constant 0 : i32
    %c0_i32_2 = arith.constant 0 : i32
    return %c0_i32, %c0_i32_0, %c0_i32_1 : i32, i32, i32
  }
  func.func @transform_5(%arg0: i32) -> (i32, i32) {
    %c0_i32 = arith.constant 0 : i32
    %c0_i32_0 = arith.constant 0 : i32
    %c0_i32_1 = arith.constant 0 : i32
    return %c0_i32, %c0_i32_0 : i32, i32
  }
  func.func @transform_6(%arg0: i32) -> (i32, i32) {
    %c0_i32 = arith.constant 0 : i32
    %c0_i32_0 = arith.constant 0 : i32
    %c0_i32_1 = arith.constant 0 : i32
    return %c0_i32, %c0_i32_0 : i32, i32
  }
  func.func @transform_7(%arg0: i32) -> (i32, i32) {
    %c0_i32 = arith.constant 0 : i32
    %c0_i32_0 = arith.constant 0 : i32
    %c0_i32_1 = arith.constant 0 : i32
    return %c0_i32, %c0_i32_0 : i32, i32
  }
  func.func @transform_8(%arg0: i32) -> (i32, i32, i32) {
    %c0_i32 = arith.constant 0 : i32
    %c0_i32_0 = arith.constant 0 : i32
    %c0_i32_1 = arith.constant 0 : i32
    return %arg0, %c0_i32, %c0_i32_0 : i32, i32, i32
  }
}

</mosaic_0001>

<llo_original>
// kernel: tpu_custom_call.1
$region0: #{tpu_custom_call.1}
  #allocation0 [shape = 'u32[]', space=smem, size = 0x4, offset = 0x4, fixed_abs, tag = 'smem constant byte address 0x4 - core index']
  #allocation1 [shape = 'u32[144,128]{1,0:T(1,128)}', space=vmem, size = 0x12000, scoped, tag = 'internal scratch']
  %s0 = inlined_call_operand.vmem [shape: f32[2,2048,64], index: 0, kind: input, shape index: {}]
  %s1 = inlined_call_operand.vmem [shape: bf16[2048,128], index: 1, kind: input, shape index: {}]
  %s2 = inlined_call_operand.vmem [shape: f32[1,128], index: 2, kind: input, shape index: {}]
  %s3 = inlined_call_operand.vmem [shape: f32[16,64], index: 3, kind: input, shape index: {}]
  %s4 = inlined_call_operand.vmem [shape: bf16[16,128,128], index: 4, kind: input, shape index: {}]
  %s5 = inlined_call_operand.vmem [shape: f32[1,128], index: 5, kind: input, shape index: {}]
  %s6 = inlined_call_operand.vmem [shape: bf16[128,128], index: 6, kind: input, shape index: {}]
  %s7 = inlined_call_operand.vmem [shape: f32[1,128], index: 7, kind: input, shape index: {}]
  %s8 = inlined_call_operand.hbm [shape: f32[2,1,128], index: 8, kind: output, shape index: {}]
  %s9 = sld [smem:[#allocation0]]
  $region65: #{tpu_custom_call.1} parent=0
    _
  %s11 = ssub.s32 1, %s9
  %s12 = scalar_select 0, %s11, %s9
  $region1: #{tpu_custom_call.1} parent=0
    #allocation2 [shape = 'u8[1024]{0}', space=vmem, size = 0x400, scoped, tag = 'output window, operand 0']
    #allocation3 [shape = 's32[2]{0}', space=sflag, size = 0x8, scoped, tag = 'scoped memory for tpu_custom_call.1']
    %13 = vsyncpa [#allocation3], 0
    %s14 = scalar_lea.sflag [#allocation3], 1
    %15 = vsyncpa %s14, 0
    loop: start=0, step=1, limit=4
    $region2: #{tpu_custom_call.1} parent=1 // loop_pre_header
      _
    $region3: #{tpu_custom_call.1} parent=1 // loop_header
      %s17 = sphi 0, %s21
      %p18 = scmp.ge.s32.totalorder %s17, 4
      %s27 = sphi 0, %s29
      %s30 = sphi 0, %s27
      %s31 = sphi 0, %s30
      %s47 = sphi 0, %s31
      %s51 = sphi 0, %s51
      %s53 = sphi 0, %s51
      %s54 = sphi 0, %s53
      %s68 = sphi 0, %s54
      %s72 = sphi 0, %s72
      %s74 = sphi 0, %s72
      %s75 = sphi 0, %s74
      %s89 = sphi 0, %s75
      %s93 = sphi 0, %s93
      %s95 = sphi 0, %s93
      %s96 = sphi 0, %s95
      %s110 = sphi 0, %s96
      %s114 = sphi 0, %s114
      %s116 = sphi 0, %s114
      %s117 = sphi 0, %s116
      %s131 = sphi 0, %s117
      %s135 = sphi 0, %s135
      %s137 = sphi 0, %s135
      %s138 = sphi 0, %s137
      %s152 = sphi 0, %s138
      %s156 = sphi 0, %s156
      %s158 = sphi 0, %s156
      %s159 = sphi 0, %s158
      %s173 = sphi 0, %s159
      %s177 = sphi 0, %s177
      %s179 = sphi 0, %s177
      %s180 = sphi 0, %s179
      %s194 = sphi 0, %s180
      %s200 = sphi 0, %s202
      %s203 = sphi 0, %s200
      %s204 = sphi 0, %s203
      %s220 = sphi 0, %s204
    $region4: #{tpu_custom_call.1} parent=1 // loop_header_branch
      %20 = sbr.rel (%p18) target = $region8
    $region5: #{tpu_custom_call.1} parent=1 // loop_body
      %s22 = ssub.s32 %s17, 1
      %s23 = ssub.s32 %s17, 2
      %s24 = sadd.s32 %s17, 1
      %s25 = ssub.s32 %s17, %s24
      %p26 = scmp.eq.s32.totalorder %s25, 0
      %s28 = sadd.s32 %s27, 1
      %s29 = scalar_select %p26, %s27, %s28
      %p32 = pneg %p26
      %p33 = scmp.eq.s32.totalorder %s17, 1
      %p34 = por %p32, %p33
      %p35 = scmp.ne.s32.totalorder %s27, %s30
      %p36 = scmp.eq.s32.totalorder %s17, 0
      %p37 = por %p35, %p36
      %p38 = scmp.ne.s32.totalorder %s27, %s30
      %p39 = scmp.eq.s32.totalorder %s22, 1
      %p40 = por %p38, %p39
      %p41 = scmp.ne.s32.totalorder %s30, %s31
      %p42 = scmp.eq.s32.totalorder %s22, 0
      %p43 = por %p41, %p42
      %p44 = scmp.ne.s32.totalorder %s30, %s31
      %p45 = scmp.eq.s32.totalorder %s23, 1
      %p46 = por %p44, %p45
      %p48 = scmp.ne.s32.totalorder %s31, %s47
      %p49 = scmp.eq.s32.totalorder %s23, 0
      %p50 = por %p48, %p49
      %s52 = sadd.s32 %s51, 1
      %p55 = scmp.eq.s32.totalorder %s17, 1
      %p56 = scmp.ne.s32.totalorder %s51, %s53
      %p57 = scmp.eq.s32.totalorder %s17, 0
      %p58 = por %p56, %p57
      %p59 = scmp.ne.s32.totalorder %s51, %s53
      %p60 = scmp.eq.s32.totalorder %s22, 1
      %p61 = por %p59, %p60
      %p62 = scmp.ne.s32.totalorder %s53, %s54
      %p63 = scmp.eq.s32.totalorder %s22, 0
      %p64 = por %p62, %p63
      %p65 = scmp.ne.s32.totalorder %s53, %s54
      %p66 = scmp.eq.s32.totalorder %s23, 1
      %p67 = por %p65, %p66
      %p69 = scmp.ne.s32.totalorder %s54, %s68
      %p70 = scmp.eq.s32.totalorder %s23, 0
      %p71 = por %p69, %p70
      %s73 = sadd.s32 %s72, 1
      %p76 = scmp.eq.s32.totalorder %s17, 1
      %p77 = scmp.ne.s32.totalorder %s72, %s74
      %p78 = scmp.eq.s32.totalorder %s17, 0
      %p79 = por %p77, %p78
      %p80 = scmp.ne.s32.totalorder %s72, %s74
      %p81 = scmp.eq.s32.totalorder %s22, 1
      %p82 = por %p80, %p81
      %p83 = scmp.ne.s32.totalorder %s74, %s75
      %p84 = scmp.eq.s32.totalorder %s22, 0
      %p85 = por %p83, %p84
      %p86 = scmp.ne.s32.totalorder %s74, %s75
      %p87 = scmp.eq.s32.totalorder %s23, 1
      %p88 = por %p86, %p87
      %p90 = scmp.ne.s32.totalorder %s75, %s89
      %p91 = scmp.eq.s32.totalorder %s23, 0
      %p92 = por %p90, %p91
      %s94 = sadd.s32 %s93, 1
      %p97 = scmp.eq.s32.totalorder %s17, 1
      %p98 = scmp.ne.s32.totalorder %s93, %s95
      %p99 = scmp.eq.s32.totalorder %s17, 0
      %p100 = por %p98, %p99
      %p101 = scmp.ne.s32.totalorder %s93, %s95
      %p102 = scmp.eq.s32.totalorder %s22, 1
      %p103 = por %p101, %p102
      %p104 = scmp.ne.s32.totalorder %s95, %s96
      %p105 = scmp.eq.s32.totalorder %s22, 0
      %p106 = por %p104, %p105
      %p107 = scmp.ne.s32.totalorder %s95, %s96
      %p108 = scmp.eq.s32.totalorder %s23, 1
      %p109 = por %p107, %p108
      %p111 = scmp.ne.s32.totalorder %s96, %s110
      %p112 = scmp.eq.s32.totalorder %s23, 0
      %p113 = por %p111, %p112
      %s115 = sadd.s32 %s114, 1
      %p118 = scmp.eq.s32.totalorder %s17, 1
      %p119 = scmp.ne.s32.totalorder %s114, %s116
      %p120 = scmp.eq.s32.totalorder %s17, 0
      %p121 = por %p119, %p120
      %p122 = scmp.ne.s32.totalorder %s114, %s116
      %p123 = scmp.eq.s32.totalorder %s22, 1
      %p124 = por %p122, %p123
      %p125 = scmp.ne.s32.totalorder %s116, %s117
      %p126 = scmp.eq.s32.totalorder %s22, 0
      %p127 = por %p125, %p126
      %p128 = scmp.ne.s32.totalorder %s116, %s117
      %p129 = scmp.eq.s32.totalorder %s23, 1
      %p130 = por %p128, %p129
      %p132 = scmp.ne.s32.totalorder %s117, %s131
      %p133 = scmp.eq.s32.totalorder %s23, 0
      %p134 = por %p132, %p133
      %s136 = sadd.s32 %s135, 1
      %p139 = scmp.eq.s32.totalorder %s17, 1
      %p140 = scmp.ne.s32.totalorder %s135, %s137
      %p141 = scmp.eq.s32.totalorder %s17, 0
      %p142 = por %p140, %p141
      %p143 = scmp.ne.s32.totalorder %s135, %s137
      %p144 = scmp.eq.s32.totalorder %s22, 1
      %p145 = por %p143, %p144
      %p146 = scmp.ne.s32.totalorder %s137, %s138
      %p147 = scmp.eq.s32.totalorder %s22, 0
      %p148 = por %p146, %p147
      %p149 = scmp.ne.s32.totalorder %s137, %s138
      %p150 = scmp.eq.s32.totalorder %s23, 1
      %p151 = por %p149, %p150
      %p153 = scmp.ne.s32.totalorder %s138, %s152
      %p154 = scmp.eq.s32.totalorder %s23, 0
      %p155 = por %p153, %p154
      %s157 = sadd.s32 %s156, 1
      %p160 = scmp.eq.s32.totalorder %s17, 1
      %p161 = scmp.ne.s32.totalorder %s156, %s158
      %p162 = scmp.eq.s32.totalorder %s17, 0
      %p163 = por %p161, %p162
      %p164 = scmp.ne.s32.totalorder %s156, %s158
      %p165 = scmp.eq.s32.totalorder %s22, 1
      %p166 = por %p164, %p165
      %p167 = scmp.ne.s32.totalorder %s158, %s159
      %p168 = scmp.eq.s32.totalorder %s22, 0
      %p169 = por %p167, %p168
      %p170 = scmp.ne.s32.totalorder %s158, %s159
      %p171 = scmp.eq.s32.totalorder %s23, 1
      %p172 = por %p170, %p171
      %p174 = scmp.ne.s32.totalorder %s159, %s173
      %p175 = scmp.eq.s32.totalorder %s23, 0
      %p176 = por %p174, %p175
      %s178 = sadd.s32 %s177, 1
      %p181 = scmp.eq.s32.totalorder %s17, 1
      %p182 = scmp.ne.s32.totalorder %s177, %s179
      %p183 = scmp.eq.s32.totalorder %s17, 0
      %p184 = por %p182, %p183
      %p185 = scmp.ne.s32.totalorder %s177, %s179
      %p186 = scmp.eq.s32.totalorder %s22, 1
      %p187 = por %p185, %p186
      %p188 = scmp.ne.s32.totalorder %s179, %s180
      %p189 = scmp.eq.s32.totalorder %s22, 0
      %p190 = por %p188, %p189
      %p191 = scmp.ne.s32.totalorder %s179, %s180
      %p192 = scmp.eq.s32.totalorder %s23, 1
      %p193 = por %p191, %p192
      %p195 = scmp.ne.s32.totalorder %s180, %s194
      %p196 = scmp.eq.s32.totalorder %s23, 0
      %p197 = por %p195, %p196
      %s198 = ssub.s32 %s17, %s24
      %p199 = scmp.eq.s32.totalorder %s198, 0
      %s201 = sadd.s32 %s200, 1
      %s202 = scalar_select %p199, %s200, %s201
      %p205 = pneg %p199
      %p206 = scmp.eq.s32.totalorder %s17, 1
      %p207 = por %p205, %p206
      %p208 = scmp.ne.s32.totalorder %s200, %s203
      %p209 = scmp.eq.s32.totalorder %s17, 0
      %p210 = por %p208, %p209
      %p211 = scmp.ne.s32.totalorder %s200, %s203
      %p212 = scmp.eq.s32.totalorder %s22, 1
      %p213 = por %p211, %p212
      %p214 = scmp.ne.s32.totalorder %s203, %s204
      %p215 = scmp.eq.s32.totalorder %s22, 0
      %p216 = por %p214, %p215
      %p217 = scmp.ne.s32.totalorder %s203, %s204
      %p218 = scmp.eq.s32.totalorder %s23, 1
      %p219 = por %p217, %p218
      %p221 = scmp.ne.s32.totalorder %s204, %s220
      %p222 = scmp.eq.s32.totalorder %s23, 0
      %p223 = por %p221, %p222
      %p224 = scmp.le.s32.totalorder 1, %s17
      %p225 = scmp.lt.s32.totalorder %s17, 3
      %p226 = pnand %p224, %p225
      %p227 = pneg %p226
      // Predicated region
      $region9: #{tpu_custom_call.1} parent=5 // pred_check
        _
      $region10: #{tpu_custom_call.1} parent=5 // pred_check_branch
        %229 = sbr.rel (%p226) target = $region12
      $region11: #{tpu_custom_call.1} parent=5 // pred_region
        %s230 = ssub.s32 %s17, 1
        // Predicated region
        $region13: #{tpu_custom_call.1} parent=11 // pred_check
          %p231 = pneg %p64
        $region14: #{tpu_custom_call.1} parent=11 // pred_check_branch
          %233 = sbr.rel (%p231) target = $region16
        $region15: #{tpu_custom_call.1} parent=11 // pred_region
          _
        $region16: #{tpu_custom_call.1} parent=11 // pred_fallthru
          _
        // Predicated region
        $region17: #{tpu_custom_call.1} parent=11 // pred_check
          %p234 = pneg %p85
        $region18: #{tpu_custom_call.1} parent=11 // pred_check_branch
          %236 = sbr.rel (%p234) target = $region20
        $region19: #{tpu_custom_call.1} parent=11 // pred_region
          _
        $region20: #{tpu_custom_call.1} parent=11 // pred_fallthru
          _
        // Predicated region
        $region21: #{tpu_custom_call.1} parent=11 // pred_check
          %p237 = pneg %p106
        $region22: #{tpu_custom_call.1} parent=11 // pred_check_branch
          %239 = sbr.rel (%p237) target = $region24
        $region23: #{tpu_custom_call.1} parent=11 // pred_region
          _
        $region24: #{tpu_custom_call.1} parent=11 // pred_fallthru
          _
        // Predicated region
        $region25: #{tpu_custom_call.1} parent=11 // pred_check
          %p240 = pneg %p127
        $region26: #{tpu_custom_call.1} parent=11 // pred_check_branch
          %242 = sbr.rel (%p240) target = $region28
        $region27: #{tpu_custom_call.1} parent=11 // pred_region
          _
        $region28: #{tpu_custom_call.1} parent=11 // pred_fallthru
          _
        // Predicated region
        $region29: #{tpu_custom_call.1} parent=11 // pred_check
          %p243 = pneg %p148
        $region30: #{tpu_custom_call.1} parent=11 // pred_check_branch
          %245 = sbr.rel (%p243) target = $region32
        $region31: #{tpu_custom_call.1} parent=11 // pred_region
          _
        $region32: #{tpu_custom_call.1} parent=11 // pred_fallthru
          _
        // Predicated region
        $region33: #{tpu_custom_call.1} parent=11 // pred_check
          %p246 = pneg %p169
        $region34: #{tpu_custom_call.1} parent=11 // pred_check_branch
          %248 = sbr.rel (%p246) target = $region36
        $region35: #{tpu_custom_call.1} parent=11 // pred_region
          _
        $region36: #{tpu_custom_call.1} parent=11 // pred_fallthru
          _
        // Predicated region
        $region37: #{tpu_custom_call.1} parent=11 // pred_check
          %p249 = pneg %p190
        $region38: #{tpu_custom_call.1} parent=11 // pred_check_branch
          %251 = sbr.rel (%p249) target = $region40
        $region39: #{tpu_custom_call.1} parent=11 // pred_region
          _
        $region40: #{tpu_custom_call.1} parent=11 // pred_fallthru
          _
      $region12: #{tpu_custom_call.1} parent=5 // pred_fallthru
        _
      %p252 = scmp.lt.s32.totalorder %s17, 2
      // Predicated region
      $region41: #{tpu_custom_call.1} parent=5 // pred_check
        %p253 = pneg %p252
      $region42: #{tpu_custom_call.1} parent=5 // pred_check_branch
        %255 = sbr.rel (%p253) target = $region44
      $region43: #{tpu_custom_call.1} parent=5 // pred_region
        // Predicated region
        $region45: #{tpu_custom_call.1} parent=43 // pred_check
          %p256 = pneg %p37
        $region46: #{tpu_custom_call.1} parent=43 // pred_check_branch
          %258 = sbr.rel (%p256) target = $region48
        $region47: #{tpu_custom_call.1} parent=43 // pred_region
          %p259 = scmp.lt.s32.totalorder %s17, 1
          %s260 = scalar_select %p259, %s17, 1
          %s261 = smul.addr %s260, 256
          %s262 = smul.addr %s261, 8
          %s263 = scalar_lea.vmem %s0, %s262
        $region48: #{tpu_custom_call.1} parent=43 // pred_fallthru
          _
      $region44: #{tpu_custom_call.1} parent=5 // pred_fallthru
        _
      %p264 = scmp.le.s32.totalorder 1, %s17
      %p265 = scmp.lt.s32.totalorder %s17, 3
      %p266 = pnand %p264, %p265
      %p267 = pneg %p266
      // Predicated region
      $region49: #{tpu_custom_call.1} parent=5 // pred_check
        _
      $region50: #{tpu_custom_call.1} parent=5 // pred_check_branch
        %269 = sbr.rel (%p266) target = $region52
      $region51: #{tpu_custom_call.1} parent=5 // pred_region
        %s270 = ssub.s32 %s17, 1
        %p271 = scmp.lt.s32.totalorder %s22, 1
        %s272 = scalar_select %p271, %s22, 1
        %s273 = smul.addr %s272, 256
        %s274 = smul.addr %s273, 8
        %s275 = scalar_lea.vmem %s0, %s274
        %p276 = pneg %p43
        %p277 = pneg %p40
        %p278 = pneg %p64
        %p279 = pneg %p61
        %p280 = pneg %p85
        %p281 = pneg %p82
        %p282 = pneg %p106
        %p283 = pneg %p103
        %p284 = pneg %p127
        %p285 = pneg %p124
        %p286 = pneg %p148
        %p287 = pneg %p145
        %p288 = pneg %p169
        %p289 = pneg %p166
        %p290 = pneg %p190
        %p291 = pneg %p187
        %p292 = pneg %p216
        %p293 = pneg %p213
        %s294 = sand.u32 %s203, 1
        %s295 = scalar_lea.sflag [#allocation3], %s294
        %s296 = sand.u32 %s203, 1
        %s297 = scalar_lea.vmem [#allocation2], %s296
        %p298 = scmp.lt.s32.totalorder %s22, 1
        %s299 = scalar_select %p298, %s22, 1
        %s300 = smul.addr %s299, 256
        %s301 = smul.addr %s300, 8
        %s302 = scalar_lea.vmem %s0, %s301
        %v304 = vld [vmem:[%s302] sm:$0xff]
        %v305 = vld [vmem:[%s302 + $0x8] sm:$0xff]
        %v306 = vld [vmem:[%s302 + $0x10] sm:$0xff]
        %v307 = vld [vmem:[%s302 + $0x18] sm:$0xff]
        %v308 = vld [vmem:[%s302 + $0x20] sm:$0xff]
        %v309 = vld [vmem:[%s302 + $0x28] sm:$0xff]
        %v310 = vld [vmem:[%s302 + $0x30] sm:$0xff]
        %v311 = vld [vmem:[%s302 + $0x38] sm:$0xff]
        %v312 = vld [vmem:[%s302 + $0x40] sm:$0xff]
        %v313 = vld [vmem:[%s302 + $0x48] sm:$0xff]
        %v314 = vld [vmem:[%s302 + $0x50] sm:$0xff]
        %v315 = vld [vmem:[%s302 + $0x58] sm:$0xff]
        %v316 = vld [vmem:[%s302 + $0x60] sm:$0xff]
        %v317 = vld [vmem:[%s302 + $0x68] sm:$0xff]
        %v318 = vld [vmem:[%s302 + $0x70] sm:$0xff]
        %v319 = vld [vmem:[%s302 + $0x78] sm:$0xff]
        %v320 = vld [vmem:[%s302 + $0x80] sm:$0xff]
        %v321 = vld [vmem:[%s302 + $0x88] sm:$0xff]
        %v322 = vld [vmem:[%s302 + $0x90] sm:$0xff]
        %v323 = vld [vmem:[%s302 + $0x98] sm:$0xff]
        %v324 = vld [vmem:[%s302 + $0xa0] sm:$0xff]
        %v325 = vld [vmem:[%s302 + $0xa8] sm:$0xff]
        %v326 = vld [vmem:[%s302 + $0xb0] sm:$0xff]
        %v327 = vld [vmem:[%s302 + $0xb8] sm:$0xff]
        %v328 = vld [vmem:[%s302 + $0xc0] sm:$0xff]
        %v329 = vld [vmem:[%s302 + $0xc8] sm:$0xff]
        %v330 = vld [vmem:[%s302 + $0xd0] sm:$0xff]
        %v331 = vld [vmem:[%s302 + $0xd8] sm:$0xff]
        %v332 = vld [vmem:[%s302 + $0xe0] sm:$0xff]
        %v333 = vld [vmem:[%s302 + $0xe8] sm:$0xff]
        %v334 = vld [vmem:[%s302 + $0xf0] sm:$0xff]
        %v335 = vld [vmem:[%s302 + $0xf8] sm:$0xff]
        %v336 = vld [vmem:[%s302 + $0x100] sm:$0xff]
        %v337 = vld [vmem:[%s302 + $0x108] sm:$0xff]
        %v338 = vld [vmem:[%s302 + $0x110] sm:$0xff]
        %v339 = vld [vmem:[%s302 + $0x118] sm:$0xff]
        %v340 = vld [vmem:[%s302 + $0x120] sm:$0xff]
        %v341 = vld [vmem:[%s302 + $0x128] sm:$0xff]
        %v342 = vld [vmem:[%s302 + $0x130] sm:$0xff]
        %v343 = vld [vmem:[%s302 + $0x138] sm:$0xff]
        %v344 = vld [vmem:[%s302 + $0x140] sm:$0xff]
        %v345 = vld [vmem:[%s302 + $0x148] sm:$0xff]
        %v346 = vld [vmem:[%s302 + $0x150] sm:$0xff]
        %v347 = vld [vmem:[%s302 + $0x158] sm:$0xff]
        %v348 = vld [vmem:[%s302 + $0x160] sm:$0xff]
        %v349 = vld [vmem:[%s302 + $0x168] sm:$0xff]
        %v350 = vld [vmem:[%s302 + $0x170] sm:$0xff]
        %v351 = vld [vmem:[%s302 + $0x178] sm:$0xff]
        %v352 = vld [vmem:[%s302 + $0x180] sm:$0xff]
        %v353 = vld [vmem:[%s302 + $0x188] sm:$0xff]
        %v354 = vld [vmem:[%s302 + $0x190] sm:$0xff]
        %v355 = vld [vmem:[%s302 + $0x198] sm:$0xff]
        %v356 = vld [vmem:[%s302 + $0x1a0] sm:$0xff]
        %v357 = vld [vmem:[%s302 + $0x1a8] sm:$0xff]
        %v358 = vld [vmem:[%s302 + $0x1b0] sm:$0xff]
        %v359 = vld [vmem:[%s302 + $0x1b8] sm:$0xff]
        %v360 = vld [vmem:[%s302 + $0x1c0] sm:$0xff]
        %v361 = vld [vmem:[%s302 + $0x1c8] sm:$0xff]
        %v362 = vld [vmem:[%s302 + $0x1d0] sm:$0xff]
        %v363 = vld [vmem:[%s302 + $0x1d8] sm:$0xff]
        %v364 = vld [vmem:[%s302 + $0x1e0] sm:$0xff]
        %v365 = vld [vmem:[%s302 + $0x1e8] sm:$0xff]
        %v366 = vld [vmem:[%s302 + $0x1f0] sm:$0xff]
        %v367 = vld [vmem:[%s302 + $0x1f8] sm:$0xff]
        %v368 = vld [vmem:[%s302 + $0x200] sm:$0xff]
        %v369 = vld [vmem:[%s302 + $0x208] sm:$0xff]
        %v370 = vld [vmem:[%s302 + $0x210] sm:$0xff]
        %v371 = vld [vmem:[%s302 + $0x218] sm:$0xff]
        %v372 = vld [vmem:[%s302 + $0x220] sm:$0xff]
        %v373 = vld [vmem:[%s302 + $0x228] sm:$0xff]
        %v374 = vld [vmem:[%s302 + $0x230] sm:$0xff]
        %v375 = vld [vmem:[%s302 + $0x238] sm:$0xff]
        %v376 = vld [vmem:[%s302 + $0x240] sm:$0xff]
        %v377 = vld [vmem:[%s302 + $0x248] sm:$0xff]
        %v378 = vld [vmem:[%s302 + $0x250] sm:$0xff]
        %v379 = vld [vmem:[%s302 + $0x258] sm:$0xff]
        %v380 = vld [vmem:[%s302 + $0x260] sm:$0xff]
        %v381 = vld [vmem:[%s302 + $0x268] sm:$0xff]
        %v382 = vld [vmem:[%s302 + $0x270] sm:$0xff]
        %v383 = vld [vmem:[%s302 + $0x278] sm:$0xff]
        %v384 = vld [vmem:[%s302 + $0x280] sm:$0xff]
        %v385 = vld [vmem:[%s302 + $0x288] sm:$0xff]
        %v386 = vld [vmem:[%s302 + $0x290] sm:$0xff]
        %v387 = vld [vmem:[%s302 + $0x298] sm:$0xff]
        %v388 = vld [vmem:[%s302 + $0x2a0] sm:$0xff]
        %v389 = vld [vmem:[%s302 + $0x2a8] sm:$0xff]
        %v390 = vld [vmem:[%s302 + $0x2b0] sm:$0xff]
        %v391 = vld [vmem:[%s302 + $0x2b8] sm:$0xff]
        %v392 = vld [vmem:[%s302 + $0x2c0] sm:$0xff]
        %v393 = vld [vmem:[%s302 + $0x2c8] sm:$0xff]
        %v394 = vld [vmem:[%s302 + $0x2d0] sm:$0xff]
        %v395 = vld [vmem:[%s302 + $0x2d8] sm:$0xff]
        %v396 = vld [vmem:[%s302 + $0x2e0] sm:$0xff]
        %v397 = vld [vmem:[%s302 + $0x2e8] sm:$0xff]
        %v398 = vld [vmem:[%s302 + $0x2f0] sm:$0xff]
        %v399 = vld [vmem:[%s302 + $0x2f8] sm:$0xff]
        %v400 = vld [vmem:[%s302 + $0x300] sm:$0xff]
        %v401 = vld [vmem:[%s302 + $0x308] sm:$0xff]
        %v402 = vld [vmem:[%s302 + $0x310] sm:$0xff]
        %v403 = vld [vmem:[%s302 + $0x318] sm:$0xff]
        %v404 = vld [vmem:[%s302 + $0x320] sm:$0xff]
        %v405 = vld [vmem:[%s302 + $0x328] sm:$0xff]
        %v406 = vld [vmem:[%s302 + $0x330] sm:$0xff]
        %v407 = vld [vmem:[%s302 + $0x338] sm:$0xff]
        %v408 = vld [vmem:[%s302 + $0x340] sm:$0xff]
        %v409 = vld [vmem:[%s302 + $0x348] sm:$0xff]
        %v410 = vld [vmem:[%s302 + $0x350] sm:$0xff]
        %v411 = vld [vmem:[%s302 + $0x358] sm:$0xff]
        %v412 = vld [vmem:[%s302 + $0x360] sm:$0xff]
        %v413 = vld [vmem:[%s302 + $0x368] sm:$0xff]
        %v414 = vld [vmem:[%s302 + $0x370] sm:$0xff]
        %v415 = vld [vmem:[%s302 + $0x378] sm:$0xff]
        %v416 = vld [vmem:[%s302 + $0x380] sm:$0xff]
        %v417 = vld [vmem:[%s302 + $0x388] sm:$0xff]
        %v418 = vld [vmem:[%s302 + $0x390] sm:$0xff]
        %v419 = vld [vmem:[%s302 + $0x398] sm:$0xff]
        %v420 = vld [vmem:[%s302 + $0x3a0] sm:$0xff]
        %v421 = vld [vmem:[%s302 + $0x3a8] sm:$0xff]
        %v422 = vld [vmem:[%s302 + $0x3b0] sm:$0xff]
        %v423 = vld [vmem:[%s302 + $0x3b8] sm:$0xff]
        %v424 = vld [vmem:[%s302 + $0x3c0] sm:$0xff]
        %v425 = vld [vmem:[%s302 + $0x3c8] sm:$0xff]
        %v426 = vld [vmem:[%s302 + $0x3d0] sm:$0xff]
        %v427 = vld [vmem:[%s302 + $0x3d8] sm:$0xff]
        %v428 = vld [vmem:[%s302 + $0x3e0] sm:$0xff]
        %v429 = vld [vmem:[%s302 + $0x3e8] sm:$0xff]
        %v430 = vld [vmem:[%s302 + $0x3f0] sm:$0xff]
        %v431 = vld [vmem:[%s302 + $0x3f8] sm:$0xff]
        %v432 = vld [vmem:[%s302 + $0x400] sm:$0xff]
        %v433 = vld [vmem:[%s302 + $0x408] sm:$0xff]
        %v434 = vld [vmem:[%s302 + $0x410] sm:$0xff]
        %v435 = vld [vmem:[%s302 + $0x418] sm:$0xff]
        %v436 = vld [vmem:[%s302 + $0x420] sm:$0xff]
        %v437 = vld [vmem:[%s302 + $0x428] sm:$0xff]
        %v438 = vld [vmem:[%s302 + $0x430] sm:$0xff]
        %v439 = vld [vmem:[%s302 + $0x438] sm:$0xff]
        %v440 = vld [vmem:[%s302 + $0x440] sm:$0xff]
        %v441 = vld [vmem:[%s302 + $0x448] sm:$0xff]
        %v442 = vld [vmem:[%s302 + $0x450] sm:$0xff]
        %v443 = vld [vmem:[%s302 + $0x458] sm:$0xff]
        %v444 = vld [vmem:[%s302 + $0x460] sm:$0xff]
        %v445 = vld [vmem:[%s302 + $0x468] sm:$0xff]
        %v446 = vld [vmem:[%s302 + $0x470] sm:$0xff]
        %v447 = vld [vmem:[%s302 + $0x478] sm:$0xff]
        %v448 = vld [vmem:[%s302 + $0x480] sm:$0xff]
        %v449 = vld [vmem:[%s302 + $0x488] sm:$0xff]
        %v450 = vld [vmem:[%s302 + $0x490] sm:$0xff]
        %v451 = vld [vmem:[%s302 + $0x498] sm:$0xff]
        %v452 = vld [vmem:[%s302 + $0x4a0] sm:$0xff]
        %v453 = vld [vmem:[%s302 + $0x4a8] sm:$0xff]
        %v454 = vld [vmem:[%s302 + $0x4b0] sm:$0xff]
        %v455 = vld [vmem:[%s302 + $0x4b8] sm:$0xff]
        %v456 = vld [vmem:[%s302 + $0x4c0] sm:$0xff]
        %v457 = vld [vmem:[%s302 + $0x4c8] sm:$0xff]
        %v458 = vld [vmem:[%s302 + $0x4d0] sm:$0xff]
        %v459 = vld [vmem:[%s302 + $0x4d8] sm:$0xff]
        %v460 = vld [vmem:[%s302 + $0x4e0] sm:$0xff]
        %v461 = vld [vmem:[%s302 + $0x4e8] sm:$0xff]
        %v462 = vld [vmem:[%s302 + $0x4f0] sm:$0xff]
        %v463 = vld [vmem:[%s302 + $0x4f8] sm:$0xff]
        %v464 = vld [vmem:[%s302 + $0x500] sm:$0xff]
        %v465 = vld [vmem:[%s302 + $0x508] sm:$0xff]
        %v466 = vld [vmem:[%s302 + $0x510] sm:$0xff]
        %v467 = vld [vmem:[%s302 + $0x518] sm:$0xff]
        %v468 = vld [vmem:[%s302 + $0x520] sm:$0xff]
        %v469 = vld [vmem:[%s302 + $0x528] sm:$0xff]
        %v470 = vld [vmem:[%s302 + $0x530] sm:$0xff]
        %v471 = vld [vmem:[%s302 + $0x538] sm:$0xff]
        %v472 = vld [vmem:[%s302 + $0x540] sm:$0xff]
        %v473 = vld [vmem:[%s302 + $0x548] sm:$0xff]
        %v474 = vld [vmem:[%s302 + $0x550] sm:$0xff]
        %v475 = vld [vmem:[%s302 + $0x558] sm:$0xff]
        %v476 = vld [vmem:[%s302 + $0x560] sm:$0xff]
        %v477 = vld [vmem:[%s302 + $0x568] sm:$0xff]
        %v478 = vld [vmem:[%s302 + $0x570] sm:$0xff]
        %v479 = vld [vmem:[%s302 + $0x578] sm:$0xff]
        %v480 = vld [vmem:[%s302 + $0x580] sm:$0xff]
        %v481 = vld [vmem:[%s302 + $0x588] sm:$0xff]
        %v482 = vld [vmem:[%s302 + $0x590] sm:$0xff]
        %v483 = vld [vmem:[%s302 + $0x598] sm:$0xff]
        %v484 = vld [vmem:[%s302 + $0x5a0] sm:$0xff]
        %v485 = vld [vmem:[%s302 + $0x5a8] sm:$0xff]
        %v486 = vld [vmem:[%s302 + $0x5b0] sm:$0xff]
        %v487 = vld [vmem:[%s302 + $0x5b8] sm:$0xff]
        %v488 = vld [vmem:[%s302 + $0x5c0] sm:$0xff]
        %v489 = vld [vmem:[%s302 + $0x5c8] sm:$0xff]
        %v490 = vld [vmem:[%s302 + $0x5d0] sm:$0xff]
        %v491 = vld [vmem:[%s302 + $0x5d8] sm:$0xff]
        %v492 = vld [vmem:[%s302 + $0x5e0] sm:$0xff]
        %v493 = vld [vmem:[%s302 + $0x5e8] sm:$0xff]
        %v494 = vld [vmem:[%s302 + $0x5f0] sm:$0xff]
        %v495 = vld [vmem:[%s302 + $0x5f8] sm:$0xff]
        %v496 = vld [vmem:[%s302 + $0x600] sm:$0xff]
        %v497 = vld [vmem:[%s302 + $0x608] sm:$0xff]
        %v498 = vld [vmem:[%s302 + $0x610] sm:$0xff]
        %v499 = vld [vmem:[%s302 + $0x618] sm:$0xff]
        %v500 = vld [vmem:[%s302 + $0x620] sm:$0xff]
        %v501 = vld [vmem:[%s302 + $0x628] sm:$0xff]
        %v502 = vld [vmem:[%s302 + $0x630] sm:$0xff]
        %v503 = vld [vmem:[%s302 + $0x638] sm:$0xff]
        %v504 = vld [vmem:[%s302 + $0x640] sm:$0xff]
        %v505 = vld [vmem:[%s302 + $0x648] sm:$0xff]
        %v506 = vld [vmem:[%s302 + $0x650] sm:$0xff]
        %v507 = vld [vmem:[%s302 + $0x658] sm:$0xff]
        %v508 = vld [vmem:[%s302 + $0x660] sm:$0xff]
        %v509 = vld [vmem:[%s302 + $0x668] sm:$0xff]
        %v510 = vld [vmem:[%s302 + $0x670] sm:$0xff]
        %v511 = vld [vmem:[%s302 + $0x678] sm:$0xff]
        %v512 = vld [vmem:[%s302 + $0x680] sm:$0xff]
        %v513 = vld [vmem:[%s302 + $0x688] sm:$0xff]
        %v514 = vld [vmem:[%s302 + $0x690] sm:$0xff]
        %v515 = vld [vmem:[%s302 + $0x698] sm:$0xff]
        %v516 = vld [vmem:[%s302 + $0x6a0] sm:$0xff]
        %v517 = vld [vmem:[%s302 + $0x6a8] sm:$0xff]
        %v518 = vld [vmem:[%s302 + $0x6b0] sm:$0xff]
        %v519 = vld [vmem:[%s302 + $0x6b8] sm:$0xff]
        %v520 = vld [vmem:[%s302 + $0x6c0] sm:$0xff]
        %v521 = vld [vmem:[%s302 + $0x6c8] sm:$0xff]
        %v522 = vld [vmem:[%s302 + $0x6d0] sm:$0xff]
        %v523 = vld [vmem:[%s302 + $0x6d8] sm:$0xff]
        %v524 = vld [vmem:[%s302 + $0x6e0] sm:$0xff]
        %v525 = vld [vmem:[%s302 + $0x6e8] sm:$0xff]
        %v526 = vld [vmem:[%s302 + $0x6f0] sm:$0xff]
        %v527 = vld [vmem:[%s302 + $0x6f8] sm:$0xff]
        %v528 = vld [vmem:[%s302 + $0x700] sm:$0xff]
        %v529 = vld [vmem:[%s302 + $0x708] sm:$0xff]
        %v530 = vld [vmem:[%s302 + $0x710] sm:$0xff]
        %v531 = vld [vmem:[%s302 + $0x718] sm:$0xff]
        %v532 = vld [vmem:[%s302 + $0x720] sm:$0xff]
        %v533 = vld [vmem:[%s302 + $0x728] sm:$0xff]
        %v534 = vld [vmem:[%s302 + $0x730] sm:$0xff]
        %v535 = vld [vmem:[%s302 + $0x738] sm:$0xff]
        %v536 = vld [vmem:[%s302 + $0x740] sm:$0xff]
        %v537 = vld [vmem:[%s302 + $0x748] sm:$0xff]
        %v538 = vld [vmem:[%s302 + $0x750] sm:$0xff]
        %v539 = vld [vmem:[%s302 + $0x758] sm:$0xff]
        %v540 = vld [vmem:[%s302 + $0x760] sm:$0xff]
        %v541 = vld [vmem:[%s302 + $0x768] sm:$0xff]
        %v542 = vld [vmem:[%s302 + $0x770] sm:$0xff]
        %v543 = vld [vmem:[%s302 + $0x778] sm:$0xff]
        %v544 = vld [vmem:[%s302 + $0x780] sm:$0xff]
        %v545 = vld [vmem:[%s302 + $0x788] sm:$0xff]
        %v546 = vld [vmem:[%s302 + $0x790] sm:$0xff]
        %v547 = vld [vmem:[%s302 + $0x798] sm:$0xff]
        %v548 = vld [vmem:[%s302 + $0x7a0] sm:$0xff]
        %v549 = vld [vmem:[%s302 + $0x7a8] sm:$0xff]
        %v550 = vld [vmem:[%s302 + $0x7b0] sm:$0xff]
        %v551 = vld [vmem:[%s302 + $0x7b8] sm:$0xff]
        %v552 = vld [vmem:[%s302 + $0x7c0] sm:$0xff]
        %v553 = vld [vmem:[%s302 + $0x7c8] sm:$0xff]
        %v554 = vld [vmem:[%s302 + $0x7d0] sm:$0xff]
        %v555 = vld [vmem:[%s302 + $0x7d8] sm:$0xff]
        %v556 = vld [vmem:[%s302 + $0x7e0] sm:$0xff]
        %v557 = vld [vmem:[%s302 + $0x7e8] sm:$0xff]
        %v558 = vld [vmem:[%s302 + $0x7f0] sm:$0xff]
        %v559 = vld [vmem:[%s302 + $0x7f8] sm:$0xff]
        %v560 = vpack.c.bf16 %v305, %v304
        %v561 = vpack.c.bf16 %v307, %v306
        %v562 = vpack.c.bf16 %v309, %v308
        %v563 = vpack.c.bf16 %v311, %v310
        %v564 = vpack.c.bf16 %v313, %v312
        %v565 = vpack.c.bf16 %v315, %v314
        %v566 = vpack.c.bf16 %v317, %v316
        %v567 = vpack.c.bf16 %v319, %v318
        %v568 = vpack.c.bf16 %v321, %v320
        %v569 = vpack.c.bf16 %v323, %v322
        %v570 = vpack.c.bf16 %v325, %v324
        %v571 = vpack.c.bf16 %v327, %v326
        %v572 = vpack.c.bf16 %v329, %v328
        %v573 = vpack.c.bf16 %v331, %v330
        %v574 = vpack.c.bf16 %v333, %v332
        %v575 = vpack.c.bf16 %v335, %v334
        %v576 = vpack.c.bf16 %v337, %v336
        %v577 = vpack.c.bf16 %v339, %v338
        %v578 = vpack.c.bf16 %v341, %v340
        %v579 = vpack.c.bf16 %v343, %v342
        %v580 = vpack.c.bf16 %v345, %v344
        %v581 = vpack.c.bf16 %v347, %v346
        %v582 = vpack.c.bf16 %v349, %v348
        %v583 = vpack.c.bf16 %v351, %v350
        %v584 = vpack.c.bf16 %v353, %v352
        %v585 = vpack.c.bf16 %v355, %v354
        %v586 = vpack.c.bf16 %v357, %v356
        %v587 = vpack.c.bf16 %v359, %v358
        %v588 = vpack.c.bf16 %v361, %v360
        %v589 = vpack.c.bf16 %v363, %v362
        %v590 = vpack.c.bf16 %v365, %v364
        %v591 = vpack.c.bf16 %v367, %v366
        %v592 = vpack.c.bf16 %v369, %v368
        %v593 = vpack.c.bf16 %v371, %v370
        %v594 = vpack.c.bf16 %v373, %v372
        %v595 = vpack.c.bf16 %v375, %v374
        %v596 = vpack.c.bf16 %v377, %v376
        %v597 = vpack.c.bf16 %v379, %v378
        %v598 = vpack.c.bf16 %v381, %v380
        %v599 = vpack.c.bf16 %v383, %v382
        %v600 = vpack.c.bf16 %v385, %v384
        %v601 = vpack.c.bf16 %v387, %v386
        %v602 = vpack.c.bf16 %v389, %v388
        %v603 = vpack.c.bf16 %v391, %v390
        %v604 = vpack.c.bf16 %v393, %v392
        %v605 = vpack.c.bf16 %v395, %v394
        %v606 = vpack.c.bf16 %v397, %v396
        %v607 = vpack.c.bf16 %v399, %v398
        %v608 = vpack.c.bf16 %v401, %v400
        %v609 = vpack.c.bf16 %v403, %v402
        %v610 = vpack.c.bf16 %v405, %v404
        %v611 = vpack.c.bf16 %v407, %v406
        %v612 = vpack.c.bf16 %v409, %v408
        %v613 = vpack.c.bf16 %v411, %v410
        %v614 = vpack.c.bf16 %v413, %v412
        %v615 = vpack.c.bf16 %v415, %v414
        %v616 = vpack.c.bf16 %v417, %v416
        %v617 = vpack.c.bf16 %v419, %v418
        %v618 = vpack.c.bf16 %v421, %v420
        %v619 = vpack.c.bf16 %v423, %v422
        %v620 = vpack.c.bf16 %v425, %v424
        %v621 = vpack.c.bf16 %v427, %v426
        %v622 = vpack.c.bf16 %v429, %v428
        %v623 = vpack.c.bf16 %v431, %v430
        %v624 = vpack.c.bf16 %v433, %v432
        %v625 = vpack.c.bf16 %v435, %v434
        %v626 = vpack.c.bf16 %v437, %v436
        %v627 = vpack.c.bf16 %v439, %v438
        %v628 = vpack.c.bf16 %v441, %v440
        %v629 = vpack.c.bf16 %v443, %v442
        %v630 = vpack.c.bf16 %v445, %v444
        %v631 = vpack.c.bf16 %v447, %v446
        %v632 = vpack.c.bf16 %v449, %v448
        %v633 = vpack.c.bf16 %v451, %v450
        %v634 = vpack.c.bf16 %v453, %v452
        %v635 = vpack.c.bf16 %v455, %v454
        %v636 = vpack.c.bf16 %v457, %v456
        %v637 = vpack.c.bf16 %v459, %v458
        %v638 = vpack.c.bf16 %v461, %v460
        %v639 = vpack.c.bf16 %v463, %v462
        %v640 = vpack.c.bf16 %v465, %v464
        %v641 = vpack.c.bf16 %v467, %v466
        %v642 = vpack.c.bf16 %v469, %v468
        %v643 = vpack.c.bf16 %v471, %v470
        %v644 = vpack.c.bf16 %v473, %v472
        %v645 = vpack.c.bf16 %v475, %v474
        %v646 = vpack.c.bf16 %v477, %v476
        %v647 = vpack.c.bf16 %v479, %v478
        %v648 = vpack.c.bf16 %v481, %v480
        %v649 = vpack.c.bf16 %v483, %v482
        %v650 = vpack.c.bf16 %v485, %v484
        %v651 = vpack.c.bf16 %v487, %v486
        %v652 = vpack.c.bf16 %v489, %v488
        %v653 = vpack.c.bf16 %v491, %v490
        %v654 = vpack.c.bf16 %v493, %v492
        %v655 = vpack.c.bf16 %v495, %v494
        %v656 = vpack.c.bf16 %v497, %v496
        %v657 = vpack.c.bf16 %v499, %v498
        %v658 = vpack.c.bf16 %v501, %v500
        %v659 = vpack.c.bf16 %v503, %v502
        %v660 = vpack.c.bf16 %v505, %v504
        %v661 = vpack.c.bf16 %v507, %v506
        %v662 = vpack.c.bf16 %v509, %v508
        %v663 = vpack.c.bf16 %v511, %v510
        %v664 = vpack.c.bf16 %v513, %v512
        %v665 = vpack.c.bf16 %v515, %v514
        %v666 = vpack.c.bf16 %v517, %v516
        %v667 = vpack.c.bf16 %v519, %v518
        %v668 = vpack.c.bf16 %v521, %v520
        %v669 = vpack.c.bf16 %v523, %v522
        %v670 = vpack.c.bf16 %v525, %v524
        %v671 = vpack.c.bf16 %v527, %v526
        %v672 = vpack.c.bf16 %v529, %v528
        %v673 = vpack.c.bf16 %v531, %v530
        %v674 = vpack.c.bf16 %v533, %v532
        %v675 = vpack.c.bf16 %v535, %v534
        %v676 = vpack.c.bf16 %v537, %v536
        %v677 = vpack.c.bf16 %v539, %v538
        %v678 = vpack.c.bf16 %v541, %v540
        %v679 = vpack.c.bf16 %v543, %v542
        %v680 = vpack.c.bf16 %v545, %v544
        %v681 = vpack.c.bf16 %v547, %v546
        %v682 = vpack.c.bf16 %v549, %v548
        %v683 = vpack.c.bf16 %v551, %v550
        %v684 = vpack.c.bf16 %v553, %v552
        %v685 = vpack.c.bf16 %v555, %v554
        %v686 = vpack.c.bf16 %v557, %v556
        %v687 = vpack.c.bf16 %v559, %v558
        %v688 = vld [vmem:[%s1] sm:$0xf]
        %v689 = vld [vmem:[%s1 + $0x4] sm:$0xf]
        %v690 = vld [vmem:[%s1 + $0x8] sm:$0xf]
        %v691 = vld [vmem:[%s1 + $0xc] sm:$0xf]
        %v692 = vld [vmem:[%s1 + $0x10] sm:$0xf]
        %v693 = vld [vmem:[%s1 + $0x14] sm:$0xf]
        %v694 = vld [vmem:[%s1 + $0x18] sm:$0xf]
        %v695 = vld [vmem:[%s1 + $0x1c] sm:$0xf]
        %v696 = vld [vmem:[%s1 + $0x20] sm:$0xf]
        %v697 = vld [vmem:[%s1 + $0x24] sm:$0xf]
        %v698 = vld [vmem:[%s1 + $0x28] sm:$0xf]
        %v699 = vld [vmem:[%s1 + $0x2c] sm:$0xf]
        %v700 = vld [vmem:[%s1 + $0x30] sm:$0xf]
        %v701 = vld [vmem:[%s1 + $0x34] sm:$0xf]
        %v702 = vld [vmem:[%s1 + $0x38] sm:$0xf]
        %v703 = vld [vmem:[%s1 + $0x3c] sm:$0xf]
        %v704 = vld [vmem:[%s1 + $0x40] sm:$0xf]
        %v705 = vld [vmem:[%s1 + $0x44] sm:$0xf]
        %v706 = vld [vmem:[%s1 + $0x48] sm:$0xf]
        %v707 = vld [vmem:[%s1 + $0x4c] sm:$0xf]
        %v708 = vld [vmem:[%s1 + $0x50] sm:$0xf]
        %v709 = vld [vmem:[%s1 + $0x54] sm:$0xf]
        %v710 = vld [vmem:[%s1 + $0x58] sm:$0xf]
        %v711 = vld [vmem:[%s1 + $0x5c] sm:$0xf]
        %v712 = vld [vmem:[%s1 + $0x60] sm:$0xf]
        %v713 = vld [vmem:[%s1 + $0x64] sm:$0xf]
        %v714 = vld [vmem:[%s1 + $0x68] sm:$0xf]
        %v715 = vld [vmem:[%s1 + $0x6c] sm:$0xf]
        %v716 = vld [vmem:[%s1 + $0x70] sm:$0xf]
        %v717 = vld [vmem:[%s1 + $0x74] sm:$0xf]
        %v718 = vld [vmem:[%s1 + $0x78] sm:$0xf]
        %v719 = vld [vmem:[%s1 + $0x7c] sm:$0xf]
        %v720 = vld [vmem:[%s1 + $0x80] sm:$0xf]
        %v721 = vld [vmem:[%s1 + $0x84] sm:$0xf]
        %v722 = vld [vmem:[%s1 + $0x88] sm:$0xf]
        %v723 = vld [vmem:[%s1 + $0x8c] sm:$0xf]
        %v724 = vld [vmem:[%s1 + $0x90] sm:$0xf]
        %v725 = vld [vmem:[%s1 + $0x94] sm:$0xf]
        %v726 = vld [vmem:[%s1 + $0x98] sm:$0xf]
        %v727 = vld [vmem:[%s1 + $0x9c] sm:$0xf]
        %v728 = vld [vmem:[%s1 + $0xa0] sm:$0xf]
        %v729 = vld [vmem:[%s1 + $0xa4] sm:$0xf]
        %v730 = vld [vmem:[%s1 + $0xa8] sm:$0xf]
        %v731 = vld [vmem:[%s1 + $0xac] sm:$0xf]
        %v732 = vld [vmem:[%s1 + $0xb0] sm:$0xf]
        %v733 = vld [vmem:[%s1 + $0xb4] sm:$0xf]
        %v734 = vld [vmem:[%s1 + $0xb8] sm:$0xf]
        %v735 = vld [vmem:[%s1 + $0xbc] sm:$0xf]
        %v736 = vld [vmem:[%s1 + $0xc0] sm:$0xf]
        %v737 = vld [vmem:[%s1 + $0xc4] sm:$0xf]
        %v738 = vld [vmem:[%s1 + $0xc8] sm:$0xf]
        %v739 = vld [vmem:[%s1 + $0xcc] sm:$0xf]
        %v740 = vld [vmem:[%s1 + $0xd0] sm:$0xf]
        %v741 = vld [vmem:[%s1 + $0xd4] sm:$0xf]
        %v742 = vld [vmem:[%s1 + $0xd8] sm:$0xf]
        %v743 = vld [vmem:[%s1 + $0xdc] sm:$0xf]
        %v744 = vld [vmem:[%s1 + $0xe0] sm:$0xf]
        %v745 = vld [vmem:[%s1 + $0xe4] sm:$0xf]
        %v746 = vld [vmem:[%s1 + $0xe8] sm:$0xf]
        %v747 = vld [vmem:[%s1 + $0xec] sm:$0xf]
        %v748 = vld [vmem:[%s1 + $0xf0] sm:$0xf]
        %v749 = vld [vmem:[%s1 + $0xf4] sm:$0xf]
        %v750 = vld [vmem:[%s1 + $0xf8] sm:$0xf]
        %v751 = vld [vmem:[%s1 + $0xfc] sm:$0xf]
        %v752 = vld [vmem:[%s1 + $0x100] sm:$0xf]
        %v753 = vld [vmem:[%s1 + $0x104] sm:$0xf]
        %v754 = vld [vmem:[%s1 + $0x108] sm:$0xf]
        %v755 = vld [vmem:[%s1 + $0x10c] sm:$0xf]
        %v756 = vld [vmem:[%s1 + $0x110] sm:$0xf]
        %v757 = vld [vmem:[%s1 + $0x114] sm:$0xf]
        %v758 = vld [vmem:[%s1 + $0x118] sm:$0xf]
        %v759 = vld [vmem:[%s1 + $0x11c] sm:$0xf]
        %v760 = vld [vmem:[%s1 + $0x120] sm:$0xf]
        %v761 = vld [vmem:[%s1 + $0x124] sm:$0xf]
        %v762 = vld [vmem:[%s1 + $0x128] sm:$0xf]
        %v763 = vld [vmem:[%s1 + $0x12c] sm:$0xf]
        %v764 = vld [vmem:[%s1 + $0x130] sm:$0xf]
        %v765 = vld [vmem:[%s1 + $0x134] sm:$0xf]
        %v766 = vld [vmem:[%s1 + $0x138] sm:$0xf]
        %v767 = vld [vmem:[%s1 + $0x13c] sm:$0xf]
        %v768 = vld [vmem:[%s1 + $0x140] sm:$0xf]
        %v769 = vld [vmem:[%s1 + $0x144] sm:$0xf]
        %v770 = vld [vmem:[%s1 + $0x148] sm:$0xf]
        %v771 = vld [vmem:[%s1 + $0x14c] sm:$0xf]
        %v772 = vld [vmem:[%s1 + $0x150] sm:$0xf]
        %v773 = vld [vmem:[%s1 + $0x154] sm:$0xf]
        %v774 = vld [vmem:[%s1 + $0x158] sm:$0xf]
        %v775 = vld [vmem:[%s1 + $0x15c] sm:$0xf]
        %v776 = vld [vmem:[%s1 + $0x160] sm:$0xf]
        %v777 = vld [vmem:[%s1 + $0x164] sm:$0xf]
        %v778 = vld [vmem:[%s1 + $0x168] sm:$0xf]
        %v779 = vld [vmem:[%s1 + $0x16c] sm:$0xf]
        %v780 = vld [vmem:[%s1 + $0x170] sm:$0xf]
        %v781 = vld [vmem:[%s1 + $0x174] sm:$0xf]
        %v782 = vld [vmem:[%s1 + $0x178] sm:$0xf]
        %v783 = vld [vmem:[%s1 + $0x17c] sm:$0xf]
        %v784 = vld [vmem:[%s1 + $0x180] sm:$0xf]
        %v785 = vld [vmem:[%s1 + $0x184] sm:$0xf]
        %v786 = vld [vmem:[%s1 + $0x188] sm:$0xf]
        %v787 = vld [vmem:[%s1 + $0x18c] sm:$0xf]
        %v788 = vld [vmem:[%s1 + $0x190] sm:$0xf]
        %v789 = vld [vmem:[%s1 + $0x194] sm:$0xf]
        %v790 = vld [vmem:[%s1 + $0x198] sm:$0xf]
        %v791 = vld [vmem:[%s1 + $0x19c] sm:$0xf]
        %v792 = vld [vmem:[%s1 + $0x1a0] sm:$0xf]
        %v793 = vld [vmem:[%s1 + $0x1a4] sm:$0xf]
        %v794 = vld [vmem:[%s1 + $0x1a8] sm:$0xf]
        %v795 = vld [vmem:[%s1 + $0x1ac] sm:$0xf]
        %v796 = vld [vmem:[%s1 + $0x1b0] sm:$0xf]
        %v797 = vld [vmem:[%s1 + $0x1b4] sm:$0xf]
        %v798 = vld [vmem:[%s1 + $0x1b8] sm:$0xf]
        %v799 = vld [vmem:[%s1 + $0x1bc] sm:$0xf]
        %v800 = vld [vmem:[%s1 + $0x1c0] sm:$0xf]
        %v801 = vld [vmem:[%s1 + $0x1c4] sm:$0xf]
        %v802 = vld [vmem:[%s1 + $0x1c8] sm:$0xf]
        %v803 = vld [vmem:[%s1 + $0x1cc] sm:$0xf]
        %v804 = vld [vmem:[%s1 + $0x1d0] sm:$0xf]
        %v805 = vld [vmem:[%s1 + $0x1d4] sm:$0xf]
        %v806 = vld [vmem:[%s1 + $0x1d8] sm:$0xf]
        %v807 = vld [vmem:[%s1 + $0x1dc] sm:$0xf]
        %v808 = vld [vmem:[%s1 + $0x1e0] sm:$0xf]
        %v809 = vld [vmem:[%s1 + $0x1e4] sm:$0xf]
        %v810 = vld [vmem:[%s1 + $0x1e8] sm:$0xf]
        %v811 = vld [vmem:[%s1 + $0x1ec] sm:$0xf]
        %v812 = vld [vmem:[%s1 + $0x1f0] sm:$0xf]
        %v813 = vld [vmem:[%s1 + $0x1f4] sm:$0xf]
        %v814 = vld [vmem:[%s1 + $0x1f8] sm:$0xf]
        %v815 = vld [vmem:[%s1 + $0x1fc] sm:$0xf]
        %v816 = vld [vmem:[%s1 + $0x200] sm:$0xf]
        %v817 = vld [vmem:[%s1 + $0x204] sm:$0xf]
        %v818 = vld [vmem:[%s1 + $0x208] sm:$0xf]
        %v819 = vld [vmem:[%s1 + $0x20c] sm:$0xf]
        %v820 = vld [vmem:[%s1 + $0x210] sm:$0xf]
        %v821 = vld [vmem:[%s1 + $0x214] sm:$0xf]
        %v822 = vld [vmem:[%s1 + $0x218] sm:$0xf]
        %v823 = vld [vmem:[%s1 + $0x21c] sm:$0xf]
        %v824 = vld [vmem:[%s1 + $0x220] sm:$0xf]
        %v825 = vld [vmem:[%s1 + $0x224] sm:$0xf]
        %v826 = vld [vmem:[%s1 + $0x228] sm:$0xf]
        %v827 = vld [vmem:[%s1 + $0x22c] sm:$0xf]
        %v828 = vld [vmem:[%s1 + $0x230] sm:$0xf]
        %v829 = vld [vmem:[%s1 + $0x234] sm:$0xf]
        %v830 = vld [vmem:[%s1 + $0x238] sm:$0xf]
        %v831 = vld [vmem:[%s1 + $0x23c] sm:$0xf]
        %v832 = vld [vmem:[%s1 + $0x240] sm:$0xf]
        %v833 = vld [vmem:[%s1 + $0x244] sm:$0xf]
        %v834 = vld [vmem:[%s1 + $0x248] sm:$0xf]
        %v835 = vld [vmem:[%s1 + $0x24c] sm:$0xf]
        %v836 = vld [vmem:[%s1 + $0x250] sm:$0xf]
        %v837 = vld [vmem:[%s1 + $0x254] sm:$0xf]
        %v838 = vld [vmem:[%s1 + $0x258] sm:$0xf]
        %v839 = vld [vmem:[%s1 + $0x25c] sm:$0xf]
        %v840 = vld [vmem:[%s1 + $0x260] sm:$0xf]
        %v841 = vld [vmem:[%s1 + $0x264] sm:$0xf]
        %v842 = vld [vmem:[%s1 + $0x268] sm:$0xf]
        %v843 = vld [vmem:[%s1 + $0x26c] sm:$0xf]
        %v844 = vld [vmem:[%s1 + $0x270] sm:$0xf]
        %v845 = vld [vmem:[%s1 + $0x274] sm:$0xf]
        %v846 = vld [vmem:[%s1 + $0x278] sm:$0xf]
        %v847 = vld [vmem:[%s1 + $0x27c] sm:$0xf]
        %v848 = vld [vmem:[%s1 + $0x280] sm:$0xf]
        %v849 = vld [vmem:[%s1 + $0x284] sm:$0xf]
        %v850 = vld [vmem:[%s1 + $0x288] sm:$0xf]
        %v851 = vld [vmem:[%s1 + $0x28c] sm:$0xf]
        %v852 = vld [vmem:[%s1 + $0x290] sm:$0xf]
        %v853 = vld [vmem:[%s1 + $0x294] sm:$0xf]
        %v854 = vld [vmem:[%s1 + $0x298] sm:$0xf]
        %v855 = vld [vmem:[%s1 + $0x29c] sm:$0xf]
        %v856 = vld [vmem:[%s1 + $0x2a0] sm:$0xf]
        %v857 = vld [vmem:[%s1 + $0x2a4] sm:$0xf]
        %v858 = vld [vmem:[%s1 + $0x2a8] sm:$0xf]
        %v859 = vld [vmem:[%s1 + $0x2ac] sm:$0xf]
        %v860 = vld [vmem:[%s1 + $0x2b0] sm:$0xf]
        %v861 = vld [vmem:[%s1 + $0x2b4] sm:$0xf]
        %v862 = vld [vmem:[%s1 + $0x2b8] sm:$0xf]
        %v863 = vld [vmem:[%s1 + $0x2bc] sm:$0xf]
        %v864 = vld [vmem:[%s1 + $0x2c0] sm:$0xf]
        %v865 = vld [vmem:[%s1 + $0x2c4] sm:$0xf]
        %v866 = vld [vmem:[%s1 + $0x2c8] sm:$0xf]
        %v867 = vld [vmem:[%s1 + $0x2cc] sm:$0xf]
        %v868 = vld [vmem:[%s1 + $0x2d0] sm:$0xf]
        %v869 = vld [vmem:[%s1 + $0x2d4] sm:$0xf]
        %v870 = vld [vmem:[%s1 + $0x2d8] sm:$0xf]
        %v871 = vld [vmem:[%s1 + $0x2dc] sm:$0xf]
        %v872 = vld [vmem:[%s1 + $0x2e0] sm:$0xf]
        %v873 = vld [vmem:[%s1 + $0x2e4] sm:$0xf]
        %v874 = vld [vmem:[%s1 + $0x2e8] sm:$0xf]
        %v875 = vld [vmem:[%s1 + $0x2ec] sm:$0xf]
        %v876 = vld [vmem:[%s1 + $0x2f0] sm:$0xf]
        %v877 = vld [vmem:[%s1 + $0x2f4] sm:$0xf]
        %v878 = vld [vmem:[%s1 + $0x2f8] sm:$0xf]
        %v879 = vld [vmem:[%s1 + $0x2fc] sm:$0xf]
        %v880 = vld [vmem:[%s1 + $0x300] sm:$0xf]
        %v881 = vld [vmem:[%s1 + $0x304] sm:$0xf]
        %v882 = vld [vmem:[%s1 + $0x308] sm:$0xf]
        %v883 = vld [vmem:[%s1 + $0x30c] sm:$0xf]
        %v884 = vld [vmem:[%s1 + $0x310] sm:$0xf]
        %v885 = vld [vmem:[%s1 + $0x314] sm:$0xf]
        %v886 = vld [vmem:[%s1 + $0x318] sm:$0xf]
        %v887 = vld [vmem:[%s1 + $0x31c] sm:$0xf]
        %v888 = vld [vmem:[%s1 + $0x320] sm:$0xf]
        %v889 = vld [vmem:[%s1 + $0x324] sm:$0xf]
        %v890 = vld [vmem:[%s1 + $0x328] sm:$0xf]
        %v891 = vld [vmem:[%s1 + $0x32c] sm:$0xf]
        %v892 = vld [vmem:[%s1 + $0x330] sm:$0xf]
        %v893 = vld [vmem:[%s1 + $0x334] sm:$0xf]
        %v894 = vld [vmem:[%s1 + $0x338] sm:$0xf]
        %v895 = vld [vmem:[%s1 + $0x33c] sm:$0xf]
        %v896 = vld [vmem:[%s1 + $0x340] sm:$0xf]
        %v897 = vld [vmem:[%s1 + $0x344] sm:$0xf]
        %v898 = vld [vmem:[%s1 + $0x348] sm:$0xf]
        %v899 = vld [vmem:[%s1 + $0x34c] sm:$0xf]
        %v900 = vld [vmem:[%s1 + $0x350] sm:$0xf]
        %v901 = vld [vmem:[%s1 + $0x354] sm:$0xf]
        %v902 = vld [vmem:[%s1 + $0x358] sm:$0xf]
        %v903 = vld [vmem:[%s1 + $0x35c] sm:$0xf]
        %v904 = vld [vmem:[%s1 + $0x360] sm:$0xf]
        %v905 = vld [vmem:[%s1 + $0x364] sm:$0xf]
        %v906 = vld [vmem:[%s1 + $0x368] sm:$0xf]
        %v907 = vld [vmem:[%s1 + $0x36c] sm:$0xf]
        %v908 = vld [vmem:[%s1 + $0x370] sm:$0xf]
        %v909 = vld [vmem:[%s1 + $0x374] sm:$0xf]
        %v910 = vld [vmem:[%s1 + $0x378] sm:$0xf]
        %v911 = vld [vmem:[%s1 + $0x37c] sm:$0xf]
        %v912 = vld [vmem:[%s1 + $0x380] sm:$0xf]
        %v913 = vld [vmem:[%s1 + $0x384] sm:$0xf]
        %v914 = vld [vmem:[%s1 + $0x388] sm:$0xf]
        %v915 = vld [vmem:[%s1 + $0x38c] sm:$0xf]
        %v916 = vld [vmem:[%s1 + $0x390] sm:$0xf]
        %v917 = vld [vmem:[%s1 + $0x394] sm:$0xf]
        %v918 = vld [vmem:[%s1 + $0x398] sm:$0xf]
        %v919 = vld [vmem:[%s1 + $0x39c] sm:$0xf]
        %v920 = vld [vmem:[%s1 + $0x3a0] sm:$0xf]
        %v921 = vld [vmem:[%s1 + $0x3a4] sm:$0xf]
        %v922 = vld [vmem:[%s1 + $0x3a8] sm:$0xf]
        %v923 = vld [vmem:[%s1 + $0x3ac] sm:$0xf]
        %v924 = vld [vmem:[%s1 + $0x3b0] sm:$0xf]
        %v925 = vld [vmem:[%s1 + $0x3b4] sm:$0xf]
        %v926 = vld [vmem:[%s1 + $0x3b8] sm:$0xf]
        %v927 = vld [vmem:[%s1 + $0x3bc] sm:$0xf]
        %v928 = vld [vmem:[%s1 + $0x3c0] sm:$0xf]
        %v929 = vld [vmem:[%s1 + $0x3c4] sm:$0xf]
        %v930 = vld [vmem:[%s1 + $0x3c8] sm:$0xf]
        %v931 = vld [vmem:[%s1 + $0x3cc] sm:$0xf]
        %v932 = vld [vmem:[%s1 + $0x3d0] sm:$0xf]
        %v933 = vld [vmem:[%s1 + $0x3d4] sm:$0xf]
        %v934 = vld [vmem:[%s1 + $0x3d8] sm:$0xf]
        %v935 = vld [vmem:[%s1 + $0x3dc] sm:$0xf]
        %v936 = vld [vmem:[%s1 + $0x3e0] sm:$0xf]
        %v937 = vld [vmem:[%s1 + $0x3e4] sm:$0xf]
        %v938 = vld [vmem:[%s1 + $0x3e8] sm:$0xf]
        %v939 = vld [vmem:[%s1 + $0x3ec] sm:$0xf]
        %v940 = vld [vmem:[%s1 + $0x3f0] sm:$0xf]
        %v941 = vld [vmem:[%s1 + $0x3f4] sm:$0xf]
        %v942 = vld [vmem:[%s1 + $0x3f8] sm:$0xf]
        %v943 = vld [vmem:[%s1 + $0x3fc] sm:$0xf]
        %v944 = vld [vmem:[%s2] sm:$0x1]
        %v946 = vlaneseq
        %v947 = vshrl.u32 %v946, 7
        %v948 = vsub.s32 0, %v947
        %v949 = vrot.slane %v944, %v948
        %951 = vxpose.xlu0.c.b16.start [1/8] %v560, 128
        %952 = vxpose.xlu0.c.b16.cont [2/8] %v561, 128
        %953 = vxpose.xlu0.c.b16.cont [3/8] %v562, 128
        %954 = vxpose.xlu0.c.b16.cont [4/8] %v563, 128
        %955 = vxpose.xlu0.c.b16.cont [5/8] %v564, 128
        %956 = vxpose.xlu0.c.b16.cont [6/8] %v565, 128
        %957 = vxpose.xlu0.c.b16.cont [7/8] %v566, 128
        %958 = vxpose.xlu0.c.b16.end [8/8] %v567, 128
        %v959 = vpop.trf.xlu0
        %v960 = vpop.trf.xlu0
        %v961 = vpop.trf.xlu0
        %v962 = vpop.trf.xlu0
        %v963 = vpop.trf.xlu0
        %v964 = vpop.trf.xlu0
        %v965 = vpop.trf.xlu0
        %v966 = vpop.trf.xlu0
        %967 = vxpose.xlu0.c.b16.start [1/8] %v568, 128
        %968 = vxpose.xlu0.c.b16.cont [2/8] %v569, 128
        %969 = vxpose.xlu0.c.b16.cont [3/8] %v570, 128
        %970 = vxpose.xlu0.c.b16.cont [4/8] %v571, 128
        %971 = vxpose.xlu0.c.b16.cont [5/8] %v572, 128
        %972 = vxpose.xlu0.c.b16.cont [6/8] %v573, 128
        %973 = vxpose.xlu0.c.b16.cont [7/8] %v574, 128
        %974 = vxpose.xlu0.c.b16.end [8/8] %v575, 128
        %v975 = vpop.trf.xlu0
        %v976 = vpop.trf.xlu0
        %v977 = vpop.trf.xlu0
        %v978 = vpop.trf.xlu0
        %v979 = vpop.trf.xlu0
        %v980 = vpop.trf.xlu0
        %v981 = vpop.trf.xlu0
        %v982 = vpop.trf.xlu0
        %983 = vxpose.xlu0.c.b16.start [1/8] %v576, 128
        %984 = vxpose.xlu0.c.b16.cont [2/8] %v577, 128
        %985 = vxpose.xlu0.c.b16.cont [3/8] %v578, 128
        %986 = vxpose.xlu0.c.b16.cont [4/8] %v579, 128
        %987 = vxpose.xlu0.c.b16.cont [5/8] %v580, 128
        %988 = vxpose.xlu0.c.b16.cont [6/8] %v581, 128
        %989 = vxpose.xlu0.c.b16.cont [7/8] %v582, 128
        %990 = vxpose.xlu0.c.b16.end [8/8] %v583, 128
        %v991 = vpop.trf.xlu0
        %v992 = vpop.trf.xlu0
        %v993 = vpop.trf.xlu0
        %v994 = vpop.trf.xlu0
        %v995 = vpop.trf.xlu0
        %v996 = vpop.trf.xlu0
        %v997 = vpop.trf.xlu0
        %v998 = vpop.trf.xlu0
        %999 = vxpose.xlu0.c.b16.start [1/8] %v584, 128
        %1000 = vxpose.xlu0.c.b16.cont [2/8] %v585, 128
        %1001 = vxpose.xlu0.c.b16.cont [3/8] %v586, 128
        %1002 = vxpose.xlu0.c.b16.cont [4/8] %v587, 128
        %1003 = vxpose.xlu0.c.b16.cont [5/8] %v588, 128
        %1004 = vxpose.xlu0.c.b16.cont [6/8] %v589, 128
        %1005 = vxpose.xlu0.c.b16.cont [7/8] %v590, 128
        %1006 = vxpose.xlu0.c.b16.end [8/8] %v591, 128
        %v1007 = vpop.trf.xlu0
        %v1008 = vpop.trf.xlu0
        %v1009 = vpop.trf.xlu0
        %v1010 = vpop.trf.xlu0
        %v1011 = vpop.trf.xlu0
        %v1012 = vpop.trf.xlu0
        %v1013 = vpop.trf.xlu0
        %v1014 = vpop.trf.xlu0
        %1015 = vxpose.xlu0.c.b16.start [1/8] %v592, 128
        %1016 = vxpose.xlu0.c.b16.cont [2/8] %v593, 128
        %1017 = vxpose.xlu0.c.b16.cont [3/8] %v594, 128
        %1018 = vxpose.xlu0.c.b16.cont [4/8] %v595, 128
        %1019 = vxpose.xlu0.c.b16.cont [5/8] %v596, 128
        %1020 = vxpose.xlu0.c.b16.cont [6/8] %v597, 128
        %1021 = vxpose.xlu0.c.b16.cont [7/8] %v598, 128
        %1022 = vxpose.xlu0.c.b16.end [8/8] %v599, 128
        %v1023 = vpop.trf.xlu0
        %v1024 = vpop.trf.xlu0
        %v1025 = vpop.trf.xlu0
        %v1026 = vpop.trf.xlu0
        %v1027 = vpop.trf.xlu0
        %v1028 = vpop.trf.xlu0
        %v1029 = vpop.trf.xlu0
        %v1030 = vpop.trf.xlu0
        %1031 = vxpose.xlu0.c.b16.start [1/8] %v600, 128
        %1032 = vxpose.xlu0.c.b16.cont [2/8] %v601, 128
        %1033 = vxpose.xlu0.c.b16.cont [3/8] %v602, 128
        %1034 = vxpose.xlu0.c.b16.cont [4/8] %v603, 128
        %1035 = vxpose.xlu0.c.b16.cont [5/8] %v604, 128
        %1036 = vxpose.xlu0.c.b16.cont [6/8] %v605, 128
        %1037 = vxpose.xlu0.c.b16.cont [7/8] %v606, 128
        %1038 = vxpose.xlu0.c.b16.end [8/8] %v607, 128
        %v1039 = vpop.trf.xlu0
        %v1040 = vpop.trf.xlu0
        %v1041 = vpop.trf.xlu0
        %v1042 = vpop.trf.xlu0
        %v1043 = vpop.trf.xlu0
        %v1044 = vpop.trf.xlu0
        %v1045 = vpop.trf.xlu0
        %v1046 = vpop.trf.xlu0
        %1047 = vxpose.xlu0.c.b16.start [1/8] %v608, 128
        %1048 = vxpose.xlu0.c.b16.cont [2/8] %v609, 128
        %1049 = vxpose.xlu0.c.b16.cont [3/8] %v610, 128
        %1050 = vxpose.xlu0.c.b16.cont [4/8] %v611, 128
        %1051 = vxpose.xlu0.c.b16.cont [5/8] %v612, 128
        %1052 = vxpose.xlu0.c.b16.cont [6/8] %v613, 128
        %1053 = vxpose.xlu0.c.b16.cont [7/8] %v614, 128
        %1054 = vxpose.xlu0.c.b16.end [8/8] %v615, 128
        %v1055 = vpop.trf.xlu0
        %v1056 = vpop.trf.xlu0
        %v1057 = vpop.trf.xlu0
        %v1058 = vpop.trf.xlu0
        %v1059 = vpop.trf.xlu0
        %v1060 = vpop.trf.xlu0
        %v1061 = vpop.trf.xlu0
        %v1062 = vpop.trf.xlu0
        %1063 = vxpose.xlu0.c.b16.start [1/8] %v616, 128
        %1064 = vxpose.xlu0.c.b16.cont [2/8] %v617, 128
        %1065 = vxpose.xlu0.c.b16.cont [3/8] %v618, 128
        %1066 = vxpose.xlu0.c.b16.cont [4/8] %v619, 128
        %1067 = vxpose.xlu0.c.b16.cont [5/8] %v620, 128
        %1068 = vxpose.xlu0.c.b16.cont [6/8] %v621, 128
        %1069 = vxpose.xlu0.c.b16.cont [7/8] %v622, 128
        %1070 = vxpose.xlu0.c.b16.end [8/8] %v623, 128
        %v1071 = vpop.trf.xlu0
        %v1072 = vpop.trf.xlu0
        %v1073 = vpop.trf.xlu0
        %v1074 = vpop.trf.xlu0
        %v1075 = vpop.trf.xlu0
        %v1076 = vpop.trf.xlu0
        %v1077 = vpop.trf.xlu0
        %v1078 = vpop.trf.xlu0
        %1079 = vxpose.xlu0.c.b16.start [1/8] %v624, 128
        %1080 = vxpose.xlu0.c.b16.cont [2/8] %v625, 128
        %1081 = vxpose.xlu0.c.b16.cont [3/8] %v626, 128
        %1082 = vxpose.xlu0.c.b16.cont [4/8] %v627, 128
        %1083 = vxpose.xlu0.c.b16.cont [5/8] %v628, 128
        %1084 = vxpose.xlu0.c.b16.cont [6/8] %v629, 128
        %1085 = vxpose.xlu0.c.b16.cont [7/8] %v630, 128
        %1086 = vxpose.xlu0.c.b16.end [8/8] %v631, 128
        %v1087 = vpop.trf.xlu0
        %v1088 = vpop.trf.xlu0
        %v1089 = vpop.trf.xlu0
        %v1090 = vpop.trf.xlu0
        %v1091 = vpop.trf.xlu0
        %v1092 = vpop.trf.xlu0
        %v1093 = vpop.trf.xlu0
        %v1094 = vpop.trf.xlu0
        %1095 = vxpose.xlu0.c.b16.start [1/8] %v632, 128
        %1096 = vxpose.xlu0.c.b16.cont [2/8] %v633, 128
        %1097 = vxpose.xlu0.c.b16.cont [3/8] %v634, 128
        %1098 = vxpose.xlu0.c.b16.cont [4/8] %v635, 128
        %1099 = vxpose.xlu0.c.b16.cont [5/8] %v636, 128
        %1100 = vxpose.xlu0.c.b16.cont [6/8] %v637, 128
        %1101 = vxpose.xlu0.c.b16.cont [7/8] %v638, 128
        %1102 = vxpose.xlu0.c.b16.end [8/8] %v639, 128
        %v1103 = vpop.trf.xlu0
        %v1104 = vpop.trf.xlu0
        %v1105 = vpop.trf.xlu0
        %v1106 = vpop.trf.xlu0
        %v1107 = vpop.trf.xlu0
        %v1108 = vpop.trf.xlu0
        %v1109 = vpop.trf.xlu0
        %v1110 = vpop.trf.xlu0
        %1111 = vxpose.xlu0.c.b16.start [1/8] %v640, 128
        %1112 = vxpose.xlu0.c.b16.cont [2/8] %v641, 128
        %1113 = vxpose.xlu0.c.b16.cont [3/8] %v642, 128
        %1114 = vxpose.xlu0.c.b16.cont [4/8] %v643, 128
        %1115 = vxpose.xlu0.c.b16.cont [5/8] %v644, 128
        %1116 = vxpose.xlu0.c.b16.cont [6/8] %v645, 128
        %1117 = vxpose.xlu0.c.b16.cont [7/8] %v646, 128
        %1118 = vxpose.xlu0.c.b16.end [8/8] %v647, 128
        %v1119 = vpop.trf.xlu0
        %v1120 = vpop.trf.xlu0
        %v1121 = vpop.trf.xlu0
        %v1122 = vpop.trf.xlu0
        %v1123 = vpop.trf.xlu0
        %v1124 = vpop.trf.xlu0
        %v1125 = vpop.trf.xlu0
        %v1126 = vpop.trf.xlu0
        %1127 = vxpose.xlu0.c.b16.start [1/8] %v648, 128
        %1128 = vxpose.xlu0.c.b16.cont [2/8] %v649, 128
        %1129 = vxpose.xlu0.c.b16.cont [3/8] %v650, 128
        %1130 = vxpose.xlu0.c.b16.cont [4/8] %v651, 128
        %1131 = vxpose.xlu0.c.b16.cont [5/8] %v652, 128
        %1132 = vxpose.xlu0.c.b16.cont [6/8] %v653, 128
        %1133 = vxpose.xlu0.c.b16.cont [7/8] %v654, 128
        %1134 = vxpose.xlu0.c.b16.end [8/8] %v655, 128
        %v1135 = vpop.trf.xlu0
        %v1136 = vpop.trf.xlu0
        %v1137 = vpop.trf.xlu0
        %v1138 = vpop.trf.xlu0
        %v1139 = vpop.trf.xlu0
        %v1140 = vpop.trf.xlu0
        %v1141 = vpop.trf.xlu0
        %v1142 = vpop.trf.xlu0
        %1143 = vxpose.xlu0.c.b16.start [1/8] %v656, 128
        %1144 = vxpose.xlu0.c.b16.cont [2/8] %v657, 128
        %1145 = vxpose.xlu0.c.b16.cont [3/8] %v658, 128
        %1146 = vxpose.xlu0.c.b16.cont [4/8] %v659, 128
        %1147 = vxpose.xlu0.c.b16.cont [5/8] %v660, 128
        %1148 = vxpose.xlu0.c.b16.cont [6/8] %v661, 128
        %1149 = vxpose.xlu0.c.b16.cont [7/8] %v662, 128
        %1150 = vxpose.xlu0.c.b16.end [8/8] %v663, 128
        %v1151 = vpop.trf.xlu0
        %v1152 = vpop.trf.xlu0
        %v1153 = vpop.trf.xlu0
        %v1154 = vpop.trf.xlu0
        %v1155 = vpop.trf.xlu0
        %v1156 = vpop.trf.xlu0
        %v1157 = vpop.trf.xlu0
        %v1158 = vpop.trf.xlu0
        %1159 = vxpose.xlu0.c.b16.start [1/8] %v664, 128
        %1160 = vxpose.xlu0.c.b16.cont [2/8] %v665, 128
        %1161 = vxpose.xlu0.c.b16.cont [3/8] %v666, 128
        %1162 = vxpose.xlu0.c.b16.cont [4/8] %v667, 128
        %1163 = vxpose.xlu0.c.b16.cont [5/8] %v668, 128
        %1164 = vxpose.xlu0.c.b16.cont [6/8] %v669, 128
        %1165 = vxpose.xlu0.c.b16.cont [7/8] %v670, 128
        %1166 = vxpose.xlu0.c.b16.end [8/8] %v671, 128
        %v1167 = vpop.trf.xlu0
        %v1168 = vpop.trf.xlu0
        %v1169 = vpop.trf.xlu0
        %v1170 = vpop.trf.xlu0
        %v1171 = vpop.trf.xlu0
        %v1172 = vpop.trf.xlu0
        %v1173 = vpop.trf.xlu0
        %v1174 = vpop.trf.xlu0
        %1175 = vxpose.xlu0.c.b16.start [1/8] %v672, 128
        %1176 = vxpose.xlu0.c.b16.cont [2/8] %v673, 128
        %1177 = vxpose.xlu0.c.b16.cont [3/8] %v674, 128
        %1178 = vxpose.xlu0.c.b16.cont [4/8] %v675, 128
        %1179 = vxpose.xlu0.c.b16.cont [5/8] %v676, 128
        %1180 = vxpose.xlu0.c.b16.cont [6/8] %v677, 128
        %1181 = vxpose.xlu0.c.b16.cont [7/8] %v678, 128
        %1182 = vxpose.xlu0.c.b16.end [8/8] %v679, 128
        %v1183 = vpop.trf.xlu0
        %v1184 = vpop.trf.xlu0
        %v1185 = vpop.trf.xlu0
        %v1186 = vpop.trf.xlu0
        %v1187 = vpop.trf.xlu0
        %v1188 = vpop.trf.xlu0
        %v1189 = vpop.trf.xlu0
        %v1190 = vpop.trf.xlu0
        %1191 = vxpose.xlu0.c.b16.start [1/8] %v680, 128
        %1192 = vxpose.xlu0.c.b16.cont [2/8] %v681, 128
        %1193 = vxpose.xlu0.c.b16.cont [3/8] %v682, 128
        %1194 = vxpose.xlu0.c.b16.cont [4/8] %v683, 128
        %1195 = vxpose.xlu0.c.b16.cont [5/8] %v684, 128
        %1196 = vxpose.xlu0.c.b16.cont [6/8] %v685, 128
        %1197 = vxpose.xlu0.c.b16.cont [7/8] %v686, 128
        %1198 = vxpose.xlu0.c.b16.end [8/8] %v687, 128
        %v1199 = vpop.trf.xlu0
        %v1200 = vpop.trf.xlu0
        %v1201 = vpop.trf.xlu0
        %v1202 = vpop.trf.xlu0
        %v1203 = vpop.trf.xlu0
        %v1204 = vpop.trf.xlu0
        %v1205 = vpop.trf.xlu0
        %v1206 = vpop.trf.xlu0
        %v1463 = vunpack.c.l.b16 %v688
        %v1464 = vunpack.c.l.b16 %v689
        %v1465 = vunpack.c.l.b16 %v690
        %v1466 = vunpack.c.l.b16 %v691
        %v1467 = vunpack.c.l.b16 %v692
        %v1468 = vunpack.c.l.b16 %v693
        %v1469 = vunpack.c.l.b16 %v694
        %v1470 = vunpack.c.l.b16 %v695
        %v1471 = vunpack.c.l.b16 %v696
        %v1472 = vunpack.c.l.b16 %v697
        %v1473 = vunpack.c.l.b16 %v698
        %v1474 = vunpack.c.l.b16 %v699
        %v1475 = vunpack.c.l.b16 %v700
        %v1476 = vunpack.c.l.b16 %v701
        %v1477 = vunpack.c.l.b16 %v702
        %v1478 = vunpack.c.l.b16 %v703
        %v1479 = vunpack.c.l.b16 %v704
        %v1480 = vunpack.c.l.b16 %v705
        %v1481 = vunpack.c.l.b16 %v706
        %v1482 = vunpack.c.l.b16 %v707
        %v1483 = vunpack.c.l.b16 %v708
        %v1484 = vunpack.c.l.b16 %v709
        %v1485 = vunpack.c.l.b16 %v710
        %v1486 = vunpack.c.l.b16 %v711
        %v1487 = vunpack.c.l.b16 %v712
        %v1488 = vunpack.c.l.b16 %v713
        %v1489 = vunpack.c.l.b16 %v714
        %v1490 = vunpack.c.l.b16 %v715
        %v1491 = vunpack.c.l.b16 %v716
        %v1492 = vunpack.c.l.b16 %v717
        %v1493 = vunpack.c.l.b16 %v718
        %v1494 = vunpack.c.l.b16 %v719
        %v1495 = vunpack.c.l.b16 %v720
        %v1496 = vunpack.c.l.b16 %v721
        %v1497 = vunpack.c.l.b16 %v722
        %v1498 = vunpack.c.l.b16 %v723
        %v1499 = vunpack.c.l.b16 %v724
        %v1500 = vunpack.c.l.b16 %v725
        %v1501 = vunpack.c.l.b16 %v726
        %v1502 = vunpack.c.l.b16 %v727
        %v1503 = vunpack.c.l.b16 %v728
        %v1504 = vunpack.c.l.b16 %v729
        %v1505 = vunpack.c.l.b16 %v730
        %v1506 = vunpack.c.l.b16 %v731
        %v1507 = vunpack.c.l.b16 %v732
        %v1508 = vunpack.c.l.b16 %v733
        %v1509 = vunpack.c.l.b16 %v734
        %v1510 = vunpack.c.l.b16 %v735
        %v1511 = vunpack.c.l.b16 %v736
        %v1512 = vunpack.c.l.b16 %v737
        %v1513 = vunpack.c.l.b16 %v738
        %v1514 = vunpack.c.l.b16 %v739
        %v1515 = vunpack.c.l.b16 %v740
        %v1516 = vunpack.c.l.b16 %v741
        %v1517 = vunpack.c.l.b16 %v742
        %v1518 = vunpack.c.l.b16 %v743
        %v1519 = vunpack.c.l.b16 %v744
        %v1520 = vunpack.c.l.b16 %v745
        %v1521 = vunpack.c.l.b16 %v746
        %v1522 = vunpack.c.l.b16 %v747
        %v1523 = vunpack.c.l.b16 %v748
        %v1524 = vunpack.c.l.b16 %v749
        %v1525 = vunpack.c.l.b16 %v750
        %v1526 = vunpack.c.l.b16 %v751
        %v1527 = vunpack.c.l.b16 %v752
        %v1528 = vunpack.c.l.b16 %v753
        %v1529 = vunpack.c.l.b16 %v754
        %v1530 = vunpack.c.l.b16 %v755
        %v1531 = vunpack.c.l.b16 %v756
        %v1532 = vunpack.c.l.b16 %v757
        %v1533 = vunpack.c.l.b16 %v758
        %v1534 = vunpack.c.l.b16 %v759
        %v1535 = vunpack.c.l.b16 %v760
        %v1536 = vunpack.c.l.b16 %v761
        %v1537 = vunpack.c.l.b16 %v762
        %v1538 = vunpack.c.l.b16 %v763
        %v1539 = vunpack.c.l.b16 %v764
        %v1540 = vunpack.c.l.b16 %v765
        %v1541 = vunpack.c.l.b16 %v766
        %v1542 = vunpack.c.l.b16 %v767
        %v1543 = vunpack.c.l.b16 %v768
        %v1544 = vunpack.c.l.b16 %v769
        %v1545 = vunpack.c.l.b16 %v770
        %v1546 = vunpack.c.l.b16 %v771
        %v1547 = vunpack.c.l.b16 %v772
        %v1548 = vunpack.c.l.b16 %v773
        %v1549 = vunpack.c.l.b16 %v774
        %v1550 = vunpack.c.l.b16 %v775
        %v1551 = vunpack.c.l.b16 %v776
        %v1552 = vunpack.c.l.b16 %v777
        %v1553 = vunpack.c.l.b16 %v778
        %v1554 = vunpack.c.l.b16 %v779
        %v1555 = vunpack.c.l.b16 %v780
        %v1556 = vunpack.c.l.b16 %v781
        %v1557 = vunpack.c.l.b16 %v782
        %v1558 = vunpack.c.l.b16 %v783
        %v1559 = vunpack.c.l.b16 %v784
        %v1560 = vunpack.c.l.b16 %v785
        %v1561 = vunpack.c.l.b16 %v786
        %v1562 = vunpack.c.l.b16 %v787
        %v1563 = vunpack.c.l.b16 %v788
        %v1564 = vunpack.c.l.b16 %v789
        %v1565 = vunpack.c.l.b16 %v790
        %v1566 = vunpack.c.l.b16 %v791
        %v1567 = vunpack.c.l.b16 %v792
        %v1568 = vunpack.c.l.b16 %v793
        %v1569 = vunpack.c.l.b16 %v794
        %v1570 = vunpack.c.l.b16 %v795
        %v1571 = vunpack.c.l.b16 %v796
        %v1572 = vunpack.c.l.b16 %v797
        %v1573 = vunpack.c.l.b16 %v798
        %v1574 = vunpack.c.l.b16 %v799
        %v1575 = vunpack.c.l.b16 %v800
        %v1576 = vunpack.c.l.b16 %v801
        %v1577 = vunpack.c.l.b16 %v802
        %v1578 = vunpack.c.l.b16 %v803
        %v1579 = vunpack.c.l.b16 %v804
        %v1580 = vunpack.c.l.b16 %v805
        %v1581 = vunpack.c.l.b16 %v806
        %v1582 = vunpack.c.l.b16 %v807
        %v1583 = vunpack.c.l.b16 %v808
        %v1584 = vunpack.c.l.b16 %v809
        %v1585 = vunpack.c.l.b16 %v810
        %v1586 = vunpack.c.l.b16 %v811
        %v1587 = vunpack.c.l.b16 %v812
        %v1588 = vunpack.c.l.b16 %v813
        %v1589 = vunpack.c.l.b16 %v814
        %v1590 = vunpack.c.l.b16 %v815
        %v1591 = vunpack.c.l.b16 %v816
        %v1592 = vunpack.c.l.b16 %v817
        %v1593 = vunpack.c.l.b16 %v818
        %v1594 = vunpack.c.l.b16 %v819
        %v1595 = vunpack.c.l.b16 %v820
        %v1596 = vunpack.c.l.b16 %v821
        %v1597 = vunpack.c.l.b16 %v822
        %v1598 = vunpack.c.l.b16 %v823
        %v1599 = vunpack.c.l.b16 %v824
        %v1600 = vunpack.c.l.b16 %v825
        %v1601 = vunpack.c.l.b16 %v826
        %v1602 = vunpack.c.l.b16 %v827
        %v1603 = vunpack.c.l.b16 %v828
        %v1604 = vunpack.c.l.b16 %v829
        %v1605 = vunpack.c.l.b16 %v830
        %v1606 = vunpack.c.l.b16 %v831
        %v1607 = vunpack.c.l.b16 %v832
        %v1608 = vunpack.c.l.b16 %v833
        %v1609 = vunpack.c.l.b16 %v834
        %v1610 = vunpack.c.l.b16 %v835
        %v1611 = vunpack.c.l.b16 %v836
        %v1612 = vunpack.c.l.b16 %v837
        %v1613 = vunpack.c.l.b16 %v838
        %v1614 = vunpack.c.l.b16 %v839
        %v1615 = vunpack.c.l.b16 %v840
        %v1616 = vunpack.c.l.b16 %v841
        %v1617 = vunpack.c.l.b16 %v842
        %v1618 = vunpack.c.l.b16 %v843
        %v1619 = vunpack.c.l.b16 %v844
        %v1620 = vunpack.c.l.b16 %v845
        %v1621 = vunpack.c.l.b16 %v846
        %v1622 = vunpack.c.l.b16 %v847
        %v1623 = vunpack.c.l.b16 %v848
        %v1624 = vunpack.c.l.b16 %v849
        %v1625 = vunpack.c.l.b16 %v850
        %v1626 = vunpack.c.l.b16 %v851
        %v1627 = vunpack.c.l.b16 %v852
        %v1628 = vunpack.c.l.b16 %v853
        %v1629 = vunpack.c.l.b16 %v854
        %v1630 = vunpack.c.l.b16 %v855
        %v1631 = vunpack.c.l.b16 %v856
        %v1632 = vunpack.c.l.b16 %v857
        %v1633 = vunpack.c.l.b16 %v858
        %v1634 = vunpack.c.l.b16 %v859
        %v1635 = vunpack.c.l.b16 %v860
        %v1636 = vunpack.c.l.b16 %v861
        %v1637 = vunpack.c.l.b16 %v862
        %v1638 = vunpack.c.l.b16 %v863
        %v1639 = vunpack.c.l.b16 %v864
        %v1640 = vunpack.c.l.b16 %v865
        %v1641 = vunpack.c.l.b16 %v866
        %v1642 = vunpack.c.l.b16 %v867
        %v1643 = vunpack.c.l.b16 %v868
        %v1644 = vunpack.c.l.b16 %v869
        %v1645 = vunpack.c.l.b16 %v870
        %v1646 = vunpack.c.l.b16 %v871
        %v1647 = vunpack.c.l.b16 %v872
        %v1648 = vunpack.c.l.b16 %v873
        %v1649 = vunpack.c.l.b16 %v874
        %v1650 = vunpack.c.l.b16 %v875
        %v1651 = vunpack.c.l.b16 %v876
        %v1652 = vunpack.c.l.b16 %v877
        %v1653 = vunpack.c.l.b16 %v878
        %v1654 = vunpack.c.l.b16 %v879
        %v1655 = vunpack.c.l.b16 %v880
        %v1656 = vunpack.c.l.b16 %v881
        %v1657 = vunpack.c.l.b16 %v882
        %v1658 = vunpack.c.l.b16 %v883
        %v1659 = vunpack.c.l.b16 %v884
        %v1660 = vunpack.c.l.b16 %v885
        %v1661 = vunpack.c.l.b16 %v886
        %v1662 = vunpack.c.l.b16 %v887
        %v1663 = vunpack.c.l.b16 %v888
        %v1664 = vunpack.c.l.b16 %v889
        %v1665 = vunpack.c.l.b16 %v890
        %v1666 = vunpack.c.l.b16 %v891
        %v1667 = vunpack.c.l.b16 %v892
        %v1668 = vunpack.c.l.b16 %v893
        %v1669 = vunpack.c.l.b16 %v894
        %v1670 = vunpack.c.l.b16 %v895
        %v1671 = vunpack.c.l.b16 %v896
        %v1672 = vunpack.c.l.b16 %v897
        %v1673 = vunpack.c.l.b16 %v898
        %v1674 = vunpack.c.l.b16 %v899
        %v1675 = vunpack.c.l.b16 %v900
        %v1676 = vunpack.c.l.b16 %v901
        %v1677 = vunpack.c.l.b16 %v902
        %v1678 = vunpack.c.l.b16 %v903
        %v1679 = vunpack.c.l.b16 %v904
        %v1680 = vunpack.c.l.b16 %v905
        %v1681 = vunpack.c.l.b16 %v906
        %v1682 = vunpack.c.l.b16 %v907
        %v1683 = vunpack.c.l.b16 %v908
        %v1684 = vunpack.c.l.b16 %v909
        %v1685 = vunpack.c.l.b16 %v910
        %v1686 = vunpack.c.l.b16 %v911
        %v1687 = vunpack.c.l.b16 %v912
        %v1688 = vunpack.c.l.b16 %v913
        %v1689 = vunpack.c.l.b16 %v914
        %v1690 = vunpack.c.l.b16 %v915
        %v1691 = vunpack.c.l.b16 %v916
        %v1692 = vunpack.c.l.b16 %v917
        %v1693 = vunpack.c.l.b16 %v918
        %v1694 = vunpack.c.l.b16 %v919
        %v1695 = vunpack.c.l.b16 %v920
        %v1696 = vunpack.c.l.b16 %v921
        %v1697 = vunpack.c.l.b16 %v922
        %v1698 = vunpack.c.l.b16 %v923
        %v1699 = vunpack.c.l.b16 %v924
        %v1700 = vunpack.c.l.b16 %v925
        %v1701 = vunpack.c.l.b16 %v926
        %v1702 = vunpack.c.l.b16 %v927
        %v1703 = vunpack.c.l.b16 %v928
        %v1704 = vunpack.c.l.b16 %v929
        %v1705 = vunpack.c.l.b16 %v930
        %v1706 = vunpack.c.l.b16 %v931
        %v1707 = vunpack.c.l.b16 %v932
        %v1708 = vunpack.c.l.b16 %v933
        %v1709 = vunpack.c.l.b16 %v934
        %v1710 = vunpack.c.l.b16 %v935
        %v1711 = vunpack.c.l.b16 %v936
        %v1712 = vunpack.c.l.b16 %v937
        %v1713 = vunpack.c.l.b16 %v938
        %v1714 = vunpack.c.l.b16 %v939
        %v1715 = vunpack.c.l.b16 %v940
        %v1716 = vunpack.c.l.b16 %v941
        %v1717 = vunpack.c.l.b16 %v942
        %v1718 = vunpack.c.l.b16 %v943
        %v1719 = vpack.c.b16 %v1464, %v1463
        %v1720 = vpack.c.b16 %v1466, %v1465
        %v1721 = vpack.c.b16 %v1468, %v1467
        %v1722 = vpack.c.b16 %v1470, %v1469
        %v1723 = vpack.c.b16 %v1472, %v1471
        %v1724 = vpack.c.b16 %v1474, %v1473
        %v1725 = vpack.c.b16 %v1476, %v1475
        %v1726 = vpack.c.b16 %v1478, %v1477
        %v1727 = vpack.c.b16 %v1480, %v1479
        %v1728 = vpack.c.b16 %v1482, %v1481
        %v1729 = vpack.c.b16 %v1484, %v1483
        %v1730 = vpack.c.b16 %v1486, %v1485
        %v1731 = vpack.c.b16 %v1488, %v1487
        %v1732 = vpack.c.b16 %v1490, %v1489
        %v1733 = vpack.c.b16 %v1492, %v1491
        %v1734 = vpack.c.b16 %v1494, %v1493
        %v1735 = vpack.c.b16 %v1496, %v1495
        %v1736 = vpack.c.b16 %v1498, %v1497
        %v1737 = vpack.c.b16 %v1500, %v1499
        %v1738 = vpack.c.b16 %v1502, %v1501
        %v1739 = vpack.c.b16 %v1504, %v1503
        %v1740 = vpack.c.b16 %v1506, %v1505
        %v1741 = vpack.c.b16 %v1508, %v1507
        %v1742 = vpack.c.b16 %v1510, %v1509
        %v1743 = vpack.c.b16 %v1512, %v1511
        %v1744 = vpack.c.b16 %v1514, %v1513
        %v1745 = vpack.c.b16 %v1516, %v1515
        %v1746 = vpack.c.b16 %v1518, %v1517
        %v1747 = vpack.c.b16 %v1520, %v1519
        %v1748 = vpack.c.b16 %v1522, %v1521
        %v1749 = vpack.c.b16 %v1524, %v1523
        %v1750 = vpack.c.b16 %v1526, %v1525
        %v1751 = vpack.c.b16 %v1528, %v1527
        %v1752 = vpack.c.b16 %v1530, %v1529
        %v1753 = vpack.c.b16 %v1532, %v1531
        %v1754 = vpack.c.b16 %v1534, %v1533
        %v1755 = vpack.c.b16 %v1536, %v1535
        %v1756 = vpack.c.b16 %v1538, %v1537
        %v1757 = vpack.c.b16 %v1540, %v1539
        %v1758 = vpack.c.b16 %v1542, %v1541
        %v1759 = vpack.c.b16 %v1544, %v1543
        %v1760 = vpack.c.b16 %v1546, %v1545
        %v1761 = vpack.c.b16 %v1548, %v1547
        %v1762 = vpack.c.b16 %v1550, %v1549
        %v1763 = vpack.c.b16 %v1552, %v1551
        %v1764 = vpack.c.b16 %v1554, %v1553
        %v1765 = vpack.c.b16 %v1556, %v1555
        %v1766 = vpack.c.b16 %v1558, %v1557
        %v1767 = vpack.c.b16 %v1560, %v1559
        %v1768 = vpack.c.b16 %v1562, %v1561
        %v1769 = vpack.c.b16 %v1564, %v1563
        %v1770 = vpack.c.b16 %v1566, %v1565
        %v1771 = vpack.c.b16 %v1568, %v1567
        %v1772 = vpack.c.b16 %v1570, %v1569
        %v1773 = vpack.c.b16 %v1572, %v1571
        %v1774 = vpack.c.b16 %v1574, %v1573
        %v1775 = vpack.c.b16 %v1576, %v1575
        %v1776 = vpack.c.b16 %v1578, %v1577
        %v1777 = vpack.c.b16 %v1580, %v1579
        %v1778 = vpack.c.b16 %v1582, %v1581
        %v1779 = vpack.c.b16 %v1584, %v1583
        %v1780 = vpack.c.b16 %v1586, %v1585
        %v1781 = vpack.c.b16 %v1588, %v1587
        %v1782 = vpack.c.b16 %v1590, %v1589
        %v1783 = vpack.c.b16 %v1592, %v1591
        %v1784 = vpack.c.b16 %v1594, %v1593
        %v1785 = vpack.c.b16 %v1596, %v1595
        %v1786 = vpack.c.b16 %v1598, %v1597
        %v1787 = vpack.c.b16 %v1600, %v1599
        %v1788 = vpack.c.b16 %v1602, %v1601
        %v1789 = vpack.c.b16 %v1604, %v1603
        %v1790 = vpack.c.b16 %v1606, %v1605
        %v1791 = vpack.c.b16 %v1608, %v1607
        %v1792 = vpack.c.b16 %v1610, %v1609
        %v1793 = vpack.c.b16 %v1612, %v1611
        %v1794 = vpack.c.b16 %v1614, %v1613
        %v1795 = vpack.c.b16 %v1616, %v1615
        %v1796 = vpack.c.b16 %v1618, %v1617
        %v1797 = vpack.c.b16 %v1620, %v1619
        %v1798 = vpack.c.b16 %v1622, %v1621
        %v1799 = vpack.c.b16 %v1624, %v1623
        %v1800 = vpack.c.b16 %v1626, %v1625
        %v1801 = vpack.c.b16 %v1628, %v1627
        %v1802 = vpack.c.b16 %v1630, %v1629
        %v1803 = vpack.c.b16 %v1632, %v1631
        %v1804 = vpack.c.b16 %v1634, %v1633
        %v1805 = vpack.c.b16 %v1636, %v1635
        %v1806 = vpack.c.b16 %v1638, %v1637
        %v1807 = vpack.c.b16 %v1640, %v1639
        %v1808 = vpack.c.b16 %v1642, %v1641
        %v1809 = vpack.c.b16 %v1644, %v1643
        %v1810 = vpack.c.b16 %v1646, %v1645
        %v1811 = vpack.c.b16 %v1648, %v1647
        %v1812 = vpack.c.b16 %v1650, %v1649
        %v1813 = vpack.c.b16 %v1652, %v1651
        %v1814 = vpack.c.b16 %v1654, %v1653
        %v1815 = vpack.c.b16 %v1656, %v1655
        %v1816 = vpack.c.b16 %v1658, %v1657
        %v1817 = vpack.c.b16 %v1660, %v1659
        %v1818 = vpack.c.b16 %v1662, %v1661
        %v1819 = vpack.c.b16 %v1664, %v1663
        %v1820 = vpack.c.b16 %v1666, %v1665
        %v1821 = vpack.c.b16 %v1668, %v1667
        %v1822 = vpack.c.b16 %v1670, %v1669
        %v1823 = vpack.c.b16 %v1672, %v1671
        %v1824 = vpack.c.b16 %v1674, %v1673
        %v1825 = vpack.c.b16 %v1676, %v1675
        %v1826 = vpack.c.b16 %v1678, %v1677
        %v1827 = vpack.c.b16 %v1680, %v1679
        %v1828 = vpack.c.b16 %v1682, %v1681
        %v1829 = vpack.c.b16 %v1684, %v1683
        %v1830 = vpack.c.b16 %v1686, %v1685
        %v1831 = vpack.c.b16 %v1688, %v1687
        %v1832 = vpack.c.b16 %v1690, %v1689
        %v1833 = vpack.c.b16 %v1692, %v1691
        %v1834 = vpack.c.b16 %v1694, %v1693
        %v1835 = vpack.c.b16 %v1696, %v1695
        %v1836 = vpack.c.b16 %v1698, %v1697
        %v1837 = vpack.c.b16 %v1700, %v1699
        %v1838 = vpack.c.b16 %v1702, %v1701
        %v1839 = vpack.c.b16 %v1704, %v1703
        %v1840 = vpack.c.b16 %v1706, %v1705
        %v1841 = vpack.c.b16 %v1708, %v1707
        %v1842 = vpack.c.b16 %v1710, %v1709
        %v1843 = vpack.c.b16 %v1712, %v1711
        %v1844 = vpack.c.b16 %v1714, %v1713
        %v1845 = vpack.c.b16 %v1716, %v1715
        %v1846 = vpack.c.b16 %v1718, %v1717
        %1975 = vmatprep.subr.bf16.mxu0 0
        %1976 = vmatpush1.bf16.msra.mxu0 %v1719
        %1977 = vmatprep.subr.bf16.mxu0 0
        %1978 = vmatpush1.bf16.msra.mxu0 %v1720
        %1979 = vmatprep.subr.bf16.mxu0 0
        %1980 = vmatpush1.bf16.msra.mxu0 %v1721
        %1981 = vmatprep.subr.bf16.mxu0 0
        %1982 = vmatpush1.bf16.msra.mxu0 %v1722
        %1983 = vmatprep.subr.bf16.mxu0 0
        %1984 = vmatpush1.bf16.msra.mxu0 %v1723
        %1985 = vmatprep.subr.bf16.mxu0 0
        %1986 = vmatpush1.bf16.msra.mxu0 %v1724
        %1987 = vmatprep.subr.bf16.mxu0 0
        %1988 = vmatpush1.bf16.msra.mxu0 %v1725
        %1989 = vmatprep.subr.bf16.mxu0 0
        %1990 = vmatpush1.bf16.msra.mxu0 %v1726
        %1991 = vmatprep.subr.bf16.mxu0 0
        %1992 = vmatpush1.bf16.msra.mxu0 %v1727
        %1993 = vmatprep.subr.bf16.mxu0 0
        %1994 = vmatpush1.bf16.msra.mxu0 %v1728
        %1995 = vmatprep.subr.bf16.mxu0 0
        %1996 = vmatpush1.bf16.msra.mxu0 %v1729
        %1997 = vmatprep.subr.bf16.mxu0 0
        %1998 = vmatpush1.bf16.msra.mxu0 %v1730
        %1999 = vmatprep.subr.bf16.mxu0 0
        %2000 = vmatpush1.bf16.msra.mxu0 %v1731
        %2001 = vmatprep.subr.bf16.mxu0 0
        %2002 = vmatpush1.bf16.msra.mxu0 %v1732
        %2003 = vmatprep.subr.bf16.mxu0 0
        %2004 = vmatpush1.bf16.msra.mxu0 %v1733
        %2005 = vmatprep.subr.bf16.mxu0 0
        %2006 = vmatpush1.bf16.msra.mxu0 %v1734
        %2007 = vmatprep.mubr.bf16.mxu0 %v975
        %2008 = vmatmul.mubr.bf16.gmra.mrb[0].mxu0 %v959
        %v2009 = vpop.f32.mrb[0].mxu0
        %v2010 = vadd.f32 %v949, %v2009
        %v2011 = vpop.f32.mrb[0].mxu0
        %v2012 = vpop.f32.mrb[0].mxu0
        %v2013 = vadd.f32 %v949, %v2012
        %v2014 = vpop.f32.mrb[0].mxu0
        %2015 = vmatprep.mubr.bf16.mxu0 %v976
        %2016 = vmatmul.mubr.bf16.gmra.mrb[0].mxu0 %v960
        %v2017 = vpop.f32.mrb[0].mxu0
        %v2018 = vadd.f32 %v949, %v2017
        %v2019 = vpop.f32.mrb[0].mxu0
        %v2020 = vpop.f32.mrb[0].mxu0
        %v2021 = vadd.f32 %v949, %v2020
        %v2022 = vpop.f32.mrb[0].mxu0
        %2023 = vmatprep.mubr.bf16.mxu0 %v977
        %2024 = vmatmul.mubr.bf16.gmra.mrb[0].mxu0 %v961
        %v2025 = vpop.f32.mrb[0].mxu0
        %v2026 = vadd.f32 %v949, %v2025
        %v2027 = vpop.f32.mrb[0].mxu0
        %v2028 = vpop.f32.mrb[0].mxu0
        %v2029 = vadd.f32 %v949, %v2028
        %v2030 = vpop.f32.mrb[0].mxu0
        %2031 = vmatprep.mubr.bf16.mxu0 %v978
        %2032 = vmatmul.mubr.bf16.gmra.mrb[0].mxu0 %v962
        %v2033 = vpop.f32.mrb[0].mxu0
        %v2034 = vadd.f32 %v949, %v2033
        %v2035 = vpop.f32.mrb[0].mxu0
        %v2036 = vpop.f32.mrb[0].mxu0
        %v2037 = vadd.f32 %v949, %v2036
        %v2038 = vpop.f32.mrb[0].mxu0
        %2039 = vdwg.mxu0
        %2040 = vmatprep.subr.bf16.mxu0 0
        %2041 = vmatpush1.bf16.msra.mxu0 %v1735
        %2042 = vmatprep.subr.bf16.mxu0 0
        %2043 = vmatpush1.bf16.msra.mxu0 %v1736
        %2044 = vmatprep.subr.bf16.mxu0 0
        %2045 = vmatpush1.bf16.msra.mxu0 %v1737
        %2046 = vmatprep.subr.bf16.mxu0 0
        %2047 = vmatpush1.bf16.msra.mxu0 %v1738
        %2048 = vmatprep.subr.bf16.mxu0 0
        %2049 = vmatpush1.bf16.msra.mxu0 %v1739
        %2050 = vmatprep.subr.bf16.mxu0 0
        %2051 = vmatpush1.bf16.msra.mxu0 %v1740
        %2052 = vmatprep.subr.bf16.mxu0 0
        %2053 = vmatpush1.bf16.msra.mxu0 %v1741
        %2054 = vmatprep.subr.bf16.mxu0 0
        %2055 = vmatpush1.bf16.msra.mxu0 %v1742
        %2056 = vmatprep.subr.bf16.mxu0 0
        %2057 = vmatpush1.bf16.msra.mxu0 %v1743
        %2058 = vmatprep.subr.bf16.mxu0 0
        %2059 = vmatpush1.bf16.msra.mxu0 %v1744
        %2060 = vmatprep.subr.bf16.mxu0 0
        %2061 = vmatpush1.bf16.msra.mxu0 %v1745
        %2062 = vmatprep.subr.bf16.mxu0 0
        %2063 = vmatpush1.bf16.msra.mxu0 %v1746
        %2064 = vmatprep.subr.bf16.mxu0 0
        %2065 = vmatpush1.bf16.msra.mxu0 %v1747
        %2066 = vmatprep.subr.bf16.mxu0 0
        %2067 = vmatpush1.bf16.msra.mxu0 %v1748
        %2068 = vmatprep.subr.bf16.mxu0 0
        %2069 = vmatpush1.bf16.msra.mxu0 %v1749
        %2070 = vmatprep.subr.bf16.mxu0 0
        %2071 = vmatpush1.bf16.msra.mxu0 %v1750
        %2072 = vmatprep.mubr.bf16.mxu0 %v1007
        %2073 = vmatmul.mubr.bf16.gmra.mrb[0].mxu0 %v991
        %v2074 = vpop.f32.mrb[0].mxu0
        %v2075 = vadd.f32 %v2010, %v2074
        %v2076 = vpop.f32.mrb[0].mxu0
        %v2077 = vpop.f32.mrb[0].mxu0
        %v2078 = vadd.f32 %v2013, %v2077
        %v2079 = vpop.f32.mrb[0].mxu0
        %2080 = vmatprep.mubr.bf16.mxu0 %v1008
        %2081 = vmatmul.mubr.bf16.gmra.mrb[0].mxu0 %v992
        %v2082 = vpop.f32.mrb[0].mxu0
        %v2083 = vadd.f32 %v2018, %v2082
        %v2084 = vpop.f32.mrb[0].mxu0
        %v2085 = vpop.f32.mrb[0].mxu0
        %v2086 = vadd.f32 %v2021, %v2085
        %v2087 = vpop.f32.mrb[0].mxu0
        %2088 = vmatprep.mubr.bf16.mxu0 %v1009
        %2089 = vmatmul.mubr.bf16.gmra.mrb[0].mxu0 %v993
        %v2090 = vpop.f32.mrb[0].mxu0
        %v2091 = vadd.f32 %v2026, %v2090
        %v2092 = vpop.f32.mrb[0].mxu0
        %v2093 = vpop.f32.mrb[0].mxu0
        %v2094 = vadd.f32 %v2029, %v2093
        %v2095 = vpop.f32.mrb[0].mxu0
        %2096 = vmatprep.mubr.bf16.mxu0 %v1010
        %2097 = vmatmul.mubr.bf16.gmra.mrb[0].mxu0 %v994
        %v2098 = vpop.f32.mrb[0].mxu0
        %v2099 = vadd.f32 %v2034, %v2098
        %v2100 = vpop.f32.mrb[0].mxu0
        %v2101 = vpop.f32.mrb[0].mxu0
        %v2102 = vadd.f32 %v2037, %v2101
        %v2103 = vpop.f32.mrb[0].mxu0
        %2104 = vdwg.mxu0
        %2105 = vmatprep.subr.bf16.mxu0 0
        %2106 = vmatpush1.bf16.msra.mxu0 %v1751
        %2107 = vmatprep.subr.bf16.mxu0 0
        %2108 = vmatpush1.bf16.msra.mxu0 %v1752
        %2109 = vmatprep.subr.bf16.mxu0 0
        %2110 = vmatpush1.bf16.msra.mxu0 %v1753
        %2111 = vmatprep.subr.bf16.mxu0 0
        %2112 = vmatpush1.bf16.msra.mxu0 %v1754
        %2113 = vmatprep.subr.bf16.mxu0 0
        %2114 = vmatpush1.bf16.msra.mxu0 %v1755
        %2115 = vmatprep.subr.bf16.mxu0 0
        %2116 = vmatpush1.bf16.msra.mxu0 %v1756
        %2117 = vmatprep.subr.bf16.mxu0 0
        %2118 = vmatpush1.bf16.msra.mxu0 %v1757
        %2119 = vmatprep.subr.bf16.mxu0 0
        %2120 = vmatpush1.bf16.msra.mxu0 %v1758
        %2121 = vmatprep.subr.bf16.mxu0 0
        %2122 = vmatpush1.bf16.msra.mxu0 %v1759
        %2123 = vmatprep.subr.bf16.mxu0 0
        %2124 = vmatpush1.bf16.msra.mxu0 %v1760
        %2125 = vmatprep.subr.bf16.mxu0 0
        %2126 = vmatpush1.bf16.msra.mxu0 %v1761
        %2127 = vmatprep.subr.bf16.mxu0 0
        %2128 = vmatpush1.bf16.msra.mxu0 %v1762
        %2129 = vmatprep.subr.bf16.mxu0 0
        %2130 = vmatpush1.bf16.msra.mxu0 %v1763
        %2131 = vmatprep.subr.bf16.mxu0 0
        %2132 = vmatpush1.bf16.msra.mxu0 %v1764
        %2133 = vmatprep.subr.bf16.mxu0 0
        %2134 = vmatpush1.bf16.msra.mxu0 %v1765
        %2135 = vmatprep.subr.bf16.mxu0 0
        %2136 = vmatpush1.bf16.msra.mxu0 %v1766
        %2137 = vmatprep.mubr.bf16.mxu0 %v1039
        %2138 = vmatmul.mubr.bf16.gmra.mrb[0].mxu0 %v1023
        %v2139 = vpop.f32.mrb[0].mxu0
        %v2140 = vadd.f32 %v2075, %v2139
        %v2141 = vpop.f32.mrb[0].mxu0
        %v2142 = vpop.f32.mrb[0].mxu0
        %v2143 = vadd.f32 %v2078, %v2142
        %v2144 = vpop.f32.mrb[0].mxu0
        %2145 = vmatprep.mubr.bf16.mxu0 %v1040
        %2146 = vmatmul.mubr.bf16.gmra.mrb[0].mxu0 %v1024
        %v2147 = vpop.f32.mrb[0].mxu0
        %v2148 = vadd.f32 %v2083, %v2147
        %v2149 = vpop.f32.mrb[0].mxu0
        %v2150 = vpop.f32.mrb[0].mxu0
        %v2151 = vadd.f32 %v2086, %v2150
        %v2152 = vpop.f32.mrb[0].mxu0
        %2153 = vmatprep.mubr.bf16.mxu0 %v1041
        %2154 = vmatmul.mubr.bf16.gmra.mrb[0].mxu0 %v1025
        %v2155 = vpop.f32.mrb[0].mxu0
        %v2156 = vadd.f32 %v2091, %v2155
        %v2157 = vpop.f32.mrb[0].mxu0
        %v2158 = vpop.f32.mrb[0].mxu0
        %v2159 = vadd.f32 %v2094, %v2158
        %v2160 = vpop.f32.mrb[0].mxu0
        %2161 = vmatprep.mubr.bf16.mxu0 %v1042
        %2162 = vmatmul.mubr.bf16.gmra.mrb[0].mxu0 %v1026
        %v2163 = vpop.f32.mrb[0].mxu0
        %v2164 = vadd.f32 %v2099, %v2163
        %v2165 = vpop.f32.mrb[0].mxu0
        %v2166 = vpop.f32.mrb[0].mxu0
        %v2167 = vadd.f32 %v2102, %v2166
        %v2168 = vpop.f32.mrb[0].mxu0
        %2169 = vdwg.mxu0
        %2170 = vmatprep.subr.bf16.mxu0 0
        %2171 = vmatpush1.bf16.msra.mxu0 %v1767
        %2172 = vmatprep.subr.bf16.mxu0 0
        %2173 = vmatpush1.bf16.msra.mxu0 %v1768
        %2174 = vmatprep.subr.bf16.mxu0 0
        %2175 = vmatpush1.bf16.msra.mxu0 %v1769
        %2176 = vmatprep.subr.bf16.mxu0 0
        %2177 = vmatpush1.bf16.msra.mxu0 %v1770
        %2178 = vmatprep.subr.bf16.mxu0 0
        %2179 = vmatpush1.bf16.msra.mxu0 %v1771
        %2180 = vmatprep.subr.bf16.mxu0 0
        %2181 = vmatpush1.bf16.msra.mxu0 %v1772
        %2182 = vmatprep.subr.bf16.mxu0 0
        %2183 = vmatpush1.bf16.msra.mxu0 %v1773
        %2184 = vmatprep.subr.bf16.mxu0 0
        %2185 = vmatpush1.bf16.msra.mxu0 %v1774
        %2186 = vmatprep.subr.bf16.mxu0 0
        %2187 = vmatpush1.bf16.msra.mxu0 %v1775
        %2188 = vmatprep.subr.bf16.mxu0 0
        %2189 = vmatpush1.bf16.msra.mxu0 %v1776
        %2190 = vmatprep.subr.bf16.mxu0 0
        %2191 = vmatpush1.bf16.msra.mxu0 %v1777
        %2192 = vmatprep.subr.bf16.mxu0 0
        %2193 = vmatpush1.bf16.msra.mxu0 %v1778
        %2194 = vmatprep.subr.bf16.mxu0 0
        %2195 = vmatpush1.bf16.msra.mxu0 %v1779
        %2196 = vmatprep.subr.bf16.mxu0 0
        %2197 = vmatpush1.bf16.msra.mxu0 %v1780
        %2198 = vmatprep.subr.bf16.mxu0 0
        %2199 = vmatpush1.bf16.msra.mxu0 %v1781
        %2200 = vmatprep.subr.bf16.mxu0 0
        %2201 = vmatpush1.bf16.msra.mxu0 %v1782
        %2202 = vmatprep.mubr.bf16.mxu0 %v1071
        %2203 = vmatmul.mubr.bf16.gmra.mrb[0].mxu0 %v1055
        %v2204 = vpop.f32.mrb[0].mxu0
        %v2205 = vadd.f32 %v2140, %v2204
        %v2206 = vpop.f32.mrb[0].mxu0
        %v2207 = vpop.f32.mrb[0].mxu0
        %v2208 = vadd.f32 %v2143, %v2207
        %v2209 = vpop.f32.mrb[0].mxu0
        %2210 = vmatprep.mubr.bf16.mxu0 %v1072
        %2211 = vmatmul.mubr.bf16.gmra.mrb[0].mxu0 %v1056
        %v2212 = vpop.f32.mrb[0].mxu0
        %v2213 = vadd.f32 %v2148, %v2212
        %v2214 = vpop.f32.mrb[0].mxu0
        %v2215 = vpop.f32.mrb[0].mxu0
        %v2216 = vadd.f32 %v2151, %v2215
        %v2217 = vpop.f32.mrb[0].mxu0
        %2218 = vmatprep.mubr.bf16.mxu0 %v1073
        %2219 = vmatmul.mubr.bf16.gmra.mrb[0].mxu0 %v1057
        %v2220 = vpop.f32.mrb[0].mxu0
        %v2221 = vadd.f32 %v2156, %v2220
        %v2222 = vpop.f32.mrb[0].mxu0
        %v2223 = vpop.f32.mrb[0].mxu0
        %v2224 = vadd.f32 %v2159, %v2223
        %v2225 = vpop.f32.mrb[0].mxu0
        %2226 = vmatprep.mubr.bf16.mxu0 %v1074
        %2227 = vmatmul.mubr.bf16.gmra.mrb[0].mxu0 %v1058
        %v2228 = vpop.f32.mrb[0].mxu0
        %v2229 = vadd.f32 %v2164, %v2228
        %v2230 = vpop.f32.mrb[0].mxu0
        %v2231 = vpop.f32.mrb[0].mxu0
        %v2232 = vadd.f32 %v2167, %v2231
        %v2233 = vpop.f32.mrb[0].mxu0
        %2234 = vdwg.mxu0
        %2235 = vmatprep.subr.bf16.mxu0 0
        %2236 = vmatpush1.bf16.msra.mxu0 %v1783
        %2237 = vmatprep.subr.bf16.mxu0 0
        %2238 = vmatpush1.bf16.msra.mxu0 %v1784
        %2239 = vmatprep.subr.bf16.mxu0 0
        %2240 = vmatpush1.bf16.msra.mxu0 %v1785
        %2241 = vmatprep.subr.bf16.mxu0 0
        %2242 = vmatpush1.bf16.msra.mxu0 %v1786
        %2243 = vmatprep.subr.bf16.mxu0 0
        %2244 = vmatpush1.bf16.msra.mxu0 %v1787
        %2245 = vmatprep.subr.bf16.mxu0 0
        %2246 = vmatpush1.bf16.msra.mxu0 %v1788
        %2247 = vmatprep.subr.bf16.mxu0 0
        %2248 = vmatpush1.bf16.msra.mxu0 %v1789
        %2249 = vmatprep.subr.bf16.mxu0 0
        %2250 = vmatpush1.bf16.msra.mxu0 %v1790
        %2251 = vmatprep.subr.bf16.mxu0 0
        %2252 = vmatpush1.bf16.msra.mxu0 %v1791
        %2253 = vmatprep.subr.bf16.mxu0 0
        %2254 = vmatpush1.bf16.msra.mxu0 %v1792
        %2255 = vmatprep.subr.bf16.mxu0 0
        %2256 = vmatpush1.bf16.msra.mxu0 %v1793
        %2257 = vmatprep.subr.bf16.mxu0 0
        %2258 = vmatpush1.bf16.msra.mxu0 %v1794
        %2259 = vmatprep.subr.bf16.mxu0 0
        %2260 = vmatpush1.bf16.msra.mxu0 %v1795
        %2261 = vmatprep.subr.bf16.mxu0 0
        %2262 = vmatpush1.bf16.msra.mxu0 %v1796
        %2263 = vmatprep.subr.bf16.mxu0 0
        %2264 = vmatpush1.bf16.msra.mxu0 %v1797
        %2265 = vmatprep.subr.bf16.mxu0 0
        %2266 = vmatpush1.bf16.msra.mxu0 %v1798
        %2267 = vmatprep.mubr.bf16.mxu0 %v1103
        %2268 = vmatmul.mubr.bf16.gmra.mrb[0].mxu0 %v1087
        %v2269 = vpop.f32.mrb[0].mxu0
        %v2270 = vadd.f32 %v2205, %v2269
        %v2271 = vpop.f32.mrb[0].mxu0
        %v2272 = vpop.f32.mrb[0].mxu0
        %v2273 = vadd.f32 %v2208, %v2272
        %v2274 = vpop.f32.mrb[0].mxu0
        %2275 = vmatprep.mubr.bf16.mxu0 %v1104
        %2276 = vmatmul.mubr.bf16.gmra.mrb[0].mxu0 %v1088
        %v2277 = vpop.f32.mrb[0].mxu0
        %v2278 = vadd.f32 %v2213, %v2277
        %v2279 = vpop.f32.mrb[0].mxu0
        %v2280 = vpop.f32.mrb[0].mxu0
        %v2281 = vadd.f32 %v2216, %v2280
        %v2282 = vpop.f32.mrb[0].mxu0
        %2283 = vmatprep.mubr.bf16.mxu0 %v1105
        %2284 = vmatmul.mubr.bf16.gmra.mrb[0].mxu0 %v1089
        %v2285 = vpop.f32.mrb[0].mxu0
        %v2286 = vadd.f32 %v2221, %v2285
        %v2287 = vpop.f32.mrb[0].mxu0
        %v2288 = vpop.f32.mrb[0].mxu0
        %v2289 = vadd.f32 %v2224, %v2288
        %v2290 = vpop.f32.mrb[0].mxu0
        %2291 = vmatprep.mubr.bf16.mxu0 %v1106
        %2292 = vmatmul.mubr.bf16.gmra.mrb[0].mxu0 %v1090
        %v2293 = vpop.f32.mrb[0].mxu0
        %v2294 = vadd.f32 %v2229, %v2293
        %v2295 = vpop.f32.mrb[0].mxu0
        %v2296 = vpop.f32.mrb[0].mxu0
        %v2297 = vadd.f32 %v2232, %v2296
        %v2298 = vpop.f32.mrb[0].mxu0
        %2299 = vdwg.mxu0
        %2300 = vmatprep.subr.bf16.mxu0 0
        %2301 = vmatpush1.bf16.msra.mxu0 %v1799
        %2302 = vmatprep.subr.bf16.mxu0 0
        %2303 = vmatpush1.bf16.msra.mxu0 %v1800
        %2304 = vmatprep.subr.bf16.mxu0 0
        %2305 = vmatpush1.bf16.msra.mxu0 %v1801
        %2306 = vmatprep.subr.bf16.mxu0 0
        %2307 = vmatpush1.bf16.msra.mxu0 %v1802
        %2308 = vmatprep.subr.bf16.mxu0 0
        %2309 = vmatpush1.bf16.msra.mxu0 %v1803
        %2310 = vmatprep.subr.bf16.mxu0 0
        %2311 = vmatpush1.bf16.msra.mxu0 %v1804
        %2312 = vmatprep.subr.bf16.mxu0 0
        %2313 = vmatpush1.bf16.msra.mxu0 %v1805
        %2314 = vmatprep.subr.bf16.mxu0 0
        %2315 = vmatpush1.bf16.msra.mxu0 %v1806
        %2316 = vmatprep.subr.bf16.mxu0 0
        %2317 = vmatpush1.bf16.msra.mxu0 %v1807
        %2318 = vmatprep.subr.bf16.mxu0 0
        %2319 = vmatpush1.bf16.msra.mxu0 %v1808
        %2320 = vmatprep.subr.bf16.mxu0 0
        %2321 = vmatpush1.bf16.msra.mxu0 %v1809
        %2322 = vmatprep.subr.bf16.mxu0 0
        %2323 = vmatpush1.bf16.msra.mxu0 %v1810
        %2324 = vmatprep.subr.bf16.mxu0 0
        %2325 = vmatpush1.bf16.msra.mxu0 %v1811
        %2326 = vmatprep.subr.bf16.mxu0 0
        %2327 = vmatpush1.bf16.msra.mxu0 %v1812
        %2328 = vmatprep.subr.bf16.mxu0 0
        %2329 = vmatpush1.bf16.msra.mxu0 %v1813
        %2330 = vmatprep.subr.bf16.mxu0 0
        %2331 = vmatpush1.bf16.msra.mxu0 %v1814
        %2332 = vmatprep.mubr.bf16.mxu0 %v1135
        %2333 = vmatmul.mubr.bf16.gmra.mrb[0].mxu0 %v1119
        %v2334 = vpop.f32.mrb[0].mxu0
        %v2335 = vadd.f32 %v2270, %v2334
        %v2336 = vpop.f32.mrb[0].mxu0
        %v2337 = vpop.f32.mrb[0].mxu0
        %v2338 = vadd.f32 %v2273, %v2337
        %v2339 = vpop.f32.mrb[0].mxu0
        %2340 = vmatprep.mubr.bf16.mxu0 %v1136
        %2341 = vmatmul.mubr.bf16.gmra.mrb[0].mxu0 %v1120
        %v2342 = vpop.f32.mrb[0].mxu0
        %v2343 = vadd.f32 %v2278, %v2342
        %v2344 = vpop.f32.mrb[0].mxu0
        %v2345 = vpop.f32.mrb[0].mxu0
        %v2346 = vadd.f32 %v2281, %v2345
        %v2347 = vpop.f32.mrb[0].mxu0
        %2348 = vmatprep.mubr.bf16.mxu0 %v1137
        %2349 = vmatmul.mubr.bf16.gmra.mrb[0].mxu0 %v1121
        %v2350 = vpop.f32.mrb[0].mxu0
        %v2351 = vadd.f32 %v2286, %v2350
        %v2352 = vpop.f32.mrb[0].mxu0
        %v2353 = vpop.f32.mrb[0].mxu0
        %v2354 = vadd.f32 %v2289, %v2353
        %v2355 = vpop.f32.mrb[0].mxu0
        %2356 = vmatprep.mubr.bf16.mxu0 %v1138
        %2357 = vmatmul.mubr.bf16.gmra.mrb[0].mxu0 %v1122
        %v2358 = vpop.f32.mrb[0].mxu0
        %v2359 = vadd.f32 %v2294, %v2358
        %v2360 = vpop.f32.mrb[0].mxu0
        %v2361 = vpop.f32.mrb[0].mxu0
        %v2362 = vadd.f32 %v2297, %v2361
        %v2363 = vpop.f32.mrb[0].mxu0
        %2364 = vdwg.mxu0
        %2365 = vmatprep.subr.bf16.mxu0 0
        %2366 = vmatpush1.bf16.msra.mxu0 %v1815
        %2367 = vmatprep.subr.bf16.mxu0 0
        %2368 = vmatpush1.bf16.msra.mxu0 %v1816
        %2369 = vmatprep.subr.bf16.mxu0 0
        %2370 = vmatpush1.bf16.msra.mxu0 %v1817
        %2371 = vmatprep.subr.bf16.mxu0 0
        %2372 = vmatpush1.bf16.msra.mxu0 %v1818
        %2373 = vmatprep.subr.bf16.mxu0 0
        %2374 = vmatpush1.bf16.msra.mxu0 %v1819
        %2375 = vmatprep.subr.bf16.mxu0 0
        %2376 = vmatpush1.bf16.msra.mxu0 %v1820
        %2377 = vmatprep.subr.bf16.mxu0 0
        %2378 = vmatpush1.bf16.msra.mxu0 %v1821
        %2379 = vmatprep.subr.bf16.mxu0 0
        %2380 = vmatpush1.bf16.msra.mxu0 %v1822
        %2381 = vmatprep.subr.bf16.mxu0 0
        %2382 = vmatpush1.bf16.msra.mxu0 %v1823
        %2383 = vmatprep.subr.bf16.mxu0 0
        %2384 = vmatpush1.bf16.msra.mxu0 %v1824
        %2385 = vmatprep.subr.bf16.mxu0 0
        %2386 = vmatpush1.bf16.msra.mxu0 %v1825
        %2387 = vmatprep.subr.bf16.mxu0 0
        %2388 = vmatpush1.bf16.msra.mxu0 %v1826
        %2389 = vmatprep.subr.bf16.mxu0 0
        %2390 = vmatpush1.bf16.msra.mxu0 %v1827
        %2391 = vmatprep.subr.bf16.mxu0 0
        %2392 = vmatpush1.bf16.msra.mxu0 %v1828
        %2393 = vmatprep.subr.bf16.mxu0 0
        %2394 = vmatpush1.bf16.msra.mxu0 %v1829
        %2395 = vmatprep.subr.bf16.mxu0 0
        %2396 = vmatpush1.bf16.msra.mxu0 %v1830
        %2397 = vmatprep.mubr.bf16.mxu0 %v1167
        %2398 = vmatmul.mubr.bf16.gmra.mrb[0].mxu0 %v1151
        %v2399 = vpop.f32.mrb[0].mxu0
        %v2400 = vadd.f32 %v2335, %v2399
        %v2401 = vpop.f32.mrb[0].mxu0
        %v2402 = vpop.f32.mrb[0].mxu0
        %v2403 = vadd.f32 %v2338, %v2402
        %v2404 = vpop.f32.mrb[0].mxu0
        %2405 = vmatprep.mubr.bf16.mxu0 %v1168
        %2406 = vmatmul.mubr.bf16.gmra.mrb[0].mxu0 %v1152
        %v2407 = vpop.f32.mrb[0].mxu0
        %v2408 = vadd.f32 %v2343, %v2407
        %v2409 = vpop.f32.mrb[0].mxu0
        %v2410 = vpop.f32.mrb[0].mxu0
        %v2411 = vadd.f32 %v2346, %v2410
        %v2412 = vpop.f32.mrb[0].mxu0
        %2413 = vmatprep.mubr.bf16.mxu0 %v1169
        %2414 = vmatmul.mubr.bf16.gmra.mrb[0].mxu0 %v1153
        %v2415 = vpop.f32.mrb[0].mxu0
        %v2416 = vadd.f32 %v2351, %v2415
        %v2417 = vpop.f32.mrb[0].mxu0
        %v2418 = vpop.f32.mrb[0].mxu0
        %v2419 = vadd.f32 %v2354, %v2418
        %v2420 = vpop.f32.mrb[0].mxu0
        %2421 = vmatprep.mubr.bf16.mxu0 %v1170
        %2422 = vmatmul.mubr.bf16.gmra.mrb[0].mxu0 %v1154
        %v2423 = vpop.f32.mrb[0].mxu0
        %v2424 = vadd.f32 %v2359, %v2423
        %v2425 = vpop.f32.mrb[0].mxu0
        %v2426 = vpop.f32.mrb[0].mxu0
        %v2427 = vadd.f32 %v2362, %v2426
        %v2428 = vpop.f32.mrb[0].mxu0
        %2429 = vdwg.mxu0
        %2430 = vmatprep.subr.bf16.mxu0 0
        %2431 = vmatpush1.bf16.msra.mxu0 %v1831
        %2432 = vmatprep.subr.bf16.mxu0 0
        %2433 = vmatpush1.bf16.msra.mxu0 %v1832
        %2434 = vmatprep.subr.bf16.mxu0 0
        %2435 = vmatpush1.bf16.msra.mxu0 %v1833
        %2436 = vmatprep.subr.bf16.mxu0 0
        %2437 = vmatpush1.bf16.msra.mxu0 %v1834
        %2438 = vmatprep.subr.bf16.mxu0 0
        %2439 = vmatpush1.bf16.msra.mxu0 %v1835
        %2440 = vmatprep.subr.bf16.mxu0 0
        %2441 = vmatpush1.bf16.msra.mxu0 %v1836
        %2442 = vmatprep.subr.bf16.mxu0 0
        %2443 = vmatpush1.bf16.msra.mxu0 %v1837
        %2444 = vmatprep.subr.bf16.mxu0 0
        %2445 = vmatpush1.bf16.msra.mxu0 %v1838
        %2446 = vmatprep.subr.bf16.mxu0 0
        %2447 = vmatpush1.bf16.msra.mxu0 %v1839
        %2448 = vmatprep.subr.bf16.mxu0 0
        %2449 = vmatpush1.bf16.msra.mxu0 %v1840
        %2450 = vmatprep.subr.bf16.mxu0 0
        %2451 = vmatpush1.bf16.msra.mxu0 %v1841
        %2452 = vmatprep.subr.bf16.mxu0 0
        %2453 = vmatpush1.bf16.msra.mxu0 %v1842
        %2454 = vmatprep.subr.bf16.mxu0 0
        %2455 = vmatpush1.bf16.msra.mxu0 %v1843
        %2456 = vmatprep.subr.bf16.mxu0 0
        %2457 = vmatpush1.bf16.msra.mxu0 %v1844
        %2458 = vmatprep.subr.bf16.mxu0 0
        %2459 = vmatpush1.bf16.msra.mxu0 %v1845
        %2460 = vmatprep.subr.bf16.mxu0 0
        %2461 = vmatpush1.bf16.msra.mxu0 %v1846
        %2462 = vmatprep.mubr.bf16.mxu0 %v1199
        %2463 = vmatmul.mubr.bf16.gmra.mrb[0].mxu0 %v1183
        %v2464 = vpop.f32.mrb[0].mxu0
        %v2465 = vadd.f32 %v2400, %v2464
        %v2466 = vpop.f32.mrb[0].mxu0
        %v2467 = vpop.f32.mrb[0].mxu0
        %v2468 = vadd.f32 %v2403, %v2467
        %v2469 = vpop.f32.mrb[0].mxu0
        %2470 = vmatprep.mubr.bf16.mxu0 %v1200
        %2471 = vmatmul.mubr.bf16.gmra.mrb[0].mxu0 %v1184
        %v2472 = vpop.f32.mrb[0].mxu0
        %v2473 = vadd.f32 %v2408, %v2472
        %v2474 = vpop.f32.mrb[0].mxu0
        %v2475 = vpop.f32.mrb[0].mxu0
        %v2476 = vadd.f32 %v2411, %v2475
        %v2477 = vpop.f32.mrb[0].mxu0
        %2478 = vmatprep.mubr.bf16.mxu0 %v1201
        %2479 = vmatmul.mubr.bf16.gmra.mrb[0].mxu0 %v1185
        %v2480 = vpop.f32.mrb[0].mxu0
        %v2481 = vadd.f32 %v2416, %v2480
        %v2482 = vpop.f32.mrb[0].mxu0
        %v2483 = vpop.f32.mrb[0].mxu0
        %v2484 = vadd.f32 %v2419, %v2483
        %v2485 = vpop.f32.mrb[0].mxu0
        %2486 = vmatprep.mubr.bf16.mxu0 %v1202
        %2487 = vmatmul.mubr.bf16.gmra.mrb[0].mxu0 %v1186
        %v2488 = vpop.f32.mrb[0].mxu0
        %v2489 = vadd.f32 %v2424, %v2488
        %v2490 = vpop.f32.mrb[0].mxu0
        %v2491 = vpop.f32.mrb[0].mxu0
        %v2492 = vadd.f32 %v2427, %v2491
        %v2493 = vpop.f32.mrb[0].mxu0
        %2494 = vdwg.mxu0
        %v2495 = vmax.f32 %v2465, 0.0
        %v2496 = vmax.f32 %v2468, 0.0
        %v2497 = vmax.f32 %v2473, 0.0
        %v2498 = vmax.f32 %v2476, 0.0
        %v2499 = vmax.f32 %v2481, 0.0
        %v2500 = vmax.f32 %v2484, 0.0
        %v2501 = vmax.f32 %v2489, 0.0
        %v2502 = vmax.f32 %v2492, 0.0
        %v2503 = vld [vmem:[%s3] sm:$0xff]
        %v2504 = vld [vmem:[%s3 + $0x8] sm:$0xff]
        %vm2505 = vcmask 523264
        %v2507 = vsel %vm2505, %v2503, 0
        %v2510 = vsel %vm2505, %v2504, 0
        %2512 = vmatprep.subr.mxu0 0.0
        %2513 = vmatpush1.msra.mxu0 %v2495
        %2514 = vmatprep.subr.mxu0 0.0
        %2515 = vmatpush1.msra.mxu0 %v2496
        %2516 = vmatprep.subr.mxu0 0.0
        %2517 = vmatpush1.msra.mxu0 %v2497
        %2518 = vmatprep.subr.mxu0 0.0
        %2519 = vmatpush1.msra.mxu0 %v2498
        %2520 = vmatprep.subr.mxu0 0.0
        %2521 = vmatpush1.msra.mxu0 %v2499
        %2522 = vmatprep.subr.mxu0 0.0
        %2523 = vmatpush1.msra.mxu0 %v2500
        %2524 = vmatprep.subr.mxu0 0.0
        %2525 = vmatpush1.msra.mxu0 %v2501
        %2526 = vmatprep.subr.mxu0 0.0
        %2527 = vmatpush1.msra.mxu0 %v2502
        %2528 = vmatprep.subr.mxu0 0.0
        %2529 = vmatpush1.msra.mxu0 0.0
        %2530 = vmatprep.subr.mxu0 0.0
        %2531 = vmatpush1.msra.mxu0 0.0
        %2532 = vmatprep.subr.mxu0 0.0
        %2533 = vmatpush1.msra.mxu0 0.0
        %2534 = vmatprep.subr.mxu0 0.0
        %2535 = vmatpush1.msra.mxu0 0.0
        %2536 = vmatprep.subr.mxu0 0.0
        %2537 = vmatpush1.msra.mxu0 0.0
        %2538 = vmatprep.subr.mxu0 0.0
        %2539 = vmatpush1.msra.mxu0 0.0
        %2540 = vmatprep.subr.mxu0 0.0
        %2541 = vmatpush1.msra.mxu0 0.0
        %2542 = vmatprep.subr.mxu0 0.0
        %2543 = vmatpush1.msra.mxu0 0.0
        %2544 = vmatprep.subr.mxu0 0.0
        %2545 = vmatpush1.msra.mxu0 0.0
        %2546 = vmatprep.subr.mxu0 0.0
        %2547 = vmatpush1.msra.mxu0 0.0
        %2548 = vmatprep.subr.mxu0 0.0
        %2549 = vmatpush1.msra.mxu0 0.0
        %2550 = vmatprep.subr.mxu0 0.0
        %2551 = vmatpush1.msra.mxu0 0.0
        %2552 = vmatprep.subr.mxu0 0.0
        %2553 = vmatpush1.msra.mxu0 0.0
        %2554 = vmatprep.subr.mxu0 0.0
        %2555 = vmatpush1.msra.mxu0 0.0
        %2556 = vmatprep.subr.mxu0 0.0
        %2557 = vmatpush1.msra.mxu0 0.0
        %2558 = vmatprep.subr.mxu0 0.0
        %2559 = vmatpush1.msra.mxu0 0.0
        %2560 = vmatprep.subr.mxu0 0.0
        %2561 = vmatpush1.msra.mxu0 0.0
        %2562 = vmatprep.subr.mxu0 0.0
        %2563 = vmatpush1.msra.mxu0 0.0
        %2564 = vmatprep.subr.mxu0 0.0
        %2565 = vmatpush1.msra.mxu0 0.0
        %2566 = vmatprep.subr.mxu0 0.0
        %2567 = vmatpush1.msra.mxu0 0.0
        %2568 = vmatprep.subr.mxu0 0.0
        %2569 = vmatpush1.msra.mxu0 0.0
        %2570 = vmatprep.subr.mxu0 0.0
        %2571 = vmatpush1.msra.mxu0 0.0
        %2572 = vmatprep.subr.mxu0 0.0
        %2573 = vmatpush1.msra.mxu0 0.0
        %2574 = vmatprep.subr.mxu0 0.0
        %2575 = vmatpush1.msra.mxu0 0.0
        %2576 = vmatprep.mubr.f32.mxu0 0.0
        %2577 = vmatmul.mubr.f32.gmra.mrb[0].mxu0 %v2507
        %v2578 = vpop.f32.mrb[0].mxu0
        %v2579 = vadd.f32 0.0, %v2578
        %v2580 = vpop.f32.mrb[0].mxu0
        %2581 = vmatprep.mubr.f32.mxu0 0.0
        %2582 = vmatmul.mubr.f32.gmra.mrb[0].mxu0 %v2510
        %v2583 = vpop.f32.mrb[0].mxu0
        %v2584 = vadd.f32 0.0, %v2583
        %v2585 = vpop.f32.mrb[0].mxu0
        %2586 = vdwg.mxu0
        %v2587 = vpack.c.bf16 %v2584, %v2579
        %v2588 = vld [vmem:[%s5] sm:$0x1]
        %v2589 = vld [vmem:[%s4] sm:$0xf]
        %v2590 = vld [vmem:[%s4 + $0x4] sm:$0xf]
        %v2591 = vld [vmem:[%s4 + $0x8] sm:$0xf]
        %v2592 = vld [vmem:[%s4 + $0xc] sm:$0xf]
        %v2593 = vld [vmem:[%s4 + $0x10] sm:$0xf]
        %v2594 = vld [vmem:[%s4 + $0x14] sm:$0xf]
        %v2595 = vld [vmem:[%s4 + $0x18] sm:$0xf]
        %v2596 = vld [vmem:[%s4 + $0x1c] sm:$0xf]
        %v2597 = vld [vmem:[%s4 + $0x20] sm:$0xf]
        %v2598 = vld [vmem:[%s4 + $0x24] sm:$0xf]
        %v2599 = vld [vmem:[%s4 + $0x28] sm:$0xf]
        %v2600 = vld [vmem:[%s4 + $0x2c] sm:$0xf]
        %v2601 = vld [vmem:[%s4 + $0x30] sm:$0xf]
        %v2602 = vld [vmem:[%s4 + $0x34] sm:$0xf]
        %v2603 = vld [vmem:[%s4 + $0x38] sm:$0xf]
        %v2604 = vld [vmem:[%s4 + $0x3c] sm:$0xf]
        %v2621 = vunpack.c.l.b16 %v2589
        %v2622 = vunpack.c.l.b16 %v2590
        %v2623 = vunpack.c.l.b16 %v2591
        %v2624 = vunpack.c.l.b16 %v2592
        %v2625 = vunpack.c.l.b16 %v2593
        %v2626 = vunpack.c.l.b16 %v2594
        %v2627 = vunpack.c.l.b16 %v2595
        %v2628 = vunpack.c.l.b16 %v2596
        %v2629 = vunpack.c.l.b16 %v2597
        %v2630 = vunpack.c.l.b16 %v2598
        %v2631 = vunpack.c.l.b16 %v2599
        %v2632 = vunpack.c.l.b16 %v2600
        %v2633 = vunpack.c.l.b16 %v2601
        %v2634 = vunpack.c.l.b16 %v2602
        %v2635 = vunpack.c.l.b16 %v2603
        %v2636 = vunpack.c.l.b16 %v2604
        %v2637 = vpack.c.b16 %v2622, %v2621
        %v2638 = vpack.c.b16 %v2624, %v2623
        %v2639 = vpack.c.b16 %v2626, %v2625
        %v2640 = vpack.c.b16 %v2628, %v2627
        %v2641 = vpack.c.b16 %v2630, %v2629
        %v2642 = vpack.c.b16 %v2632, %v2631
        %v2643 = vpack.c.b16 %v2634, %v2633
        %v2644 = vpack.c.b16 %v2636, %v2635
        %2653 = vmatprep.subr.bf16.mxu0 0
        %2654 = vmatpush1.bf16.msra.mxu0 %v2637
        %2655 = vmatprep.subr.bf16.mxu0 0
        %2656 = vmatpush1.bf16.msra.mxu0 %v2638
        %2657 = vmatprep.subr.bf16.mxu0 0
        %2658 = vmatpush1.bf16.msra.mxu0 %v2639
        %2659 = vmatprep.subr.bf16.mxu0 0
        %2660 = vmatpush1.bf16.msra.mxu0 %v2640
        %2661 = vmatprep.subr.bf16.mxu0 0
        %2662 = vmatpush1.bf16.msra.mxu0 %v2641
        %2663 = vmatprep.subr.bf16.mxu0 0
        %2664 = vmatpush1.bf16.msra.mxu0 %v2642
        %2665 = vmatprep.subr.bf16.mxu0 0
        %2666 = vmatpush1.bf16.msra.mxu0 %v2643
        %2667 = vmatprep.subr.bf16.mxu0 0
        %2668 = vmatpush1.bf16.msra.mxu0 %v2644
        %2669 = vmatprep.subr.bf16.mxu0 0
        %2670 = vmatpush1.bf16.msra.mxu0 0
        %2671 = vmatprep.subr.bf16.mxu0 0
        %2672 = vmatpush1.bf16.msra.mxu0 0
        %2673 = vmatprep.subr.bf16.mxu0 0
        %2674 = vmatpush1.bf16.msra.mxu0 0
        %2675 = vmatprep.subr.bf16.mxu0 0
        %2676 = vmatpush1.bf16.msra.mxu0 0
        %2677 = vmatprep.subr.bf16.mxu0 0
        %2678 = vmatpush1.bf16.msra.mxu0 0
        %2679 = vmatprep.subr.bf16.mxu0 0
        %2680 = vmatpush1.bf16.msra.mxu0 0
        %2681 = vmatprep.subr.bf16.mxu0 0
        %2682 = vmatpush1.bf16.msra.mxu0 0
        %2683 = vmatprep.subr.bf16.mxu0 0
        %2684 = vmatpush1.bf16.msra.mxu0 0
        %2685 = vmatprep.mubr.bf16.mxu0 0
        %2686 = vmatmul.mubr.bf16.gmra.mrb[0].mxu0 %v2587
        %v2687 = vpop.f32.mrb[0].mxu0
        %v2688 = vadd.f32 0.0, %v2687
        %v2689 = vpop.f32.mrb[0].mxu0
        %v2690 = vpop.f32.mrb[0].mxu0
        %v2691 = vpop.f32.mrb[0].mxu0
        %2692 = vdwg.mxu0
        %v2693 = vadd.f32 %v2588, %v2688
        %s2694 = scalar_lea.vmem %s4, 64
        %v2695 = vld [vmem:[%s2694] sm:$0xf]
        %v2696 = vld [vmem:[%s2694 + $0x4] sm:$0xf]
        %v2697 = vld [vmem:[%s2694 + $0x8] sm:$0xf]
        %v2698 = vld [vmem:[%s2694 + $0xc] sm:$0xf]
        %v2699 = vld [vmem:[%s2694 + $0x10] sm:$0xf]
        %v2700 = vld [vmem:[%s2694 + $0x14] sm:$0xf]
        %v2701 = vld [vmem:[%s2694 + $0x18] sm:$0xf]
        %v2702 = vld [vmem:[%s2694 + $0x1c] sm:$0xf]
        %v2703 = vld [vmem:[%s2694 + $0x20] sm:$0xf]
        %v2704 = vld [vmem:[%s2694 + $0x24] sm:$0xf]
        %v2705 = vld [vmem:[%s2694 + $0x28] sm:$0xf]
        %v2706 = vld [vmem:[%s2694 + $0x2c] sm:$0xf]
        %v2707 = vld [vmem:[%s2694 + $0x30] sm:$0xf]
        %v2708 = vld [vmem:[%s2694 + $0x34] sm:$0xf]
        %v2709 = vld [vmem:[%s2694 + $0x38] sm:$0xf]
        %v2710 = vld [vmem:[%s2694 + $0x3c] sm:$0xf]
        %v2712 = vshrl.u32 %v2587, 16
        %v2731 = vunpack.c.l.b16 %v2695
        %v2732 = vunpack.c.l.b16 %v2696
        %v2733 = vunpack.c.l.b16 %v2697
        %v2734 = vunpack.c.l.b16 %v2698
        %v2735 = vunpack.c.l.b16 %v2699
        %v2736 = vunpack.c.l.b16 %v2700
        %v2737 = vunpack.c.l.b16 %v2701
        %v2738 = vunpack.c.l.b16 %v2702
        %v2739 = vunpack.c.l.b16 %v2703
        %v2740 = vunpack.c.l.b16 %v2704
        %v2741 = vunpack.c.l.b16 %v2705
        %v2742 = vunpack.c.l.b16 %v2706
        %v2743 = vunpack.c.l.b16 %v2707
        %v2744 = vunpack.c.l.b16 %v2708
        %v2745 = vunpack.c.l.b16 %v2709
        %v2746 = vunpack.c.l.b16 %v2710
        %v2747 = vpack.c.b16 %v2732, %v2731
        %v2748 = vpack.c.b16 %v2734, %v2733
        %v2749 = vpack.c.b16 %v2736, %v2735
        %v2750 = vpack.c.b16 %v2738, %v2737
        %v2751 = vpack.c.b16 %v2740, %v2739
        %v2752 = vpack.c.b16 %v2742, %v2741
        %v2753 = vpack.c.b16 %v2744, %v2743
        %v2754 = vpack.c.b16 %v2746, %v2745
        %2763 = vmatprep.subr.bf16.mxu0 0
        %2764 = vmatpush1.bf16.msra.mxu0 %v2747
        %2765 = vmatprep.subr.bf16.mxu0 0
        %2766 = vmatpush1.bf16.msra.mxu0 %v2748
        %2767 = vmatprep.subr.bf16.mxu0 0
        %2768 = vmatpush1.bf16.msra.mxu0 %v2749
        %2769 = vmatprep.subr.bf16.mxu0 0
        %2770 = vmatpush1.bf16.msra.mxu0 %v2750
        %2771 = vmatprep.subr.bf16.mxu0 0
        %2772 = vmatpush1.bf16.msra.mxu0 %v2751
        %2773 = vmatprep.subr.bf16.mxu0 0
        %2774 = vmatpush1.bf16.msra.mxu0 %v2752
        %2775 = vmatprep.subr.bf16.mxu0 0
        %2776 = vmatpush1.bf16.msra.mxu0 %v2753
        %2777 = vmatprep.subr.bf16.mxu0 0
        %2778 = vmatpush1.bf16.msra.mxu0 %v2754
        %2779 = vmatprep.subr.bf16.mxu0 0
        %2780 = vmatpush1.bf16.msra.mxu0 0
        %2781 = vmatprep.subr.bf16.mxu0 0
        %2782 = vmatpush1.bf16.msra.mxu0 0
        %2783 = vmatprep.subr.bf16.mxu0 0
        %2784 = vmatpush1.bf16.msra.mxu0 0
        %2785 = vmatprep.subr.bf16.mxu0 0
        %2786 = vmatpush1.bf16.msra.mxu0 0
        %2787 = vmatprep.subr.bf16.mxu0 0
        %2788 = vmatpush1.bf16.msra.mxu0 0
        %2789 = vmatprep.subr.bf16.mxu0 0
        %2790 = vmatpush1.bf16.msra.mxu0 0
        %2791 = vmatprep.subr.bf16.mxu0 0
        %2792 = vmatpush1.bf16.msra.mxu0 0
        %2793 = vmatprep.subr.bf16.mxu0 0
        %2794 = vmatpush1.bf16.msra.mxu0 0
        %2795 = vmatprep.mubr.bf16.mxu0 0
        %2796 = vmatmul.mubr.bf16.gmra.mrb[0].mxu0 %v2712
        %v2797 = vpop.f32.mrb[0].mxu0
        %v2798 = vadd.f32 0.0, %v2797
        %v2799 = vpop.f32.mrb[0].mxu0
        %v2800 = vpop.f32.mrb[0].mxu0
        %v2801 = vpop.f32.mrb[0].mxu0
        %2802 = vdwg.mxu0
        %v2803 = vadd.f32 %v2693, %v2798
        %s2804 = scalar_lea.vmem %s4, 128
        %v2805 = vld [vmem:[%s2804] sm:$0xf]
        %v2806 = vld [vmem:[%s2804 + $0x4] sm:$0xf]
        %v2807 = vld [vmem:[%s2804 + $0x8] sm:$0xf]
        %v2808 = vld [vmem:[%s2804 + $0xc] sm:$0xf]
        %v2809 = vld [vmem:[%s2804 + $0x10] sm:$0xf]
        %v2810 = vld [vmem:[%s2804 + $0x14] sm:$0xf]
        %v2811 = vld [vmem:[%s2804 + $0x18] sm:$0xf]
        %v2812 = vld [vmem:[%s2804 + $0x1c] sm:$0xf]
        %v2813 = vld [vmem:[%s2804 + $0x20] sm:$0xf]
        %v2814 = vld [vmem:[%s2804 + $0x24] sm:$0xf]
        %v2815 = vld [vmem:[%s2804 + $0x28] sm:$0xf]
        %v2816 = vld [vmem:[%s2804 + $0x2c] sm:$0xf]
        %v2817 = vld [vmem:[%s2804 + $0x30] sm:$0xf]
        %v2818 = vld [vmem:[%s2804 + $0x34] sm:$0xf]
        %v2819 = vld [vmem:[%s2804 + $0x38] sm:$0xf]
        %v2820 = vld [vmem:[%s2804 + $0x3c] sm:$0xf]
        %v2822 = vrot.slane %v2587, 1
        %v2840 = vunpack.c.l.b16 %v2805
        %v2841 = vunpack.c.l.b16 %v2806
        %v2842 = vunpack.c.l.b16 %v2807
        %v2843 = vunpack.c.l.b16 %v2808
        %v2844 = vunpack.c.l.b16 %v2809
        %v2845 = vunpack.c.l.b16 %v2810
        %v2846 = vunpack.c.l.b16 %v2811
        %v2847 = vunpack.c.l.b16 %v2812
        %v2848 = vunpack.c.l.b16 %v2813
        %v2849 = vunpack.c.l.b16 %v2814
        %v2850 = vunpack.c.l.b16 %v2815
        %v2851 = vunpack.c.l.b16 %v2816
        %v2852 = vunpack.c.l.b16 %v2817
        %v2853 = vunpack.c.l.b16 %v2818
        %v2854 = vunpack.c.l.b16 %v2819
        %v2855 = vunpack.c.l.b16 %v2820
        %v2856 = vpack.c.b16 %v2841, %v2840
        %v2857 = vpack.c.b16 %v2843, %v2842
        %v2858 = vpack.c.b16 %v2845, %v2844
        %v2859 = vpack.c.b16 %v2847, %v2846
        %v2860 = vpack.c.b16 %v2849, %v2848
        %v2861 = vpack.c.b16 %v2851, %v2850
        %v2862 = vpack.c.b16 %v2853, %v2852
        %v2863 = vpack.c.b16 %v2855, %v2854
        %2872 = vmatprep.subr.bf16.mxu0 0
        %2873 = vmatpush1.bf16.msra.mxu0 %v2856
        %2874 = vmatprep.subr.bf16.mxu0 0
        %2875 = vmatpush1.bf16.msra.mxu0 %v2857
        %2876 = vmatprep.subr.bf16.mxu0 0
        %2877 = vmatpush1.bf16.msra.mxu0 %v2858
        %2878 = vmatprep.subr.bf16.mxu0 0
        %2879 = vmatpush1.bf16.msra.mxu0 %v2859
        %2880 = vmatprep.subr.bf16.mxu0 0
        %2881 = vmatpush1.bf16.msra.mxu0 %v2860
        %2882 = vmatprep.subr.bf16.mxu0 0
        %2883 = vmatpush1.bf16.msra.mxu0 %v2861
        %2884 = vmatprep.subr.bf16.mxu0 0
        %2885 = vmatpush1.bf16.msra.mxu0 %v2862
        %2886 = vmatprep.subr.bf16.mxu0 0
        %2887 = vmatpush1.bf16.msra.mxu0 %v2863
        %2888 = vmatprep.subr.bf16.mxu0 0
        %2889 = vmatpush1.bf16.msra.mxu0 0
        %2890 = vmatprep.subr.bf16.mxu0 0
        %2891 = vmatpush1.bf16.msra.mxu0 0
        %2892 = vmatprep.subr.bf16.mxu0 0
        %2893 = vmatpush1.bf16.msra.mxu0 0
        %2894 = vmatprep.subr.bf16.mxu0 0
        %2895 = vmatpush1.bf16.msra.mxu0 0
        %2896 = vmatprep.subr.bf16.mxu0 0
        %2897 = vmatpush1.bf16.msra.mxu0 0
        %2898 = vmatprep.subr.bf16.mxu0 0
        %2899 = vmatpush1.bf16.msra.mxu0 0
        %2900 = vmatprep.subr.bf16.mxu0 0
        %2901 = vmatpush1.bf16.msra.mxu0 0
        %2902 = vmatprep.subr.bf16.mxu0 0
        %2903 = vmatpush1.bf16.msra.mxu0 0
        %2904 = vmatprep.mubr.bf16.mxu0 0
        %2905 = vmatmul.mubr.bf16.gmra.mrb[0].mxu0 %v2822
        %v2906 = vpop.f32.mrb[0].mxu0
        %v2907 = vadd.f32 0.0, %v2906
        %v2908 = vpop.f32.mrb[0].mxu0
        %v2909 = vpop.f32.mrb[0].mxu0
        %v2910 = vpop.f32.mrb[0].mxu0
        %2911 = vdwg.mxu0
        %v2912 = vadd.f32 %v2803, %v2907
        %s2913 = scalar_lea.vmem %s4, 192
        %v2914 = vld [vmem:[%s2913] sm:$0xf]
        %v2915 = vld [vmem:[%s2913 + $0x4] sm:$0xf]
        %v2916 = vld [vmem:[%s2913 + $0x8] sm:$0xf]
        %v2917 = vld [vmem:[%s2913 + $0xc] sm:$0xf]
        %v2918 = vld [vmem:[%s2913 + $0x10] sm:$0xf]
        %v2919 = vld [vmem:[%s2913 + $0x14] sm:$0xf]
        %v2920 = vld [vmem:[%s2913 + $0x18] sm:$0xf]
        %v2921 = vld [vmem:[%s2913 + $0x1c] sm:$0xf]
        %v2922 = vld [vmem:[%s2913 + $0x20] sm:$0xf]
        %v2923 = vld [vmem:[%s2913 + $0x24] sm:$0xf]
        %v2924 = vld [vmem:[%s2913 + $0x28] sm:$0xf]
        %v2925 = vld [vmem:[%s2913 + $0x2c] sm:$0xf]
        %v2926 = vld [vmem:[%s2913 + $0x30] sm:$0xf]
        %v2927 = vld [vmem:[%s2913 + $0x34] sm:$0xf]
        %v2928 = vld [vmem:[%s2913 + $0x38] sm:$0xf]
        %v2929 = vld [vmem:[%s2913 + $0x3c] sm:$0xf]
        %v2930 = vrot.slane %v2712, 1
        %v2948 = vunpack.c.l.b16 %v2914
        %v2949 = vunpack.c.l.b16 %v2915
        %v2950 = vunpack.c.l.b16 %v2916
        %v2951 = vunpack.c.l.b16 %v2917
        %v2952 = vunpack.c.l.b16 %v2918
        %v2953 = vunpack.c.l.b16 %v2919
        %v2954 = vunpack.c.l.b16 %v2920
        %v2955 = vunpack.c.l.b16 %v2921
        %v2956 = vunpack.c.l.b16 %v2922
        %v2957 = vunpack.c.l.b16 %v2923
        %v2958 = vunpack.c.l.b16 %v2924
        %v2959 = vunpack.c.l.b16 %v2925
        %v2960 = vunpack.c.l.b16 %v2926
        %v2961 = vunpack.c.l.b16 %v2927
        %v2962 = vunpack.c.l.b16 %v2928
        %v2963 = vunpack.c.l.b16 %v2929
        %v2964 = vpack.c.b16 %v2949, %v2948
        %v2965 = vpack.c.b16 %v2951, %v2950
        %v2966 = vpack.c.b16 %v2953, %v2952
        %v2967 = vpack.c.b16 %v2955, %v2954
        %v2968 = vpack.c.b16 %v2957, %v2956
        %v2969 = vpack.c.b16 %v2959, %v2958
        %v2970 = vpack.c.b16 %v2961, %v2960
        %v2971 = vpack.c.b16 %v2963, %v2962
        %2980 = vmatprep.subr.bf16.mxu0 0
        %2981 = vmatpush1.bf16.msra.mxu0 %v2964
        %2982 = vmatprep.subr.bf16.mxu0 0
        %2983 = vmatpush1.bf16.msra.mxu0 %v2965
        %2984 = vmatprep.subr.bf16.mxu0 0
        %2985 = vmatpush1.bf16.msra.mxu0 %v2966
        %2986 = vmatprep.subr.bf16.mxu0 0
        %2987 = vmatpush1.bf16.msra.mxu0 %v2967
        %2988 = vmatprep.subr.bf16.mxu0 0
        %2989 = vmatpush1.bf16.msra.mxu0 %v2968
        %2990 = vmatprep.subr.bf16.mxu0 0
        %2991 = vmatpush1.bf16.msra.mxu0 %v2969
        %2992 = vmatprep.subr.bf16.mxu0 0
        %2993 = vmatpush1.bf16.msra.mxu0 %v2970
        %2994 = vmatprep.subr.bf16.mxu0 0
        %2995 = vmatpush1.bf16.msra.mxu0 %v2971
        %2996 = vmatprep.subr.bf16.mxu0 0
        %2997 = vmatpush1.bf16.msra.mxu0 0
        %2998 = vmatprep.subr.bf16.mxu0 0
        %2999 = vmatpush1.bf16.msra.mxu0 0
        %3000 = vmatprep.subr.bf16.mxu0 0
        %3001 = vmatpush1.bf16.msra.mxu0 0
        %3002 = vmatprep.subr.bf16.mxu0 0
        %3003 = vmatpush1.bf16.msra.mxu0 0
        %3004 = vmatprep.subr.bf16.mxu0 0
        %3005 = vmatpush1.bf16.msra.mxu0 0
        %3006 = vmatprep.subr.bf16.mxu0 0
        %3007 = vmatpush1.bf16.msra.mxu0 0
        %3008 = vmatprep.subr.bf16.mxu0 0
        %3009 = vmatpush1.bf16.msra.mxu0 0
        %3010 = vmatprep.subr.bf16.mxu0 0
        %3011 = vmatpush1.bf16.msra.mxu0 0
        %3012 = vmatprep.mubr.bf16.mxu0 0
        %3013 = vmatmul.mubr.bf16.gmra.mrb[0].mxu0 %v2930
        %v3014 = vpop.f32.mrb[0].mxu0
        %v3015 = vadd.f32 0.0, %v3014
        %v3016 = vpop.f32.mrb[0].mxu0
        %v3017 = vpop.f32.mrb[0].mxu0
        %v3018 = vpop.f32.mrb[0].mxu0
        %3019 = vdwg.mxu0
        %v3020 = vadd.f32 %v2912, %v3015
        %s3021 = scalar_lea.vmem %s4, 256
        %v3022 = vld [vmem:[%s3021] sm:$0xf]
        %v3023 = vld [vmem:[%s3021 + $0x4] sm:$0xf]
        %v3024 = vld [vmem:[%s3021 + $0x8] sm:$0xf]
        %v3025 = vld [vmem:[%s3021 + $0xc] sm:$0xf]
        %v3026 = vld [vmem:[%s3021 + $0x10] sm:$0xf]
        %v3027 = vld [vmem:[%s3021 + $0x14] sm:$0xf]
        %v3028 = vld [vmem:[%s3021 + $0x18] sm:$0xf]
        %v3029 = vld [vmem:[%s3021 + $0x1c] sm:$0xf]
        %v3030 = vld [vmem:[%s3021 + $0x20] sm:$0xf]
        %v3031 = vld [vmem:[%s3021 + $0x24] sm:$0xf]
        %v3032 = vld [vmem:[%s3021 + $0x28] sm:$0xf]
        %v3033 = vld [vmem:[%s3021 + $0x2c] sm:$0xf]
        %v3034 = vld [vmem:[%s3021 + $0x30] sm:$0xf]
        %v3035 = vld [vmem:[%s3021 + $0x34] sm:$0xf]
        %v3036 = vld [vmem:[%s3021 + $0x38] sm:$0xf]
        %v3037 = vld [vmem:[%s3021 + $0x3c] sm:$0xf]
        %v3038 = vrot.slane %v2587, 2
        %v3056 = vunpack.c.l.b16 %v3022
        %v3057 = vunpack.c.l.b16 %v3023
        %v3058 = vunpack.c.l.b16 %v3024
        %v3059 = vunpack.c.l.b16 %v3025
        %v3060 = vunpack.c.l.b16 %v3026
        %v3061 = vunpack.c.l.b16 %v3027
        %v3062 = vunpack.c.l.b16 %v3028
        %v3063 = vunpack.c.l.b16 %v3029
        %v3064 = vunpack.c.l.b16 %v3030
        %v3065 = vunpack.c.l.b16 %v3031
        %v3066 = vunpack.c.l.b16 %v3032
        %v3067 = vunpack.c.l.b16 %v3033
        %v3068 = vunpack.c.l.b16 %v3034
        %v3069 = vunpack.c.l.b16 %v3035
        %v3070 = vunpack.c.l.b16 %v3036
        %v3071 = vunpack.c.l.b16 %v3037
        %v3072 = vpack.c.b16 %v3057, %v3056
        %v3073 = vpack.c.b16 %v3059, %v3058
        %v3074 = vpack.c.b16 %v3061, %v3060
        %v3075 = vpack.c.b16 %v3063, %v3062
        %v3076 = vpack.c.b16 %v3065, %v3064
        %v3077 = vpack.c.b16 %v3067, %v3066
        %v3078 = vpack.c.b16 %v3069, %v3068
        %v3079 = vpack.c.b16 %v3071, %v3070
        %3088 = vmatprep.subr.bf16.mxu0 0
        %3089 = vmatpush1.bf16.msra.mxu0 %v3072
        %3090 = vmatprep.subr.bf16.mxu0 0
        %3091 = vmatpush1.bf16.msra.mxu0 %v3073
        %3092 = vmatprep.subr.bf16.mxu0 0
        %3093 = vmatpush1.bf16.msra.mxu0 %v3074
        %3094 = vmatprep.subr.bf16.mxu0 0
        %3095 = vmatpush1.bf16.msra.mxu0 %v3075
        %3096 = vmatprep.subr.bf16.mxu0 0
        %3097 = vmatpush1.bf16.msra.mxu0 %v3076
        %3098 = vmatprep.subr.bf16.mxu0 0
        %3099 = vmatpush1.bf16.msra.mxu0 %v3077
        %3100 = vmatprep.subr.bf16.mxu0 0
        %3101 = vmatpush1.bf16.msra.mxu0 %v3078
        %3102 = vmatprep.subr.bf16.mxu0 0
        %3103 = vmatpush1.bf16.msra.mxu0 %v3079
        %3104 = vmatprep.subr.bf16.mxu0 0
        %3105 = vmatpush1.bf16.msra.mxu0 0
        %3106 = vmatprep.subr.bf16.mxu0 0
        %3107 = vmatpush1.bf16.msra.mxu0 0
        %3108 = vmatprep.subr.bf16.mxu0 0
        %3109 = vmatpush1.bf16.msra.mxu0 0
        %3110 = vmatprep.subr.bf16.mxu0 0
        %3111 = vmatpush1.bf16.msra.mxu0 0
        %3112 = vmatprep.subr.bf16.mxu0 0
        %3113 = vmatpush1.bf16.msra.mxu0 0
        %3114 = vmatprep.subr.bf16.mxu0 0
        %3115 = vmatpush1.bf16.msra.mxu0 0
        %3116 = vmatprep.subr.bf16.mxu0 0
        %3117 = vmatpush1.bf16.msra.mxu0 0
        %3118 = vmatprep.subr.bf16.mxu0 0
        %3119 = vmatpush1.bf16.msra.mxu0 0
        %3120 = vmatprep.mubr.bf16.mxu0 0
        %3121 = vmatmul.mubr.bf16.gmra.mrb[0].mxu0 %v3038
        %v3122 = vpop.f32.mrb[0].mxu0
        %v3123 = vadd.f32 0.0, %v3122
        %v3124 = vpop.f32.mrb[0].mxu0
        %v3125 = vpop.f32.mrb[0].mxu0
        %v3126 = vpop.f32.mrb[0].mxu0
        %3127 = vdwg.mxu0
        %v3128 = vadd.f32 %v3020, %v3123
        %s3129 = scalar_lea.vmem %s4, 320
        %v3130 = vld [vmem:[%s3129] sm:$0xf]
        %v3131 = vld [vmem:[%s3129 + $0x4] sm:$0xf]
        %v3132 = vld [vmem:[%s3129 + $0x8] sm:$0xf]
        %v3133 = vld [vmem:[%s3129 + $0xc] sm:$0xf]
        %v3134 = vld [vmem:[%s3129 + $0x10] sm:$0xf]
        %v3135 = vld [vmem:[%s3129 + $0x14] sm:$0xf]
        %v3136 = vld [vmem:[%s3129 + $0x18] sm:$0xf]
        %v3137 = vld [vmem:[%s3129 + $0x1c] sm:$0xf]
        %v3138 = vld [vmem:[%s3129 + $0x20] sm:$0xf]
        %v3139 = vld [vmem:[%s3129 + $0x24] sm:$0xf]
        %v3140 = vld [vmem:[%s3129 + $0x28] sm:$0xf]
        %v3141 = vld [vmem:[%s3129 + $0x2c] sm:$0xf]
        %v3142 = vld [vmem:[%s3129 + $0x30] sm:$0xf]
        %v3143 = vld [vmem:[%s3129 + $0x34] sm:$0xf]
        %v3144 = vld [vmem:[%s3129 + $0x38] sm:$0xf]
        %v3145 = vld [vmem:[%s3129 + $0x3c] sm:$0xf]
        %v3146 = vrot.slane %v2712, 2
        %v3164 = vunpack.c.l.b16 %v3130
        %v3165 = vunpack.c.l.b16 %v3131
        %v3166 = vunpack.c.l.b16 %v3132
        %v3167 = vunpack.c.l.b16 %v3133
        %v3168 = vunpack.c.l.b16 %v3134
        %v3169 = vunpack.c.l.b16 %v3135
        %v3170 = vunpack.c.l.b16 %v3136
        %v3171 = vunpack.c.l.b16 %v3137
        %v3172 = vunpack.c.l.b16 %v3138
        %v3173 = vunpack.c.l.b16 %v3139
        %v3174 = vunpack.c.l.b16 %v3140
        %v3175 = vunpack.c.l.b16 %v3141
        %v3176 = vunpack.c.l.b16 %v3142
        %v3177 = vunpack.c.l.b16 %v3143
        %v3178 = vunpack.c.l.b16 %v3144
        %v3179 = vunpack.c.l.b16 %v3145
        %v3180 = vpack.c.b16 %v3165, %v3164
        %v3181 = vpack.c.b16 %v3167, %v3166
        %v3182 = vpack.c.b16 %v3169, %v3168
        %v3183 = vpack.c.b16 %v3171, %v3170
        %v3184 = vpack.c.b16 %v3173, %v3172
        %v3185 = vpack.c.b16 %v3175, %v3174
        %v3186 = vpack.c.b16 %v3177, %v3176
        %v3187 = vpack.c.b16 %v3179, %v3178
        %3196 = vmatprep.subr.bf16.mxu0 0
        %3197 = vmatpush1.bf16.msra.mxu0 %v3180
        %3198 = vmatprep.subr.bf16.mxu0 0
        %3199 = vmatpush1.bf16.msra.mxu0 %v3181
        %3200 = vmatprep.subr.bf16.mxu0 0
        %3201 = vmatpush1.bf16.msra.mxu0 %v3182
        %3202 = vmatprep.subr.bf16.mxu0 0
        %3203 = vmatpush1.bf16.msra.mxu0 %v3183
        %3204 = vmatprep.subr.bf16.mxu0 0
        %3205 = vmatpush1.bf16.msra.mxu0 %v3184
        %3206 = vmatprep.subr.bf16.mxu0 0
        %3207 = vmatpush1.bf16.msra.mxu0 %v3185
        %3208 = vmatprep.subr.bf16.mxu0 0
        %3209 = vmatpush1.bf16.msra.mxu0 %v3186
        %3210 = vmatprep.subr.bf16.mxu0 0
        %3211 = vmatpush1.bf16.msra.mxu0 %v3187
        %3212 = vmatprep.subr.bf16.mxu0 0
        %3213 = vmatpush1.bf16.msra.mxu0 0
        %3214 = vmatprep.subr.bf16.mxu0 0
        %3215 = vmatpush1.bf16.msra.mxu0 0
        %3216 = vmatprep.subr.bf16.mxu0 0
        %3217 = vmatpush1.bf16.msra.mxu0 0
        %3218 = vmatprep.subr.bf16.mxu0 0
        %3219 = vmatpush1.bf16.msra.mxu0 0
        %3220 = vmatprep.subr.bf16.mxu0 0
        %3221 = vmatpush1.bf16.msra.mxu0 0
        %3222 = vmatprep.subr.bf16.mxu0 0
        %3223 = vmatpush1.bf16.msra.mxu0 0
        %3224 = vmatprep.subr.bf16.mxu0 0
        %3225 = vmatpush1.bf16.msra.mxu0 0
        %3226 = vmatprep.subr.bf16.mxu0 0
        %3227 = vmatpush1.bf16.msra.mxu0 0
        %3228 = vmatprep.mubr.bf16.mxu0 0
        %3229 = vmatmul.mubr.bf16.gmra.mrb[0].mxu0 %v3146
        %v3230 = vpop.f32.mrb[0].mxu0
        %v3231 = vadd.f32 0.0, %v3230
        %v3232 = vpop.f32.mrb[0].mxu0
        %v3233 = vpop.f32.mrb[0].mxu0
        %v3234 = vpop.f32.mrb[0].mxu0
        %3235 = vdwg.mxu0
        %v3236 = vadd.f32 %v3128, %v3231
        %s3237 = scalar_lea.vmem %s4, 384
        %v3238 = vld [vmem:[%s3237] sm:$0xf]
        %v3239 = vld [vmem:[%s3237 + $0x4] sm:$0xf]
        %v3240 = vld [vmem:[%s3237 + $0x8] sm:$0xf]
        %v3241 = vld [vmem:[%s3237 + $0xc] sm:$0xf]
        %v3242 = vld [vmem:[%s3237 + $0x10] sm:$0xf]
        %v3243 = vld [vmem:[%s3237 + $0x14] sm:$0xf]
        %v3244 = vld [vmem:[%s3237 + $0x18] sm:$0xf]
        %v3245 = vld [vmem:[%s3237 + $0x1c] sm:$0xf]
        %v3246 = vld [vmem:[%s3237 + $0x20] sm:$0xf]
        %v3247 = vld [vmem:[%s3237 + $0x24] sm:$0xf]
        %v3248 = vld [vmem:[%s3237 + $0x28] sm:$0xf]
        %v3249 = vld [vmem:[%s3237 + $0x2c] sm:$0xf]
        %v3250 = vld [vmem:[%s3237 + $0x30] sm:$0xf]
        %v3251 = vld [vmem:[%s3237 + $0x34] sm:$0xf]
        %v3252 = vld [vmem:[%s3237 + $0x38] sm:$0xf]
        %v3253 = vld [vmem:[%s3237 + $0x3c] sm:$0xf]
        %v3254 = vrot.slane %v2587, 3
        %v3272 = vunpack.c.l.b16 %v3238
        %v3273 = vunpack.c.l.b16 %v3239
        %v3274 = vunpack.c.l.b16 %v3240
        %v3275 = vunpack.c.l.b16 %v3241
        %v3276 = vunpack.c.l.b16 %v3242
        %v3277 = vunpack.c.l.b16 %v3243
        %v3278 = vunpack.c.l.b16 %v3244
        %v3279 = vunpack.c.l.b16 %v3245
        %v3280 = vunpack.c.l.b16 %v3246
        %v3281 = vunpack.c.l.b16 %v3247
        %v3282 = vunpack.c.l.b16 %v3248
        %v3283 = vunpack.c.l.b16 %v3249
        %v3284 = vunpack.c.l.b16 %v3250
        %v3285 = vunpack.c.l.b16 %v3251
        %v3286 = vunpack.c.l.b16 %v3252
        %v3287 = vunpack.c.l.b16 %v3253
        %v3288 = vpack.c.b16 %v3273, %v3272
        %v3289 = vpack.c.b16 %v3275, %v3274
        %v3290 = vpack.c.b16 %v3277, %v3276
        %v3291 = vpack.c.b16 %v3279, %v3278
        %v3292 = vpack.c.b16 %v3281, %v3280
        %v3293 = vpack.c.b16 %v3283, %v3282
        %v3294 = vpack.c.b16 %v3285, %v3284
        %v3295 = vpack.c.b16 %v3287, %v3286
        %3304 = vmatprep.subr.bf16.mxu0 0
        %3305 = vmatpush1.bf16.msra.mxu0 %v3288
        %3306 = vmatprep.subr.bf16.mxu0 0
        %3307 = vmatpush1.bf16.msra.mxu0 %v3289
        %3308 = vmatprep.subr.bf16.mxu0 0
        %3309 = vmatpush1.bf16.msra.mxu0 %v3290
        %3310 = vmatprep.subr.bf16.mxu0 0
        %3311 = vmatpush1.bf16.msra.mxu0 %v3291
        %3312 = vmatprep.subr.bf16.mxu0 0
        %3313 = vmatpush1.bf16.msra.mxu0 %v3292
        %3314 = vmatprep.subr.bf16.mxu0 0
        %3315 = vmatpush1.bf16.msra.mxu0 %v3293
        %3316 = vmatprep.subr.bf16.mxu0 0
        %3317 = vmatpush1.bf16.msra.mxu0 %v3294
        %3318 = vmatprep.subr.bf16.mxu0 0
        %3319 = vmatpush1.bf16.msra.mxu0 %v3295
        %3320 = vmatprep.subr.bf16.mxu0 0
        %3321 = vmatpush1.bf16.msra.mxu0 0
        %3322 = vmatprep.subr.bf16.mxu0 0
        %3323 = vmatpush1.bf16.msra.mxu0 0
        %3324 = vmatprep.subr.bf16.mxu0 0
        %3325 = vmatpush1.bf16.msra.mxu0 0
        %3326 = vmatprep.subr.bf16.mxu0 0
        %3327 = vmatpush1.bf16.msra.mxu0 0
        %3328 = vmatprep.subr.bf16.mxu0 0
        %3329 = vmatpush1.bf16.msra.mxu0 0
        %3330 = vmatprep.subr.bf16.mxu0 0
        %3331 = vmatpush1.bf16.msra.mxu0 0
        %3332 = vmatprep.subr.bf16.mxu0 0
        %3333 = vmatpush1.bf16.msra.mxu0 0
        %3334 = vmatprep.subr.bf16.mxu0 0
        %3335 = vmatpush1.bf16.msra.mxu0 0
        %3336 = vmatprep.mubr.bf16.mxu0 0
        %3337 = vmatmul.mubr.bf16.gmra.mrb[0].mxu0 %v3254
        %v3338 = vpop.f32.mrb[0].mxu0
        %v3339 = vadd.f32 0.0, %v3338
        %v3340 = vpop.f32.mrb[0].mxu0
        %v3341 = vpop.f32.mrb[0].mxu0
        %v3342 = vpop.f32.mrb[0].mxu0
        %3343 = vdwg.mxu0
        %v3344 = vadd.f32 %v3236, %v3339
        %s3345 = scalar_lea.vmem %s4, 448
        %v3346 = vld [vmem:[%s3345] sm:$0xf]
        %v3347 = vld [vmem:[%s3345 + $0x4] sm:$0xf]
        %v3348 = vld [vmem:[%s3345 + $0x8] sm:$0xf]
        %v3349 = vld [vmem:[%s3345 + $0xc] sm:$0xf]
        %v3350 = vld [vmem:[%s3345 + $0x10] sm:$0xf]
        %v3351 = vld [vmem:[%s3345 + $0x14] sm:$0xf]
        %v3352 = vld [vmem:[%s3345 + $0x18] sm:$0xf]
        %v3353 = vld [vmem:[%s3345 + $0x1c] sm:$0xf]
        %v3354 = vld [vmem:[%s3345 + $0x20] sm:$0xf]
        %v3355 = vld [vmem:[%s3345 + $0x24] sm:$0xf]
        %v3356 = vld [vmem:[%s3345 + $0x28] sm:$0xf]
        %v3357 = vld [vmem:[%s3345 + $0x2c] sm:$0xf]
        %v3358 = vld [vmem:[%s3345 + $0x30] sm:$0xf]
        %v3359 = vld [vmem:[%s3345 + $0x34] sm:$0xf]
        %v3360 = vld [vmem:[%s3345 + $0x38] sm:$0xf]
        %v3361 = vld [vmem:[%s3345 + $0x3c] sm:$0xf]
        %v3362 = vrot.slane %v2712, 3
        %v3380 = vunpack.c.l.b16 %v3346
        %v3381 = vunpack.c.l.b16 %v3347
        %v3382 = vunpack.c.l.b16 %v3348
        %v3383 = vunpack.c.l.b16 %v3349
        %v3384 = vunpack.c.l.b16 %v3350
        %v3385 = vunpack.c.l.b16 %v3351
        %v3386 = vunpack.c.l.b16 %v3352
        %v3387 = vunpack.c.l.b16 %v3353
        %v3388 = vunpack.c.l.b16 %v3354
        %v3389 = vunpack.c.l.b16 %v3355
        %v3390 = vunpack.c.l.b16 %v3356
        %v3391 = vunpack.c.l.b16 %v3357
        %v3392 = vunpack.c.l.b16 %v3358
        %v3393 = vunpack.c.l.b16 %v3359
        %v3394 = vunpack.c.l.b16 %v3360
        %v3395 = vunpack.c.l.b16 %v3361
        %v3396 = vpack.c.b16 %v3381, %v3380
        %v3397 = vpack.c.b16 %v3383, %v3382
        %v3398 = vpack.c.b16 %v3385, %v3384
        %v3399 = vpack.c.b16 %v3387, %v3386
        %v3400 = vpack.c.b16 %v3389, %v3388
        %v3401 = vpack.c.b16 %v3391, %v3390
        %v3402 = vpack.c.b16 %v3393, %v3392
        %v3403 = vpack.c.b16 %v3395, %v3394
        %3412 = vmatprep.subr.bf16.mxu0 0
        %3413 = vmatpush1.bf16.msra.mxu0 %v3396
        %3414 = vmatprep.subr.bf16.mxu0 0
        %3415 = vmatpush1.bf16.msra.mxu0 %v3397
        %3416 = vmatprep.subr.bf16.mxu0 0
        %3417 = vmatpush1.bf16.msra.mxu0 %v3398
        %3418 = vmatprep.subr.bf16.mxu0 0
        %3419 = vmatpush1.bf16.msra.mxu0 %v3399
        %3420 = vmatprep.subr.bf16.mxu0 0
        %3421 = vmatpush1.bf16.msra.mxu0 %v3400
        %3422 = vmatprep.subr.bf16.mxu0 0
        %3423 = vmatpush1.bf16.msra.mxu0 %v3401
        %3424 = vmatprep.subr.bf16.mxu0 0
        %3425 = vmatpush1.bf16.msra.mxu0 %v3402
        %3426 = vmatprep.subr.bf16.mxu0 0
        %3427 = vmatpush1.bf16.msra.mxu0 %v3403
        %3428 = vmatprep.subr.bf16.mxu0 0
        %3429 = vmatpush1.bf16.msra.mxu0 0
        %3430 = vmatprep.subr.bf16.mxu0 0
        %3431 = vmatpush1.bf16.msra.mxu0 0
        %3432 = vmatprep.subr.bf16.mxu0 0
        %3433 = vmatpush1.bf16.msra.mxu0 0
        %3434 = vmatprep.subr.bf16.mxu0 0
        %3435 = vmatpush1.bf16.msra.mxu0 0
        %3436 = vmatprep.subr.bf16.mxu0 0
        %3437 = vmatpush1.bf16.msra.mxu0 0
        %3438 = vmatprep.subr.bf16.mxu0 0
        %3439 = vmatpush1.bf16.msra.mxu0 0
        %3440 = vmatprep.subr.bf16.mxu0 0
        %3441 = vmatpush1.bf16.msra.mxu0 0
        %3442 = vmatprep.subr.bf16.mxu0 0
        %3443 = vmatpush1.bf16.msra.mxu0 0
        %3444 = vmatprep.mubr.bf16.mxu0 0
        %3445 = vmatmul.mubr.bf16.gmra.mrb[0].mxu0 %v3362
        %v3446 = vpop.f32.mrb[0].mxu0
        %v3447 = vadd.f32 0.0, %v3446
        %v3448 = vpop.f32.mrb[0].mxu0
        %v3449 = vpop.f32.mrb[0].mxu0
        %v3450 = vpop.f32.mrb[0].mxu0
        %3451 = vdwg.mxu0
        %v3452 = vadd.f32 %v3344, %v3447
        %s3453 = scalar_lea.vmem %s4, 512
        %v3454 = vld [vmem:[%s3453] sm:$0xf]
        %v3455 = vld [vmem:[%s3453 + $0x4] sm:$0xf]
        %v3456 = vld [vmem:[%s3453 + $0x8] sm:$0xf]
        %v3457 = vld [vmem:[%s3453 + $0xc] sm:$0xf]
        %v3458 = vld [vmem:[%s3453 + $0x10] sm:$0xf]
        %v3459 = vld [vmem:[%s3453 + $0x14] sm:$0xf]
        %v3460 = vld [vmem:[%s3453 + $0x18] sm:$0xf]
        %v3461 = vld [vmem:[%s3453 + $0x1c] sm:$0xf]
        %v3462 = vld [vmem:[%s3453 + $0x20] sm:$0xf]
        %v3463 = vld [vmem:[%s3453 + $0x24] sm:$0xf]
        %v3464 = vld [vmem:[%s3453 + $0x28] sm:$0xf]
        %v3465 = vld [vmem:[%s3453 + $0x2c] sm:$0xf]
        %v3466 = vld [vmem:[%s3453 + $0x30] sm:$0xf]
        %v3467 = vld [vmem:[%s3453 + $0x34] sm:$0xf]
        %v3468 = vld [vmem:[%s3453 + $0x38] sm:$0xf]
        %v3469 = vld [vmem:[%s3453 + $0x3c] sm:$0xf]
        %v3470 = vrot.slane %v2587, 4
        %v3488 = vunpack.c.l.b16 %v3454
        %v3489 = vunpack.c.l.b16 %v3455
        %v3490 = vunpack.c.l.b16 %v3456
        %v3491 = vunpack.c.l.b16 %v3457
        %v3492 = vunpack.c.l.b16 %v3458
        %v3493 = vunpack.c.l.b16 %v3459
        %v3494 = vunpack.c.l.b16 %v3460
        %v3495 = vunpack.c.l.b16 %v3461
        %v3496 = vunpack.c.l.b16 %v3462
        %v3497 = vunpack.c.l.b16 %v3463
        %v3498 = vunpack.c.l.b16 %v3464
        %v3499 = vunpack.c.l.b16 %v3465
        %v3500 = vunpack.c.l.b16 %v3466
        %v3501 = vunpack.c.l.b16 %v3467
        %v3502 = vunpack.c.l.b16 %v3468
        %v3503 = vunpack.c.l.b16 %v3469
        %v3504 = vpack.c.b16 %v3489, %v3488
        %v3505 = vpack.c.b16 %v3491, %v3490
        %v3506 = vpack.c.b16 %v3493, %v3492
        %v3507 = vpack.c.b16 %v3495, %v3494
        %v3508 = vpack.c.b16 %v3497, %v3496
        %v3509 = vpack.c.b16 %v3499, %v3498
        %v3510 = vpack.c.b16 %v3501, %v3500
        %v3511 = vpack.c.b16 %v3503, %v3502
        %3520 = vmatprep.subr.bf16.mxu0 0
        %3521 = vmatpush1.bf16.msra.mxu0 %v3504
        %3522 = vmatprep.subr.bf16.mxu0 0
        %3523 = vmatpush1.bf16.msra.mxu0 %v3505
        %3524 = vmatprep.subr.bf16.mxu0 0
        %3525 = vmatpush1.bf16.msra.mxu0 %v3506
        %3526 = vmatprep.subr.bf16.mxu0 0
        %3527 = vmatpush1.bf16.msra.mxu0 %v3507
        %3528 = vmatprep.subr.bf16.mxu0 0
        %3529 = vmatpush1.bf16.msra.mxu0 %v3508
        %3530 = vmatprep.subr.bf16.mxu0 0
        %3531 = vmatpush1.bf16.msra.mxu0 %v3509
        %3532 = vmatprep.subr.bf16.mxu0 0
        %3533 = vmatpush1.bf16.msra.mxu0 %v3510
        %3534 = vmatprep.subr.bf16.mxu0 0
        %3535 = vmatpush1.bf16.msra.mxu0 %v3511
        %3536 = vmatprep.subr.bf16.mxu0 0
        %3537 = vmatpush1.bf16.msra.mxu0 0
        %3538 = vmatprep.subr.bf16.mxu0 0
        %3539 = vmatpush1.bf16.msra.mxu0 0
        %3540 = vmatprep.subr.bf16.mxu0 0
        %3541 = vmatpush1.bf16.msra.mxu0 0
        %3542 = vmatprep.subr.bf16.mxu0 0
        %3543 = vmatpush1.bf16.msra.mxu0 0
        %3544 = vmatprep.subr.bf16.mxu0 0
        %3545 = vmatpush1.bf16.msra.mxu0 0
        %3546 = vmatprep.subr.bf16.mxu0 0
        %3547 = vmatpush1.bf16.msra.mxu0 0
        %3548 = vmatprep.subr.bf16.mxu0 0
        %3549 = vmatpush1.bf16.msra.mxu0 0
        %3550 = vmatprep.subr.bf16.mxu0 0
        %3551 = vmatpush1.bf16.msra.mxu0 0
        %3552 = vmatprep.mubr.bf16.mxu0 0
        %3553 = vmatmul.mubr.bf16.gmra.mrb[0].mxu0 %v3470
        %v3554 = vpop.f32.mrb[0].mxu0
        %v3555 = vadd.f32 0.0, %v3554
        %v3556 = vpop.f32.mrb[0].mxu0
        %v3557 = vpop.f32.mrb[0].mxu0
        %v3558 = vpop.f32.mrb[0].mxu0
        %3559 = vdwg.mxu0
        %v3560 = vadd.f32 %v3452, %v3555
        %s3561 = scalar_lea.vmem %s4, 576
        %v3562 = vld [vmem:[%s3561] sm:$0xf]
        %v3563 = vld [vmem:[%s3561 + $0x4] sm:$0xf]
        %v3564 = vld [vmem:[%s3561 + $0x8] sm:$0xf]
        %v3565 = vld [vmem:[%s3561 + $0xc] sm:$0xf]
        %v3566 = vld [vmem:[%s3561 + $0x10] sm:$0xf]
        %v3567 = vld [vmem:[%s3561 + $0x14] sm:$0xf]
        %v3568 = vld [vmem:[%s3561 + $0x18] sm:$0xf]
        %v3569 = vld [vmem:[%s3561 + $0x1c] sm:$0xf]
        %v3570 = vld [vmem:[%s3561 + $0x20] sm:$0xf]
        %v3571 = vld [vmem:[%s3561 + $0x24] sm:$0xf]
        %v3572 = vld [vmem:[%s3561 + $0x28] sm:$0xf]
        %v3573 = vld [vmem:[%s3561 + $0x2c] sm:$0xf]
        %v3574 = vld [vmem:[%s3561 + $0x30] sm:$0xf]
        %v3575 = vld [vmem:[%s3561 + $0x34] sm:$0xf]
        %v3576 = vld [vmem:[%s3561 + $0x38] sm:$0xf]
        %v3577 = vld [vmem:[%s3561 + $0x3c] sm:$0xf]
        %v3578 = vrot.slane %v2712, 4
        %v3596 = vunpack.c.l.b16 %v3562
        %v3597 = vunpack.c.l.b16 %v3563
        %v3598 = vunpack.c.l.b16 %v3564
        %v3599 = vunpack.c.l.b16 %v3565
        %v3600 = vunpack.c.l.b16 %v3566
        %v3601 = vunpack.c.l.b16 %v3567
        %v3602 = vunpack.c.l.b16 %v3568
        %v3603 = vunpack.c.l.b16 %v3569
        %v3604 = vunpack.c.l.b16 %v3570
        %v3605 = vunpack.c.l.b16 %v3571
        %v3606 = vunpack.c.l.b16 %v3572
        %v3607 = vunpack.c.l.b16 %v3573
        %v3608 = vunpack.c.l.b16 %v3574
        %v3609 = vunpack.c.l.b16 %v3575
        %v3610 = vunpack.c.l.b16 %v3576
        %v3611 = vunpack.c.l.b16 %v3577
        %v3612 = vpack.c.b16 %v3597, %v3596
        %v3613 = vpack.c.b16 %v3599, %v3598
        %v3614 = vpack.c.b16 %v3601, %v3600
        %v3615 = vpack.c.b16 %v3603, %v3602
        %v3616 = vpack.c.b16 %v3605, %v3604
        %v3617 = vpack.c.b16 %v3607, %v3606
        %v3618 = vpack.c.b16 %v3609, %v3608
        %v3619 = vpack.c.b16 %v3611, %v3610
        %3628 = vmatprep.subr.bf16.mxu0 0
        %3629 = vmatpush1.bf16.msra.mxu0 %v3612
        %3630 = vmatprep.subr.bf16.mxu0 0
        %3631 = vmatpush1.bf16.msra.mxu0 %v3613
        %3632 = vmatprep.subr.bf16.mxu0 0
        %3633 = vmatpush1.bf16.msra.mxu0 %v3614
        %3634 = vmatprep.subr.bf16.mxu0 0
        %3635 = vmatpush1.bf16.msra.mxu0 %v3615
        %3636 = vmatprep.subr.bf16.mxu0 0
        %3637 = vmatpush1.bf16.msra.mxu0 %v3616
        %3638 = vmatprep.subr.bf16.mxu0 0
        %3639 = vmatpush1.bf16.msra.mxu0 %v3617
        %3640 = vmatprep.subr.bf16.mxu0 0
        %3641 = vmatpush1.bf16.msra.mxu0 %v3618
        %3642 = vmatprep.subr.bf16.mxu0 0
        %3643 = vmatpush1.bf16.msra.mxu0 %v3619
        %3644 = vmatprep.subr.bf16.mxu0 0
        %3645 = vmatpush1.bf16.msra.mxu0 0
        %3646 = vmatprep.subr.bf16.mxu0 0
        %3647 = vmatpush1.bf16.msra.mxu0 0
        %3648 = vmatprep.subr.bf16.mxu0 0
        %3649 = vmatpush1.bf16.msra.mxu0 0
        %3650 = vmatprep.subr.bf16.mxu0 0
        %3651 = vmatpush1.bf16.msra.mxu0 0
        %3652 = vmatprep.subr.bf16.mxu0 0
        %3653 = vmatpush1.bf16.msra.mxu0 0
        %3654 = vmatprep.subr.bf16.mxu0 0
        %3655 = vmatpush1.bf16.msra.mxu0 0
        %3656 = vmatprep.subr.bf16.mxu0 0
        %3657 = vmatpush1.bf16.msra.mxu0 0
        %3658 = vmatprep.subr.bf16.mxu0 0
        %3659 = vmatpush1.bf16.msra.mxu0 0
        %3660 = vmatprep.mubr.bf16.mxu0 0
        %3661 = vmatmul.mubr.bf16.gmra.mrb[0].mxu0 %v3578
        %v3662 = vpop.f32.mrb[0].mxu0
        %v3663 = vadd.f32 0.0, %v3662
        %v3664 = vpop.f32.mrb[0].mxu0
        %v3665 = vpop.f32.mrb[0].mxu0
        %v3666 = vpop.f32.mrb[0].mxu0
        %3667 = vdwg.mxu0
        %v3668 = vadd.f32 %v3560, %v3663
        %s3669 = scalar_lea.vmem %s4, 640
        %v3670 = vld [vmem:[%s3669] sm:$0xf]
        %v3671 = vld [vmem:[%s3669 + $0x4] sm:$0xf]
        %v3672 = vld [vmem:[%s3669 + $0x8] sm:$0xf]
        %v3673 = vld [vmem:[%s3669 + $0xc] sm:$0xf]
        %v3674 = vld [vmem:[%s3669 + $0x10] sm:$0xf]
        %v3675 = vld [vmem:[%s3669 + $0x14] sm:$0xf]
        %v3676 = vld [vmem:[%s3669 + $0x18] sm:$0xf]
        %v3677 = vld [vmem:[%s3669 + $0x1c] sm:$0xf]
        %v3678 = vld [vmem:[%s3669 + $0x20] sm:$0xf]
        %v3679 = vld [vmem:[%s3669 + $0x24] sm:$0xf]
        %v3680 = vld [vmem:[%s3669 + $0x28] sm:$0xf]
        %v3681 = vld [vmem:[%s3669 + $0x2c] sm:$0xf]
        %v3682 = vld [vmem:[%s3669 + $0x30] sm:$0xf]
        %v3683 = vld [vmem:[%s3669 + $0x34] sm:$0xf]
        %v3684 = vld [vmem:[%s3669 + $0x38] sm:$0xf]
        %v3685 = vld [vmem:[%s3669 + $0x3c] sm:$0xf]
        %v3686 = vrot.slane %v2587, 5
        %v3704 = vunpack.c.l.b16 %v3670
        %v3705 = vunpack.c.l.b16 %v3671
        %v3706 = vunpack.c.l.b16 %v3672
        %v3707 = vunpack.c.l.b16 %v3673
        %v3708 = vunpack.c.l.b16 %v3674
        %v3709 = vunpack.c.l.b16 %v3675
        %v3710 = vunpack.c.l.b16 %v3676
        %v3711 = vunpack.c.l.b16 %v3677
        %v3712 = vunpack.c.l.b16 %v3678
        %v3713 = vunpack.c.l.b16 %v3679
        %v3714 = vunpack.c.l.b16 %v3680
        %v3715 = vunpack.c.l.b16 %v3681
        %v3716 = vunpack.c.l.b16 %v3682
        %v3717 = vunpack.c.l.b16 %v3683
        %v3718 = vunpack.c.l.b16 %v3684
        %v3719 = vunpack.c.l.b16 %v3685
        %v3720 = vpack.c.b16 %v3705, %v3704
        %v3721 = vpack.c.b16 %v3707, %v3706
        %v3722 = vpack.c.b16 %v3709, %v3708
        %v3723 = vpack.c.b16 %v3711, %v3710
        %v3724 = vpack.c.b16 %v3713, %v3712
        %v3725 = vpack.c.b16 %v3715, %v3714
        %v3726 = vpack.c.b16 %v3717, %v3716
        %v3727 = vpack.c.b16 %v3719, %v3718
        %3736 = vmatprep.subr.bf16.mxu0 0
        %3737 = vmatpush1.bf16.msra.mxu0 %v3720
        %3738 = vmatprep.subr.bf16.mxu0 0
        %3739 = vmatpush1.bf16.msra.mxu0 %v3721
        %3740 = vmatprep.subr.bf16.mxu0 0
        %3741 = vmatpush1.bf16.msra.mxu0 %v3722
        %3742 = vmatprep.subr.bf16.mxu0 0
        %3743 = vmatpush1.bf16.msra.mxu0 %v3723
        %3744 = vmatprep.subr.bf16.mxu0 0
        %3745 = vmatpush1.bf16.msra.mxu0 %v3724
        %3746 = vmatprep.subr.bf16.mxu0 0
        %3747 = vmatpush1.bf16.msra.mxu0 %v3725
        %3748 = vmatprep.subr.bf16.mxu0 0
        %3749 = vmatpush1.bf16.msra.mxu0 %v3726
        %3750 = vmatprep.subr.bf16.mxu0 0
        %3751 = vmatpush1.bf16.msra.mxu0 %v3727
        %3752 = vmatprep.subr.bf16.mxu0 0
        %3753 = vmatpush1.bf16.msra.mxu0 0
        %3754 = vmatprep.subr.bf16.mxu0 0
        %3755 = vmatpush1.bf16.msra.mxu0 0
        %3756 = vmatprep.subr.bf16.mxu0 0
        %3757 = vmatpush1.bf16.msra.mxu0 0
        %3758 = vmatprep.subr.bf16.mxu0 0
        %3759 = vmatpush1.bf16.msra.mxu0 0
        %3760 = vmatprep.subr.bf16.mxu0 0
        %3761 = vmatpush1.bf16.msra.mxu0 0
        %3762 = vmatprep.subr.bf16.mxu0 0
        %3763 = vmatpush1.bf16.msra.mxu0 0
        %3764 = vmatprep.subr.bf16.mxu0 0
        %3765 = vmatpush1.bf16.msra.mxu0 0
        %3766 = vmatprep.subr.bf16.mxu0 0
        %3767 = vmatpush1.bf16.msra.mxu0 0
        %3768 = vmatprep.mubr.bf16.mxu0 0
        %3769 = vmatmul.mubr.bf16.gmra.mrb[0].mxu0 %v3686
        %v3770 = vpop.f32.mrb[0].mxu0
        %v3771 = vadd.f32 0.0, %v3770
        %v3772 = vpop.f32.mrb[0].mxu0
        %v3773 = vpop.f32.mrb[0].mxu0
        %v3774 = vpop.f32.mrb[0].mxu0
        %3775 = vdwg.mxu0
        %v3776 = vadd.f32 %v3668, %v3771
        %s3777 = scalar_lea.vmem %s4, 704
        %v3778 = vld [vmem:[%s3777] sm:$0xf]
        %v3779 = vld [vmem:[%s3777 + $0x4] sm:$0xf]
        %v3780 = vld [vmem:[%s3777 + $0x8] sm:$0xf]
        %v3781 = vld [vmem:[%s3777 + $0xc] sm:$0xf]
        %v3782 = vld [vmem:[%s3777 + $0x10] sm:$0xf]
        %v3783 = vld [vmem:[%s3777 + $0x14] sm:$0xf]
        %v3784 = vld [vmem:[%s3777 + $0x18] sm:$0xf]
        %v3785 = vld [vmem:[%s3777 + $0x1c] sm:$0xf]
        %v3786 = vld [vmem:[%s3777 + $0x20] sm:$0xf]
        %v3787 = vld [vmem:[%s3777 + $0x24] sm:$0xf]
        %v3788 = vld [vmem:[%s3777 + $0x28] sm:$0xf]
        %v3789 = vld [vmem:[%s3777 + $0x2c] sm:$0xf]
        %v3790 = vld [vmem:[%s3777 + $0x30] sm:$0xf]
        %v3791 = vld [vmem:[%s3777 + $0x34] sm:$0xf]
        %v3792 = vld [vmem:[%s3777 + $0x38] sm:$0xf]
        %v3793 = vld [vmem:[%s3777 + $0x3c] sm:$0xf]
        %v3794 = vrot.slane %v2712, 5
        %v3812 = vunpack.c.l.b16 %v3778
        %v3813 = vunpack.c.l.b16 %v3779
        %v3814 = vunpack.c.l.b16 %v3780
        %v3815 = vunpack.c.l.b16 %v3781
        %v3816 = vunpack.c.l.b16 %v3782
        %v3817 = vunpack.c.l.b16 %v3783
        %v3818 = vunpack.c.l.b16 %v3784
        %v3819 = vunpack.c.l.b16 %v3785
        %v3820 = vunpack.c.l.b16 %v3786
        %v3821 = vunpack.c.l.b16 %v3787
        %v3822 = vunpack.c.l.b16 %v3788
        %v3823 = vunpack.c.l.b16 %v3789
        %v3824 = vunpack.c.l.b16 %v3790
        %v3825 = vunpack.c.l.b16 %v3791
        %v3826 = vunpack.c.l.b16 %v3792
        %v3827 = vunpack.c.l.b16 %v3793
        %v3828 = vpack.c.b16 %v3813, %v3812
        %v3829 = vpack.c.b16 %v3815, %v3814
        %v3830 = vpack.c.b16 %v3817, %v3816
        %v3831 = vpack.c.b16 %v3819, %v3818
        %v3832 = vpack.c.b16 %v3821, %v3820
        %v3833 = vpack.c.b16 %v3823, %v3822
        %v3834 = vpack.c.b16 %v3825, %v3824
        %v3835 = vpack.c.b16 %v3827, %v3826
        %3844 = vmatprep.subr.bf16.mxu0 0
        %3845 = vmatpush1.bf16.msra.mxu0 %v3828
        %3846 = vmatprep.subr.bf16.mxu0 0
        %3847 = vmatpush1.bf16.msra.mxu0 %v3829
        %3848 = vmatprep.subr.bf16.mxu0 0
        %3849 = vmatpush1.bf16.msra.mxu0 %v3830
        %3850 = vmatprep.subr.bf16.mxu0 0
        %3851 = vmatpush1.bf16.msra.mxu0 %v3831
        %3852 = vmatprep.subr.bf16.mxu0 0
        %3853 = vmatpush1.bf16.msra.mxu0 %v3832
        %3854 = vmatprep.subr.bf16.mxu0 0
        %3855 = vmatpush1.bf16.msra.mxu0 %v3833
        %3856 = vmatprep.subr.bf16.mxu0 0
        %3857 = vmatpush1.bf16.msra.mxu0 %v3834
        %3858 = vmatprep.subr.bf16.mxu0 0
        %3859 = vmatpush1.bf16.msra.mxu0 %v3835
        %3860 = vmatprep.subr.bf16.mxu0 0
        %3861 = vmatpush1.bf16.msra.mxu0 0
        %3862 = vmatprep.subr.bf16.mxu0 0
        %3863 = vmatpush1.bf16.msra.mxu0 0
        %3864 = vmatprep.subr.bf16.mxu0 0
        %3865 = vmatpush1.bf16.msra.mxu0 0
        %3866 = vmatprep.subr.bf16.mxu0 0
        %3867 = vmatpush1.bf16.msra.mxu0 0
        %3868 = vmatprep.subr.bf16.mxu0 0
        %3869 = vmatpush1.bf16.msra.mxu0 0
        %3870 = vmatprep.subr.bf16.mxu0 0
        %3871 = vmatpush1.bf16.msra.mxu0 0
        %3872 = vmatprep.subr.bf16.mxu0 0
        %3873 = vmatpush1.bf16.msra.mxu0 0
        %3874 = vmatprep.subr.bf16.mxu0 0
        %3875 = vmatpush1.bf16.msra.mxu0 0
        %3876 = vmatprep.mubr.bf16.mxu0 0
        %3877 = vmatmul.mubr.bf16.gmra.mrb[0].mxu0 %v3794
        %v3878 = vpop.f32.mrb[0].mxu0
        %v3879 = vadd.f32 0.0, %v3878
        %v3880 = vpop.f32.mrb[0].mxu0
        %v3881 = vpop.f32.mrb[0].mxu0
        %v3882 = vpop.f32.mrb[0].mxu0
        %3883 = vdwg.mxu0
        %v3884 = vadd.f32 %v3776, %v3879
        %s3885 = scalar_lea.vmem %s4, 768
        %v3886 = vld [vmem:[%s3885] sm:$0xf]
        %v3887 = vld [vmem:[%s3885 + $0x4] sm:$0xf]
        %v3888 = vld [vmem:[%s3885 + $0x8] sm:$0xf]
        %v3889 = vld [vmem:[%s3885 + $0xc] sm:$0xf]
        %v3890 = vld [vmem:[%s3885 + $0x10] sm:$0xf]
        %v3891 = vld [vmem:[%s3885 + $0x14] sm:$0xf]
        %v3892 = vld [vmem:[%s3885 + $0x18] sm:$0xf]
        %v3893 = vld [vmem:[%s3885 + $0x1c] sm:$0xf]
        %v3894 = vld [vmem:[%s3885 + $0x20] sm:$0xf]
        %v3895 = vld [vmem:[%s3885 + $0x24] sm:$0xf]
        %v3896 = vld [vmem:[%s3885 + $0x28] sm:$0xf]
        %v3897 = vld [vmem:[%s3885 + $0x2c] sm:$0xf]
        %v3898 = vld [vmem:[%s3885 + $0x30] sm:$0xf]
        %v3899 = vld [vmem:[%s3885 + $0x34] sm:$0xf]
        %v3900 = vld [vmem:[%s3885 + $0x38] sm:$0xf]
        %v3901 = vld [vmem:[%s3885 + $0x3c] sm:$0xf]
        %v3902 = vrot.slane %v2587, 6
        %v3920 = vunpack.c.l.b16 %v3886
        %v3921 = vunpack.c.l.b16 %v3887
        %v3922 = vunpack.c.l.b16 %v3888
        %v3923 = vunpack.c.l.b16 %v3889
        %v3924 = vunpack.c.l.b16 %v3890
        %v3925 = vunpack.c.l.b16 %v3891
        %v3926 = vunpack.c.l.b16 %v3892
        %v3927 = vunpack.c.l.b16 %v3893
        %v3928 = vunpack.c.l.b16 %v3894
        %v3929 = vunpack.c.l.b16 %v3895
        %v3930 = vunpack.c.l.b16 %v3896
        %v3931 = vunpack.c.l.b16 %v3897
        %v3932 = vunpack.c.l.b16 %v3898
        %v3933 = vunpack.c.l.b16 %v3899
        %v3934 = vunpack.c.l.b16 %v3900
        %v3935 = vunpack.c.l.b16 %v3901
        %v3936 = vpack.c.b16 %v3921, %v3920
        %v3937 = vpack.c.b16 %v3923, %v3922
        %v3938 = vpack.c.b16 %v3925, %v3924
        %v3939 = vpack.c.b16 %v3927, %v3926
        %v3940 = vpack.c.b16 %v3929, %v3928
        %v3941 = vpack.c.b16 %v3931, %v3930
        %v3942 = vpack.c.b16 %v3933, %v3932
        %v3943 = vpack.c.b16 %v3935, %v3934
        %3952 = vmatprep.subr.bf16.mxu0 0
        %3953 = vmatpush1.bf16.msra.mxu0 %v3936
        %3954 = vmatprep.subr.bf16.mxu0 0
        %3955 = vmatpush1.bf16.msra.mxu0 %v3937
        %3956 = vmatprep.subr.bf16.mxu0 0
        %3957 = vmatpush1.bf16.msra.mxu0 %v3938
        %3958 = vmatprep.subr.bf16.mxu0 0
        %3959 = vmatpush1.bf16.msra.mxu0 %v3939
        %3960 = vmatprep.subr.bf16.mxu0 0
        %3961 = vmatpush1.bf16.msra.mxu0 %v3940
        %3962 = vmatprep.subr.bf16.mxu0 0
        %3963 = vmatpush1.bf16.msra.mxu0 %v3941
        %3964 = vmatprep.subr.bf16.mxu0 0
        %3965 = vmatpush1.bf16.msra.mxu0 %v3942
        %3966 = vmatprep.subr.bf16.mxu0 0
        %3967 = vmatpush1.bf16.msra.mxu0 %v3943
        %3968 = vmatprep.subr.bf16.mxu0 0
        %3969 = vmatpush1.bf16.msra.mxu0 0
        %3970 = vmatprep.subr.bf16.mxu0 0
        %3971 = vmatpush1.bf16.msra.mxu0 0
        %3972 = vmatprep.subr.bf16.mxu0 0
        %3973 = vmatpush1.bf16.msra.mxu0 0
        %3974 = vmatprep.subr.bf16.mxu0 0
        %3975 = vmatpush1.bf16.msra.mxu0 0
        %3976 = vmatprep.subr.bf16.mxu0 0
        %3977 = vmatpush1.bf16.msra.mxu0 0
        %3978 = vmatprep.subr.bf16.mxu0 0
        %3979 = vmatpush1.bf16.msra.mxu0 0
        %3980 = vmatprep.subr.bf16.mxu0 0
        %3981 = vmatpush1.bf16.msra.mxu0 0
        %3982 = vmatprep.subr.bf16.mxu0 0
        %3983 = vmatpush1.bf16.msra.mxu0 0
        %3984 = vmatprep.mubr.bf16.mxu0 0
        %3985 = vmatmul.mubr.bf16.gmra.mrb[0].mxu0 %v3902
        %v3986 = vpop.f32.mrb[0].mxu0
        %v3987 = vadd.f32 0.0, %v3986
        %v3988 = vpop.f32.mrb[0].mxu0
        %v3989 = vpop.f32.mrb[0].mxu0
        %v3990 = vpop.f32.mrb[0].mxu0
        %3991 = vdwg.mxu0
        %v3992 = vadd.f32 %v3884, %v3987
        %s3993 = scalar_lea.vmem %s4, 832
        %v3994 = vld [vmem:[%s3993] sm:$0xf]
        %v3995 = vld [vmem:[%s3993 + $0x4] sm:$0xf]
        %v3996 = vld [vmem:[%s3993 + $0x8] sm:$0xf]
        %v3997 = vld [vmem:[%s3993 + $0xc] sm:$0xf]
        %v3998 = vld [vmem:[%s3993 + $0x10] sm:$0xf]
        %v3999 = vld [vmem:[%s3993 + $0x14] sm:$0xf]
        %v4000 = vld [vmem:[%s3993 + $0x18] sm:$0xf]
        %v4001 = vld [vmem:[%s3993 + $0x1c] sm:$0xf]
        %v4002 = vld [vmem:[%s3993 + $0x20] sm:$0xf]
        %v4003 = vld [vmem:[%s3993 + $0x24] sm:$0xf]
        %v4004 = vld [vmem:[%s3993 + $0x28] sm:$0xf]
        %v4005 = vld [vmem:[%s3993 + $0x2c] sm:$0xf]
        %v4006 = vld [vmem:[%s3993 + $0x30] sm:$0xf]
        %v4007 = vld [vmem:[%s3993 + $0x34] sm:$0xf]
        %v4008 = vld [vmem:[%s3993 + $0x38] sm:$0xf]
        %v4009 = vld [vmem:[%s3993 + $0x3c] sm:$0xf]
        %v4010 = vrot.slane %v2712, 6
        %v4028 = vunpack.c.l.b16 %v3994
        %v4029 = vunpack.c.l.b16 %v3995
        %v4030 = vunpack.c.l.b16 %v3996
        %v4031 = vunpack.c.l.b16 %v3997
        %v4032 = vunpack.c.l.b16 %v3998
        %v4033 = vunpack.c.l.b16 %v3999
        %v4034 = vunpack.c.l.b16 %v4000
        %v4035 = vunpack.c.l.b16 %v4001
        %v4036 = vunpack.c.l.b16 %v4002
        %v4037 = vunpack.c.l.b16 %v4003
        %v4038 = vunpack.c.l.b16 %v4004
        %v4039 = vunpack.c.l.b16 %v4005
        %v4040 = vunpack.c.l.b16 %v4006
        %v4041 = vunpack.c.l.b16 %v4007
        %v4042 = vunpack.c.l.b16 %v4008
        %v4043 = vunpack.c.l.b16 %v4009
        %v4044 = vpack.c.b16 %v4029, %v4028
        %v4045 = vpack.c.b16 %v4031, %v4030
        %v4046 = vpack.c.b16 %v4033, %v4032
        %v4047 = vpack.c.b16 %v4035, %v4034
        %v4048 = vpack.c.b16 %v4037, %v4036
        %v4049 = vpack.c.b16 %v4039, %v4038
        %v4050 = vpack.c.b16 %v4041, %v4040
        %v4051 = vpack.c.b16 %v4043, %v4042
        %4060 = vmatprep.subr.bf16.mxu0 0
        %4061 = vmatpush1.bf16.msra.mxu0 %v4044
        %4062 = vmatprep.subr.bf16.mxu0 0
        %4063 = vmatpush1.bf16.msra.mxu0 %v4045
        %4064 = vmatprep.subr.bf16.mxu0 0
        %4065 = vmatpush1.bf16.msra.mxu0 %v4046
        %4066 = vmatprep.subr.bf16.mxu0 0
        %4067 = vmatpush1.bf16.msra.mxu0 %v4047
        %4068 = vmatprep.subr.bf16.mxu0 0
        %4069 = vmatpush1.bf16.msra.mxu0 %v4048
        %4070 = vmatprep.subr.bf16.mxu0 0
        %4071 = vmatpush1.bf16.msra.mxu0 %v4049
        %4072 = vmatprep.subr.bf16.mxu0 0
        %4073 = vmatpush1.bf16.msra.mxu0 %v4050
        %4074 = vmatprep.subr.bf16.mxu0 0
        %4075 = vmatpush1.bf16.msra.mxu0 %v4051
        %4076 = vmatprep.subr.bf16.mxu0 0
        %4077 = vmatpush1.bf16.msra.mxu0 0
        %4078 = vmatprep.subr.bf16.mxu0 0
        %4079 = vmatpush1.bf16.msra.mxu0 0
        %4080 = vmatprep.subr.bf16.mxu0 0
        %4081 = vmatpush1.bf16.msra.mxu0 0
        %4082 = vmatprep.subr.bf16.mxu0 0
        %4083 = vmatpush1.bf16.msra.mxu0 0
        %4084 = vmatprep.subr.bf16.mxu0 0
        %4085 = vmatpush1.bf16.msra.mxu0 0
        %4086 = vmatprep.subr.bf16.mxu0 0
        %4087 = vmatpush1.bf16.msra.mxu0 0
        %4088 = vmatprep.subr.bf16.mxu0 0
        %4089 = vmatpush1.bf16.msra.mxu0 0
        %4090 = vmatprep.subr.bf16.mxu0 0
        %4091 = vmatpush1.bf16.msra.mxu0 0
        %4092 = vmatprep.mubr.bf16.mxu0 0
        %4093 = vmatmul.mubr.bf16.gmra.mrb[0].mxu0 %v4010
        %v4094 = vpop.f32.mrb[0].mxu0
        %v4095 = vadd.f32 0.0, %v4094
        %v4096 = vpop.f32.mrb[0].mxu0
        %v4097 = vpop.f32.mrb[0].mxu0
        %v4098 = vpop.f32.mrb[0].mxu0
        %4099 = vdwg.mxu0
        %v4100 = vadd.f32 %v3992, %v4095
        %s4101 = scalar_lea.vmem %s4, 896
        %v4102 = vld [vmem:[%s4101] sm:$0xf]
        %v4103 = vld [vmem:[%s4101 + $0x4] sm:$0xf]
        %v4104 = vld [vmem:[%s4101 + $0x8] sm:$0xf]
        %v4105 = vld [vmem:[%s4101 + $0xc] sm:$0xf]
        %v4106 = vld [vmem:[%s4101 + $0x10] sm:$0xf]
        %v4107 = vld [vmem:[%s4101 + $0x14] sm:$0xf]
        %v4108 = vld [vmem:[%s4101 + $0x18] sm:$0xf]
        %v4109 = vld [vmem:[%s4101 + $0x1c] sm:$0xf]
        %v4110 = vld [vmem:[%s4101 + $0x20] sm:$0xf]
        %v4111 = vld [vmem:[%s4101 + $0x24] sm:$0xf]
        %v4112 = vld [vmem:[%s4101 + $0x28] sm:$0xf]
        %v4113 = vld [vmem:[%s4101 + $0x2c] sm:$0xf]
        %v4114 = vld [vmem:[%s4101 + $0x30] sm:$0xf]
        %v4115 = vld [vmem:[%s4101 + $0x34] sm:$0xf]
        %v4116 = vld [vmem:[%s4101 + $0x38] sm:$0xf]
        %v4117 = vld [vmem:[%s4101 + $0x3c] sm:$0xf]
        %v4118 = vrot.slane %v2587, 7
        %v4136 = vunpack.c.l.b16 %v4102
        %v4137 = vunpack.c.l.b16 %v4103
        %v4138 = vunpack.c.l.b16 %v4104
        %v4139 = vunpack.c.l.b16 %v4105
        %v4140 = vunpack.c.l.b16 %v4106
        %v4141 = vunpack.c.l.b16 %v4107
        %v4142 = vunpack.c.l.b16 %v4108
        %v4143 = vunpack.c.l.b16 %v4109
        %v4144 = vunpack.c.l.b16 %v4110
        %v4145 = vunpack.c.l.b16 %v4111
        %v4146 = vunpack.c.l.b16 %v4112
        %v4147 = vunpack.c.l.b16 %v4113
        %v4148 = vunpack.c.l.b16 %v4114
        %v4149 = vunpack.c.l.b16 %v4115
        %v4150 = vunpack.c.l.b16 %v4116
        %v4151 = vunpack.c.l.b16 %v4117
        %v4152 = vpack.c.b16 %v4137, %v4136
        %v4153 = vpack.c.b16 %v4139, %v4138
        %v4154 = vpack.c.b16 %v4141, %v4140
        %v4155 = vpack.c.b16 %v4143, %v4142
        %v4156 = vpack.c.b16 %v4145, %v4144
        %v4157 = vpack.c.b16 %v4147, %v4146
        %v4158 = vpack.c.b16 %v4149, %v4148
        %v4159 = vpack.c.b16 %v4151, %v4150
        %4168 = vmatprep.subr.bf16.mxu0 0
        %4169 = vmatpush1.bf16.msra.mxu0 %v4152
        %4170 = vmatprep.subr.bf16.mxu0 0
        %4171 = vmatpush1.bf16.msra.mxu0 %v4153
        %4172 = vmatprep.subr.bf16.mxu0 0
        %4173 = vmatpush1.bf16.msra.mxu0 %v4154
        %4174 = vmatprep.subr.bf16.mxu0 0
        %4175 = vmatpush1.bf16.msra.mxu0 %v4155
        %4176 = vmatprep.subr.bf16.mxu0 0
        %4177 = vmatpush1.bf16.msra.mxu0 %v4156
        %4178 = vmatprep.subr.bf16.mxu0 0
        %4179 = vmatpush1.bf16.msra.mxu0 %v4157
        %4180 = vmatprep.subr.bf16.mxu0 0
        %4181 = vmatpush1.bf16.msra.mxu0 %v4158
        %4182 = vmatprep.subr.bf16.mxu0 0
        %4183 = vmatpush1.bf16.msra.mxu0 %v4159
        %4184 = vmatprep.subr.bf16.mxu0 0
        %4185 = vmatpush1.bf16.msra.mxu0 0
        %4186 = vmatprep.subr.bf16.mxu0 0
        %4187 = vmatpush1.bf16.msra.mxu0 0
        %4188 = vmatprep.subr.bf16.mxu0 0
        %4189 = vmatpush1.bf16.msra.mxu0 0
        %4190 = vmatprep.subr.bf16.mxu0 0
        %4191 = vmatpush1.bf16.msra.mxu0 0
        %4192 = vmatprep.subr.bf16.mxu0 0
        %4193 = vmatpush1.bf16.msra.mxu0 0
        %4194 = vmatprep.subr.bf16.mxu0 0
        %4195 = vmatpush1.bf16.msra.mxu0 0
        %4196 = vmatprep.subr.bf16.mxu0 0
        %4197 = vmatpush1.bf16.msra.mxu0 0
        %4198 = vmatprep.subr.bf16.mxu0 0
        %4199 = vmatpush1.bf16.msra.mxu0 0
        %4200 = vmatprep.mubr.bf16.mxu0 0
        %4201 = vmatmul.mubr.bf16.gmra.mrb[0].mxu0 %v4118
        %v4202 = vpop.f32.mrb[0].mxu0
        %v4203 = vadd.f32 0.0, %v4202
        %v4204 = vpop.f32.mrb[0].mxu0
        %v4205 = vpop.f32.mrb[0].mxu0
        %v4206 = vpop.f32.mrb[0].mxu0
        %4207 = vdwg.mxu0
        %v4208 = vadd.f32 %v4100, %v4203
        %s4209 = scalar_lea.vmem %s4, 960
        %v4210 = vld [vmem:[%s4209] sm:$0xf]
        %v4211 = vld [vmem:[%s4209 + $0x4] sm:$0xf]
        %v4212 = vld [vmem:[%s4209 + $0x8] sm:$0xf]
        %v4213 = vld [vmem:[%s4209 + $0xc] sm:$0xf]
        %v4214 = vld [vmem:[%s4209 + $0x10] sm:$0xf]
        %v4215 = vld [vmem:[%s4209 + $0x14] sm:$0xf]
        %v4216 = vld [vmem:[%s4209 + $0x18] sm:$0xf]
        %v4217 = vld [vmem:[%s4209 + $0x1c] sm:$0xf]
        %v4218 = vld [vmem:[%s4209 + $0x20] sm:$0xf]
        %v4219 = vld [vmem:[%s4209 + $0x24] sm:$0xf]
        %v4220 = vld [vmem:[%s4209 + $0x28] sm:$0xf]
        %v4221 = vld [vmem:[%s4209 + $0x2c] sm:$0xf]
        %v4222 = vld [vmem:[%s4209 + $0x30] sm:$0xf]
        %v4223 = vld [vmem:[%s4209 + $0x34] sm:$0xf]
        %v4224 = vld [vmem:[%s4209 + $0x38] sm:$0xf]
        %v4225 = vld [vmem:[%s4209 + $0x3c] sm:$0xf]
        %v4226 = vrot.slane %v2712, 7
        %v4244 = vunpack.c.l.b16 %v4210
        %v4245 = vunpack.c.l.b16 %v4211
        %v4246 = vunpack.c.l.b16 %v4212
        %v4247 = vunpack.c.l.b16 %v4213
        %v4248 = vunpack.c.l.b16 %v4214
        %v4249 = vunpack.c.l.b16 %v4215
        %v4250 = vunpack.c.l.b16 %v4216
        %v4251 = vunpack.c.l.b16 %v4217
        %v4252 = vunpack.c.l.b16 %v4218
        %v4253 = vunpack.c.l.b16 %v4219
        %v4254 = vunpack.c.l.b16 %v4220
        %v4255 = vunpack.c.l.b16 %v4221
        %v4256 = vunpack.c.l.b16 %v4222
        %v4257 = vunpack.c.l.b16 %v4223
        %v4258 = vunpack.c.l.b16 %v4224
        %v4259 = vunpack.c.l.b16 %v4225
        %v4260 = vpack.c.b16 %v4245, %v4244
        %v4261 = vpack.c.b16 %v4247, %v4246
        %v4262 = vpack.c.b16 %v4249, %v4248
        %v4263 = vpack.c.b16 %v4251, %v4250
        %v4264 = vpack.c.b16 %v4253, %v4252
        %v4265 = vpack.c.b16 %v4255, %v4254
        %v4266 = vpack.c.b16 %v4257, %v4256
        %v4267 = vpack.c.b16 %v4259, %v4258
        %4276 = vmatprep.subr.bf16.mxu0 0
        %4277 = vmatpush1.bf16.msra.mxu0 %v4260
        %4278 = vmatprep.subr.bf16.mxu0 0
        %4279 = vmatpush1.bf16.msra.mxu0 %v4261
        %4280 = vmatprep.subr.bf16.mxu0 0
        %4281 = vmatpush1.bf16.msra.mxu0 %v4262
        %4282 = vmatprep.subr.bf16.mxu0 0
        %4283 = vmatpush1.bf16.msra.mxu0 %v4263
        %4284 = vmatprep.subr.bf16.mxu0 0
        %4285 = vmatpush1.bf16.msra.mxu0 %v4264
        %4286 = vmatprep.subr.bf16.mxu0 0
        %4287 = vmatpush1.bf16.msra.mxu0 %v4265
        %4288 = vmatprep.subr.bf16.mxu0 0
        %4289 = vmatpush1.bf16.msra.mxu0 %v4266
        %4290 = vmatprep.subr.bf16.mxu0 0
        %4291 = vmatpush1.bf16.msra.mxu0 %v4267
        %4292 = vmatprep.subr.bf16.mxu0 0
        %4293 = vmatpush1.bf16.msra.mxu0 0
        %4294 = vmatprep.subr.bf16.mxu0 0
        %4295 = vmatpush1.bf16.msra.mxu0 0
        %4296 = vmatprep.subr.bf16.mxu0 0
        %4297 = vmatpush1.bf16.msra.mxu0 0
        %4298 = vmatprep.subr.bf16.mxu0 0
        %4299 = vmatpush1.bf16.msra.mxu0 0
        %4300 = vmatprep.subr.bf16.mxu0 0
        %4301 = vmatpush1.bf16.msra.mxu0 0
        %4302 = vmatprep.subr.bf16.mxu0 0
        %4303 = vmatpush1.bf16.msra.mxu0 0
        %4304 = vmatprep.subr.bf16.mxu0 0
        %4305 = vmatpush1.bf16.msra.mxu0 0
        %4306 = vmatprep.subr.bf16.mxu0 0
        %4307 = vmatpush1.bf16.msra.mxu0 0
        %4308 = vmatprep.mubr.bf16.mxu0 0
        %4309 = vmatmul.mubr.bf16.gmra.mrb[0].mxu0 %v4226
        %v4310 = vpop.f32.mrb[0].mxu0
        %v4311 = vadd.f32 0.0, %v4310
        %v4312 = vpop.f32.mrb[0].mxu0
        %v4313 = vpop.f32.mrb[0].mxu0
        %v4314 = vpop.f32.mrb[0].mxu0
        %4315 = vdwg.mxu0
        %v4316 = vadd.f32 %v4208, %v4311
        %v4317 = vpack.c.bf16 %v4316, %v4316
        %v4318 = vld [vmem:[%s6] sm:$0xf]
        %v4319 = vld [vmem:[%s6 + $0x4] sm:$0xf]
        %v4320 = vld [vmem:[%s6 + $0x8] sm:$0xf]
        %v4321 = vld [vmem:[%s6 + $0xc] sm:$0xf]
        %v4322 = vld [vmem:[%s6 + $0x10] sm:$0xf]
        %v4323 = vld [vmem:[%s6 + $0x14] sm:$0xf]
        %v4324 = vld [vmem:[%s6 + $0x18] sm:$0xf]
        %v4325 = vld [vmem:[%s6 + $0x1c] sm:$0xf]
        %v4326 = vld [vmem:[%s6 + $0x20] sm:$0xf]
        %v4327 = vld [vmem:[%s6 + $0x24] sm:$0xf]
        %v4328 = vld [vmem:[%s6 + $0x28] sm:$0xf]
        %v4329 = vld [vmem:[%s6 + $0x2c] sm:$0xf]
        %v4330 = vld [vmem:[%s6 + $0x30] sm:$0xf]
        %v4331 = vld [vmem:[%s6 + $0x34] sm:$0xf]
        %v4332 = vld [vmem:[%s6 + $0x38] sm:$0xf]
        %v4333 = vld [vmem:[%s6 + $0x3c] sm:$0xf]
        %v4334 = vld [vmem:[%s7] sm:$0x1]
        %v4351 = vunpack.c.l.b16 %v4318
        %v4352 = vunpack.c.l.b16 %v4319
        %v4353 = vunpack.c.l.b16 %v4320
        %v4354 = vunpack.c.l.b16 %v4321
        %v4355 = vunpack.c.l.b16 %v4322
        %v4356 = vunpack.c.l.b16 %v4323
        %v4357 = vunpack.c.l.b16 %v4324
        %v4358 = vunpack.c.l.b16 %v4325
        %v4359 = vunpack.c.l.b16 %v4326
        %v4360 = vunpack.c.l.b16 %v4327
        %v4361 = vunpack.c.l.b16 %v4328
        %v4362 = vunpack.c.l.b16 %v4329
        %v4363 = vunpack.c.l.b16 %v4330
        %v4364 = vunpack.c.l.b16 %v4331
        %v4365 = vunpack.c.l.b16 %v4332
        %v4366 = vunpack.c.l.b16 %v4333
        %v4367 = vpack.c.b16 %v4352, %v4351
        %v4368 = vpack.c.b16 %v4354, %v4353
        %v4369 = vpack.c.b16 %v4356, %v4355
        %v4370 = vpack.c.b16 %v4358, %v4357
        %v4371 = vpack.c.b16 %v4360, %v4359
        %v4372 = vpack.c.b16 %v4362, %v4361
        %v4373 = vpack.c.b16 %v4364, %v4363
        %v4374 = vpack.c.b16 %v4366, %v4365
        %4383 = vmatprep.subr.bf16.mxu0 0
        %4384 = vmatpush1.bf16.msra.mxu0 %v4367
        %4385 = vmatprep.subr.bf16.mxu0 0
        %4386 = vmatpush1.bf16.msra.mxu0 %v4368
        %4387 = vmatprep.subr.bf16.mxu0 0
        %4388 = vmatpush1.bf16.msra.mxu0 %v4369
        %4389 = vmatprep.subr.bf16.mxu0 0
        %4390 = vmatpush1.bf16.msra.mxu0 %v4370
        %4391 = vmatprep.subr.bf16.mxu0 0
        %4392 = vmatpush1.bf16.msra.mxu0 %v4371
        %4393 = vmatprep.subr.bf16.mxu0 0
        %4394 = vmatpush1.bf16.msra.mxu0 %v4372
        %4395 = vmatprep.subr.bf16.mxu0 0
        %4396 = vmatpush1.bf16.msra.mxu0 %v4373
        %4397 = vmatprep.subr.bf16.mxu0 0
        %4398 = vmatpush1.bf16.msra.mxu0 %v4374
        %4399 = vmatprep.subr.bf16.mxu0 0
        %4400 = vmatpush1.bf16.msra.mxu0 0
        %4401 = vmatprep.subr.bf16.mxu0 0
        %4402 = vmatpush1.bf16.msra.mxu0 0
        %4403 = vmatprep.subr.bf16.mxu0 0
        %4404 = vmatpush1.bf16.msra.mxu0 0
        %4405 = vmatprep.subr.bf16.mxu0 0
        %4406 = vmatpush1.bf16.msra.mxu0 0
        %4407 = vmatprep.subr.bf16.mxu0 0
        %4408 = vmatpush1.bf16.msra.mxu0 0
        %4409 = vmatprep.subr.bf16.mxu0 0
        %4410 = vmatpush1.bf16.msra.mxu0 0
        %4411 = vmatprep.subr.bf16.mxu0 0
        %4412 = vmatpush1.bf16.msra.mxu0 0
        %4413 = vmatprep.subr.bf16.mxu0 0
        %4414 = vmatpush1.bf16.msra.mxu0 0
        %4415 = vmatprep.mubr.bf16.mxu0 0
        %4416 = vmatmul.mubr.bf16.gmra.mrb[0].mxu0 %v4317
        %v4417 = vpop.f32.mrb[0].mxu0
        %v4418 = vadd.f32 %v4334, %v4417
        %v4419 = vpop.f32.mrb[0].mxu0
        %v4420 = vpop.f32.mrb[0].mxu0
        %v4421 = vpop.f32.mrb[0].mxu0
        %4422 = vdwg.mxu0
        %v4423 = vxor.u32 %v4418, 2147483648
        %v4424 = vmul.f32 %v4423, 1.442695
        %v4425 = vpow.pop %v4424
        %v4426 = vadd.f32 %v4425, 1.0
        %v4427 = vrcp.pop %v4426
        %v4428 = vmul.f32 1.0, %v4427
        %4429 = vst [vmem:[%s297] sm:$0x1] %v4428
        %s4430 = sand.u32 %s203, 1
        %s4431 = scalar_lea.sflag [#allocation3], %s4430
        %s4432 = sand.u32 %s203, 1
        %s4433 = scalar_lea.vmem [#allocation2], %s4432
        // Predicated region
        $region53: #{tpu_custom_call.1} parent=51 // pred_check
          %p4434 = pneg %p213
        $region54: #{tpu_custom_call.1} parent=51 // pred_check_branch
          %4436 = sbr.rel (%p4434) target = $region56
        $region55: #{tpu_custom_call.1} parent=51 // pred_region
          %s4438 = ssub.s32 16, 16
          %4439 = vsyncadd %s4431, %s4438
          %s4440 = smul.addr %s22, 16
          %s4441 = scalar_lea.hbm %s8, %s4440
          %s4443 = sshll.u32 %s4433, 4
          %s4444 = int_to_ptr.vmem [resolvable:$true] %s4443
          %4446 = dma.vmem_to_hbm [thread:$0]  %s4444, 16, %s4441, %s4431
        $region56: #{tpu_custom_call.1} parent=51 // pred_fallthru
          _
      $region52: #{tpu_custom_call.1} parent=5 // pred_fallthru
        _
      %p4447 = scmp.le.s32.totalorder 2, %s17
      // Predicated region
      $region57: #{tpu_custom_call.1} parent=5 // pred_check
        %p4448 = pneg %p4447
      $region58: #{tpu_custom_call.1} parent=5 // pred_check_branch
        %4450 = sbr.rel (%p4448) target = $region60
      $region59: #{tpu_custom_call.1} parent=5 // pred_region
        %s4451 = ssub.s32 %s17, 2
        // Predicated region
        $region61: #{tpu_custom_call.1} parent=59 // pred_check
          %p4452 = pneg %p219
        $region62: #{tpu_custom_call.1} parent=59 // pred_check_branch
          %4454 = sbr.rel (%p4452) target = $region64
        $region63: #{tpu_custom_call.1} parent=59 // pred_region
          %s4455 = sand.u32 %s204, 1
          %s4456 = scalar_lea.sflag [#allocation3], %s4455
          %s4457 = sand.u32 %s204, 1
          %s4458 = scalar_lea.vmem [#allocation2], %s4457
          %4459 = dma.done %s4456, 16
        $region64: #{tpu_custom_call.1} parent=59 // pred_fallthru
          _
      $region60: #{tpu_custom_call.1} parent=5 // pred_fallthru
        _
    $region6: #{tpu_custom_call.1} parent=1 // loop_footer
      %s21 = sadd.s32 1, %s17
    $region7: #{tpu_custom_call.1} parent=1 // loop_footer_branch
      %16 = sbr.rel target = $region3
    $region8: #{tpu_custom_call.1} parent=1 // loop_exit
      _
    %4460 = vsyncpa [#allocation3], 1
    %s4461 = scalar_lea.sflag [#allocation3], 1
    %4462 = vsyncpa %s4461, 1

</llo_original>
